<compile_context>
chip_gen: v7x
topology: tpu7x:2x2x1
jax: 0.10.0
libtpu: 0.0.40
codegen_flags: <defaults>
</compile_context>

<pallas_src>
import functools

import jax
import jax.numpy as jnp
from jax.experimental import pallas as pl
from jax.experimental.pallas import tpu as pltpu

EPS = 1e-6  # annotated-transformer LayerNorm eps


# ---------------------------------------------------------------------------
# Math helpers
# ---------------------------------------------------------------------------
def _layer_norm(x, g, b):
    # x: (N, D), g/b: (1, D)
    mu = jnp.mean(x, axis=-1, keepdims=True)
    var = jnp.mean((x - mu) ** 2, axis=-1, keepdims=True)
    return g * (x - mu) * jax.lax.rsqrt(var + EPS) + b


# Pure-JAX reference helpers (ground truth only; the kernel has its own math).
def _mha_ref(xn, mask, wq, bq, wk, bk, wv, bv, wo, bo, num_heads):
    S, D = xn.shape
    dk = D // num_heads
    q = jnp.dot(xn, wq, preferred_element_type=jnp.float32) + bq
    k = jnp.dot(xn, wk, preferred_element_type=jnp.float32) + bk
    v = jnp.dot(xn, wv, preferred_element_type=jnp.float32) + bv
    scale = 1.0 / (float(dk) ** 0.5)
    head_outs = []
    for h in range(num_heads):
        qh = q[:, h * dk:(h + 1) * dk]
        kh = k[:, h * dk:(h + 1) * dk]
        vh = v[:, h * dk:(h + 1) * dk]
        s = jax.lax.dot_general(qh, kh, (((1,), (1,)), ((), ())),
                                preferred_element_type=jnp.float32) * scale
        s = jnp.where(mask == 0.0, -1e9, s)
        s = s - jnp.max(s, axis=-1, keepdims=True)
        p = jnp.exp(s)
        p = p / jnp.sum(p, axis=-1, keepdims=True)
        head_outs.append(jnp.dot(p, vh, preferred_element_type=jnp.float32))
    attn = jnp.concatenate(head_outs, axis=-1)
    return jnp.dot(attn, wo, preferred_element_type=jnp.float32) + bo


def _ffn_ref(xn, w1, b1, w2, b2):
    h = jnp.maximum(jnp.dot(xn, w1, preferred_element_type=jnp.float32) + b1, 0.0)
    return jnp.dot(h, w2, preferred_element_type=jnp.float32) + b2


# ---------------------------------------------------------------------------
# Pallas kernel: one batch *tile* per grid step, everything fused
# ---------------------------------------------------------------------------
def encoder_layer_kernel(x_ref, mask_ref,
                         ln1g_ref, ln1b_ref,
                         wqh_ref, bqh_ref, wkh_ref, bkh_ref, wvh_ref, bvh_ref,
                         woh_ref, bo_ref,
                         ln2g_ref, ln2b_ref, w1_ref, b1_ref, w2_ref, b2_ref,
                         lnag_ref, lnab_ref, aw1_ref, ab1_ref, aw2_ref, ab2_ref,
                         out_ref, *, num_heads, seq_len, mm_dtype):
    f32 = jnp.float32
    x = x_ref[...].astype(f32)                 # (Bt*S, D) flat residual stream
    N, D = x.shape
    S = seq_len
    Bt = N // S
    H = num_heads
    dk = D // H
    scale = 1.0 / (float(dk) ** 0.5)

    # Additive key-mask bias, hoisted: 0 where attend, -1e9 where masked.
    mask = mask_ref[...].astype(f32)           # (Bt, 1, S)
    bias = (mask - 1.0) * 1e9                  # broadcasts over query rows

    def dot2(a, w):                            # MXU matmul: mm_dtype in, f32 acc
        return jnp.dot(a.astype(mm_dtype), w.astype(mm_dtype),
                       preferred_element_type=f32)

    # ---- sublayer 0: pre-LN multi-head self-attention + residual ----
    xn = _layer_norm(x, ln1g_ref[...], ln1b_ref[...])       # (N, D) f32
    attn = jnp.zeros((N, D), f32)
    for h in range(H):   # static loop; per-head weight stacks -> no lane slicing
        qh = (dot2(xn, wqh_ref[h]) + bqh_ref[h]).reshape(Bt, S, dk)
        kh = (dot2(xn, wkh_ref[h]) + bkh_ref[h]).reshape(Bt, S, dk)
        vh = (dot2(xn, wvh_ref[h]) + bvh_ref[h]).reshape(Bt, S, dk)
        s = jnp.einsum('bqd,bkd->bqk', qh.astype(mm_dtype), kh.astype(mm_dtype),
                       preferred_element_type=f32) * scale          # (Bt, S, S)
        s = s + bias
        s = s - jnp.max(s, axis=-1, keepdims=True)
        p = jnp.exp(s)
        p = p * pl.reciprocal(jnp.sum(p, axis=-1, keepdims=True), approx=True)
        oh = jnp.einsum('bqk,bkd->bqd', p.astype(mm_dtype), vh.astype(mm_dtype),
                        preferred_element_type=f32)                 # (Bt, S, dk)
        attn = attn + dot2(oh.reshape(N, dk), woh_ref[h])           # accumulate W_O
    x = x + attn + bo_ref[...]

    # ---- sublayer 1: pre-LN position-wise feed-forward + residual ----
    xn = _layer_norm(x, ln2g_ref[...], ln2b_ref[...])
    hmid = jnp.maximum(dot2(xn, w1_ref[...]) + b1_ref[...], 0.0)
    x = x + dot2(hmid, w2_ref[...]) + b2_ref[...]

    # ---- adapter sublayer (target_domain is not None) + residual ----
    xn = _layer_norm(x, lnag_ref[...], lnab_ref[...])
    hmid = jnp.maximum(dot2(xn, aw1_ref[...]) + ab1_ref[...], 0.0)
    x = x + dot2(hmid, aw2_ref[...]) + ab2_ref[...]

    out_ref[...] = x.astype(out_ref.dtype)


def transformer_encoder_layer(x, mask, p, num_heads, *, batch_tile=None,
                              matmul_dtype=jnp.bfloat16):
    B, S, D = x.shape
    H = num_heads
    dk = D // H
    Bt = B if batch_tile is None else batch_tile
    assert B % Bt == 0, "batch_tile must divide batch"

    # Per-head weight stacks built in the wrapper (free XLA reshapes); avoids
    # in-kernel lane slicing / concatenation over the head dimension.
    def heads_in(w):          # (D, D)  -> (H, D, dk)
        return w.reshape(D, H, dk).transpose(1, 0, 2)

    def heads_bias(b):        # (1, D)  -> (H, 1, dk)
        return b.reshape(1, H, dk).transpose(1, 0, 2)

    mm = matmul_dtype
    wqh = heads_in(p["wq"]).astype(mm)
    wkh = heads_in(p["wk"]).astype(mm)
    wvh = heads_in(p["wv"]).astype(mm)
    woh = p["wo"].reshape(H, dk, D).astype(mm)          # (H, dk, D)
    bqh, bkh, bvh = heads_bias(p["bq"]), heads_bias(p["bk"]), heads_bias(p["bv"])
    w1 = p["w1"].astype(mm); w2 = p["w2"].astype(mm)
    aw1 = p["aw1"].astype(mm); aw2 = p["aw2"].astype(mm)

    # Flatten (B, S, D) -> (B*S, D): each grid step moves one contiguous slab.
    x2 = x.reshape(B * S, D)

    args = [x2, mask,
            p["ln1g"], p["ln1b"],
            wqh, bqh, wkh, bkh, wvh, bvh, woh, p["bo"],
            p["ln2g"], p["ln2b"], w1, p["b1"], w2, p["b2"],
            p["lnag"], p["lnab"], aw1, p["ab1"], aw2, p["ab2"]]

    def const_spec(a):        # full-array block, constant index map
        nd = a.ndim
        return pl.BlockSpec(a.shape, lambda i, _nd=nd: (0,) * _nd)

    in_specs = [pl.BlockSpec((Bt * S, D), lambda i: (i, 0)),
                pl.BlockSpec((Bt, 1, S), lambda i: (i, 0, 0))]
    in_specs += [const_spec(a) for a in args[2:]]

    out2 = pl.pallas_call(
        functools.partial(encoder_layer_kernel, num_heads=H, seq_len=S,
                          mm_dtype=matmul_dtype),
        out_shape=jax.ShapeDtypeStruct((B * S, D), x.dtype),
        grid=(B // Bt,),
        in_specs=in_specs,
        out_specs=pl.BlockSpec((Bt * S, D), lambda i: (i, 0)),
        compiler_params=pltpu.CompilerParams(
            dimension_semantics=("parallel",),          # dual-TC sharding on v7x
            vmem_limit_bytes=32 * 1024 * 1024),
    )(*args)
    return out2.reshape(B, S, D)


# ---------------------------------------------------------------------------
# Pure-JAX reference for validation
# ---------------------------------------------------------------------------
def reference(x, mask, p, num_heads):
    outs = []
    for b in range(x.shape[0]):
        xb = x[b].astype(jnp.float32)
        mb = mask[b].astype(jnp.float32)
        y = xb + _mha_ref(_layer_norm(xb, p["ln1g"], p["ln1b"]), mb,
                          p["wq"], p["bq"], p["wk"], p["bk"],
                          p["wv"], p["bv"], p["wo"], p["bo"], num_heads)
        y = y + _ffn_ref(_layer_norm(y, p["ln2g"], p["ln2b"]),
                         p["w1"], p["b1"], p["w2"], p["b2"])
        y = y + _ffn_ref(_layer_norm(y, p["lnag"], p["lnab"]),
                         p["aw1"], p["ab1"], p["aw2"], p["ab2"])
        outs.append(y)
    return jnp.stack(outs).astype(x.dtype)


if __name__ == "__main__":
    # feature_size=32, 4 heads, ff_dim=64, adapter bottleneck=16, batch=2, seq=8.
    B, S, D, H, FF, ADP = 2, 8, 32, 4, 64, 16

    key = jax.random.PRNGKey(0)
    ks = jax.random.split(key, 16)

    def init(k, shape, scale=0.05):
        return (scale * jax.random.normal(k, shape)).astype(jnp.float32)

    x = jax.random.normal(ks[0], (B, S, D), dtype=jnp.float32)
    lengths = jnp.array([S, S - 2])
    src_mask = (jnp.arange(S)[None, None, :] < lengths[:, None, None]).astype(jnp.float32)

    # Weights stored in (in, out) layout (equivalent to PyTorch Linear weight.T).
    params = {
        "ln1g": jnp.ones((1, D), jnp.float32), "ln1b": jnp.zeros((1, D), jnp.float32),
        "wq": init(ks[1], (D, D)), "bq": init(ks[2], (1, D)),
        "wk": init(ks[3], (D, D)), "bk": init(ks[4], (1, D)),
        "wv": init(ks[5], (D, D)), "bv": init(ks[6], (1, D)),
        "wo": init(ks[7], (D, D)), "bo": init(ks[8], (1, D)),
        "ln2g": jnp.ones((1, D), jnp.float32), "ln2b": jnp.zeros((1, D), jnp.float32),
        "w1": init(ks[9], (D, FF)), "b1": init(ks[10], (1, FF)),
        "w2": init(ks[11], (FF, D)), "b2": init(ks[12], (1, D)),
        "lnag": jnp.ones((1, D), jnp.float32), "lnab": jnp.zeros((1, D), jnp.float32),
        "aw1": init(ks[13], (D, ADP)), "ab1": init(ks[14], (1, ADP)),
        "aw2": init(ks[15], (ADP, D)), "ab2": jnp.zeros((1, D), jnp.float32),
    }

    # Production config: whole batch in one grid step, bf16 MXU inputs / f32 acc.
    out = transformer_encoder_layer(x, src_mask, params, num_heads=H)
    out = jax.block_until_ready(out)

    # Validation config: f32 matmuls, batch_tile=1 (exercises the multi-step
    # "parallel" grid path) — checked against the pure-JAX reference tightly.
    out_f32 = transformer_encoder_layer(x, src_mask, params, num_heads=H,
                                        batch_tile=1, matmul_dtype=jnp.float32)
    out_f32 = jax.block_until_ready(out_f32)

    ref = reference(x, src_mask, params, num_heads=H)
    assert out.shape == (B, S, D)
    assert jnp.all(jnp.isfinite(out))
    assert jnp.allclose(out_f32, ref, rtol=2e-3, atol=2e-3)
    assert jnp.allclose(out, ref, rtol=2e-2, atol=2e-2)   # bf16 MXU inputs

    print("KERNEL_OK")
</pallas_src>

<mosaic_0001>
module attributes {stable_mosaic.version = 11 : i64} {
  func.func @encoder_layer_kernel(%arg0: i32, %arg1: memref<16x32xf32, #tpu.memory_space<vmem>>, %arg2: memref<2x1x8xf32, #tpu.memory_space<vmem>>, %arg3: memref<1x32xf32, #tpu.memory_space<vmem>>, %arg4: memref<1x32xf32, #tpu.memory_space<vmem>>, %arg5: memref<4x32x8xbf16, #tpu.memory_space<vmem>>, %arg6: memref<4x1x8xf32, #tpu.memory_space<vmem>>, %arg7: memref<4x32x8xbf16, #tpu.memory_space<vmem>>, %arg8: memref<4x1x8xf32, #tpu.memory_space<vmem>>, %arg9: memref<4x32x8xbf16, #tpu.memory_space<vmem>>, %arg10: memref<4x1x8xf32, #tpu.memory_space<vmem>>, %arg11: memref<4x8x32xbf16, #tpu.memory_space<vmem>>, %arg12: memref<1x32xf32, #tpu.memory_space<vmem>>, %arg13: memref<1x32xf32, #tpu.memory_space<vmem>>, %arg14: memref<1x32xf32, #tpu.memory_space<vmem>>, %arg15: memref<32x64xbf16, #tpu.memory_space<vmem>>, %arg16: memref<1x64xf32, #tpu.memory_space<vmem>>, %arg17: memref<64x32xbf16, #tpu.memory_space<vmem>>, %arg18: memref<1x32xf32, #tpu.memory_space<vmem>>, %arg19: memref<1x32xf32, #tpu.memory_space<vmem>>, %arg20: memref<1x32xf32, #tpu.memory_space<vmem>>, %arg21: memref<32x16xbf16, #tpu.memory_space<vmem>>, %arg22: memref<1x16xf32, #tpu.memory_space<vmem>>, %arg23: memref<16x32xbf16, #tpu.memory_space<vmem>>, %arg24: memref<1x32xf32, #tpu.memory_space<vmem>>, %arg25: memref<16x32xf32, #tpu.memory_space<vmem>>) attributes {dimension_semantics = [#tpu.dimension_semantics<parallel>], iteration_bounds = array<i64: 1>, scalar_prefetch = 0 : i64, scratch_operands = 0 : i64, tpu.core_type = #tpu.core_type<tc>, window_params = [{transform_indices = @transform_0, window_bounds = array<i64: 16, 32>}, {transform_indices = @transform_1, window_bounds = array<i64: 2, 1, 8>}, {pipeline_mode = #tpu.pipeline_mode<synchronous>, transform_indices = @transform_2, window_bounds = array<i64: 1, 32>}, {pipeline_mode = #tpu.pipeline_mode<synchronous>, transform_indices = @transform_3, window_bounds = array<i64: 1, 32>}, {pipeline_mode = #tpu.pipeline_mode<synchronous>, transform_indices = @transform_4, window_bounds = array<i64: 4, 32, 8>}, {pipeline_mode = #tpu.pipeline_mode<synchronous>, transform_indices = @transform_5, window_bounds = array<i64: 4, 1, 8>}, {pipeline_mode = #tpu.pipeline_mode<synchronous>, transform_indices = @transform_6, window_bounds = array<i64: 4, 32, 8>}, {pipeline_mode = #tpu.pipeline_mode<synchronous>, transform_indices = @transform_7, window_bounds = array<i64: 4, 1, 8>}, {pipeline_mode = #tpu.pipeline_mode<synchronous>, transform_indices = @transform_8, window_bounds = array<i64: 4, 32, 8>}, {pipeline_mode = #tpu.pipeline_mode<synchronous>, transform_indices = @transform_9, window_bounds = array<i64: 4, 1, 8>}, {pipeline_mode = #tpu.pipeline_mode<synchronous>, transform_indices = @transform_10, window_bounds = array<i64: 4, 8, 32>}, {pipeline_mode = #tpu.pipeline_mode<synchronous>, transform_indices = @transform_11, window_bounds = array<i64: 1, 32>}, {pipeline_mode = #tpu.pipeline_mode<synchronous>, transform_indices = @transform_12, window_bounds = array<i64: 1, 32>}, {pipeline_mode = #tpu.pipeline_mode<synchronous>, transform_indices = @transform_13, window_bounds = array<i64: 1, 32>}, {pipeline_mode = #tpu.pipeline_mode<synchronous>, transform_indices = @transform_14, window_bounds = array<i64: 32, 64>}, {pipeline_mode = #tpu.pipeline_mode<synchronous>, transform_indices = @transform_15, window_bounds = array<i64: 1, 64>}, {pipeline_mode = #tpu.pipeline_mode<synchronous>, transform_indices = @transform_16, window_bounds = array<i64: 64, 32>}, {pipeline_mode = #tpu.pipeline_mode<synchronous>, transform_indices = @transform_17, window_bounds = array<i64: 1, 32>}, {pipeline_mode = #tpu.pipeline_mode<synchronous>, transform_indices = @transform_18, window_bounds = array<i64: 1, 32>}, {pipeline_mode = #tpu.pipeline_mode<synchronous>, transform_indices = @transform_19, window_bounds = array<i64: 1, 32>}, {pipeline_mode = #tpu.pipeline_mode<synchronous>, transform_indices = @transform_20, window_bounds = array<i64: 32, 16>}, {pipeline_mode = #tpu.pipeline_mode<synchronous>, transform_indices = @transform_21, window_bounds = array<i64: 1, 16>}, {pipeline_mode = #tpu.pipeline_mode<synchronous>, transform_indices = @transform_22, window_bounds = array<i64: 16, 32>}, {pipeline_mode = #tpu.pipeline_mode<synchronous>, transform_indices = @transform_23, window_bounds = array<i64: 1, 32>}, {transform_indices = @transform_24, window_bounds = array<i64: 16, 32>}]} {
    %c0 = arith.constant 0 : index
    %c0_0 = arith.constant 0 : index
    %0 = vector.load %arg1[%c0, %c0_0] : memref<16x32xf32, #tpu.memory_space<vmem>>, vector<16x32xf32>
    %c0_1 = arith.constant 0 : index
    %c0_2 = arith.constant 0 : index
    %c0_3 = arith.constant 0 : index
    %1 = vector.load %arg2[%c0_1, %c0_2, %c0_3] : memref<2x1x8xf32, #tpu.memory_space<vmem>>, vector<2x1x8xf32>
    %cst = arith.constant 1.000000e+00 : f32
    %2 = vector.broadcast %cst : f32 to vector<2x1x8xf32>
    %3 = arith.subf %1, %2 : vector<2x1x8xf32>
    %cst_4 = arith.constant 1.000000e+09 : f32
    %4 = vector.broadcast %cst_4 : f32 to vector<2x1x8xf32>
    %5 = arith.mulf %3, %4 : vector<2x1x8xf32>
    %c0_5 = arith.constant 0 : index
    %c0_6 = arith.constant 0 : index
    %6 = vector.load %arg3[%c0_5, %c0_6] : memref<1x32xf32, #tpu.memory_space<vmem>>, vector<1x32xf32>
    %c0_7 = arith.constant 0 : index
    %c0_8 = arith.constant 0 : index
    %7 = vector.load %arg4[%c0_7, %c0_8] : memref<1x32xf32, #tpu.memory_space<vmem>>, vector<1x32xf32>
    %cst_9 = arith.constant dense<0.000000e+00> : vector<16xf32>
    %8 = vector.multi_reduction <add>, %0, %cst_9 [1] : vector<16x32xf32> to vector<16xf32>
    %9 = vector.shape_cast %8 : vector<16xf32> to vector<16x1xf32>
    %cst_10 = arith.constant 3.200000e+01 : f32
    %10 = vector.broadcast %cst_10 : f32 to vector<16x1xf32>
    %11 = arith.divf %9, %10 : vector<16x1xf32>
    %12 = vector.broadcast %11 : vector<16x1xf32> to vector<16x32xf32>
    %13 = arith.subf %0, %12 : vector<16x32xf32>
    %14 = arith.mulf %13, %13 : vector<16x32xf32>
    %cst_11 = arith.constant dense<0.000000e+00> : vector<16xf32>
    %15 = vector.multi_reduction <add>, %14, %cst_11 [1] : vector<16x32xf32> to vector<16xf32>
    %16 = vector.shape_cast %15 : vector<16xf32> to vector<16x1xf32>
    %cst_12 = arith.constant 3.200000e+01 : f32
    %17 = vector.broadcast %cst_12 : f32 to vector<16x1xf32>
    %18 = arith.divf %16, %17 : vector<16x1xf32>
    %19 = vector.broadcast %11 : vector<16x1xf32> to vector<16x32xf32>
    %20 = arith.subf %0, %19 : vector<16x32xf32>
    %21 = vector.broadcast %6 : vector<1x32xf32> to vector<16x32xf32>
    %22 = arith.mulf %21, %20 : vector<16x32xf32>
    %cst_13 = arith.constant 9.99999997E-7 : f32
    %23 = vector.broadcast %cst_13 : f32 to vector<16x1xf32>
    %24 = arith.addf %18, %23 : vector<16x1xf32>
    %25 = math.rsqrt %24 : vector<16x1xf32>
    %26 = vector.broadcast %25 : vector<16x1xf32> to vector<16x32xf32>
    %27 = arith.mulf %22, %26 : vector<16x32xf32>
    %28 = vector.broadcast %7 : vector<1x32xf32> to vector<16x32xf32>
    %29 = arith.addf %27, %28 : vector<16x32xf32>
    %cst_14 = arith.constant 0.000000e+00 : f32
    %30 = vector.broadcast %cst_14 : f32 to vector<16x32xf32>
    %c0_15 = arith.constant 0 : index
    %c0_16 = arith.constant 0 : index
    %c0_17 = arith.constant 0 : index
    %31 = vector.load %arg5[%c0_15, %c0_16, %c0_17] : memref<4x32x8xbf16, #tpu.memory_space<vmem>>, vector<1x32x8xbf16>
    %32 = vector.shape_cast %31 : vector<1x32x8xbf16> to vector<32x8xbf16>
    %33 = arith.truncf %29 : vector<16x32xf32> to vector<16x32xbf16>
    %cst_18 = arith.constant dense<0.000000e+00> : vector<16x8xf32>
    %34 = tpu.matmul %33, %32, %cst_18 {dimension_numbers = #tpu.dot_dimension_numbers<[1], [0], [0], [1], [0, 0, 1, 1], [], []>} : vector<16x32xbf16>, vector<32x8xbf16>, vector<16x8xf32> -> vector<16x8xf32>
    %c0_19 = arith.constant 0 : index
    %c0_20 = arith.constant 0 : index
    %c0_21 = arith.constant 0 : index
    %35 = vector.load %arg6[%c0_19, %c0_20, %c0_21] : memref<4x1x8xf32, #tpu.memory_space<vmem>>, vector<1x1x8xf32>
    %36 = vector.shape_cast %35 : vector<1x1x8xf32> to vector<1x8xf32>
    %37 = vector.broadcast %36 : vector<1x8xf32> to vector<16x8xf32>
    %38 = arith.addf %34, %37 : vector<16x8xf32>
    %39 = vector.shape_cast %38 : vector<16x8xf32> to vector<2x8x8xf32>
    %c0_22 = arith.constant 0 : index
    %c0_23 = arith.constant 0 : index
    %c0_24 = arith.constant 0 : index
    %40 = vector.load %arg7[%c0_22, %c0_23, %c0_24] : memref<4x32x8xbf16, #tpu.memory_space<vmem>>, vector<1x32x8xbf16>
    %41 = vector.shape_cast %40 : vector<1x32x8xbf16> to vector<32x8xbf16>
    %42 = arith.truncf %29 : vector<16x32xf32> to vector<16x32xbf16>
    %cst_25 = arith.constant dense<0.000000e+00> : vector<16x8xf32>
    %43 = tpu.matmul %42, %41, %cst_25 {dimension_numbers = #tpu.dot_dimension_numbers<[1], [0], [0], [1], [0, 0, 1, 1], [], []>} : vector<16x32xbf16>, vector<32x8xbf16>, vector<16x8xf32> -> vector<16x8xf32>
    %c0_26 = arith.constant 0 : index
    %c0_27 = arith.constant 0 : index
    %c0_28 = arith.constant 0 : index
    %44 = vector.load %arg8[%c0_26, %c0_27, %c0_28] : memref<4x1x8xf32, #tpu.memory_space<vmem>>, vector<1x1x8xf32>
    %45 = vector.shape_cast %44 : vector<1x1x8xf32> to vector<1x8xf32>
    %46 = vector.broadcast %45 : vector<1x8xf32> to vector<16x8xf32>
    %47 = arith.addf %43, %46 : vector<16x8xf32>
    %48 = vector.shape_cast %47 : vector<16x8xf32> to vector<2x8x8xf32>
    %c0_29 = arith.constant 0 : index
    %c0_30 = arith.constant 0 : index
    %c0_31 = arith.constant 0 : index
    %49 = vector.load %arg9[%c0_29, %c0_30, %c0_31] : memref<4x32x8xbf16, #tpu.memory_space<vmem>>, vector<1x32x8xbf16>
    %50 = vector.shape_cast %49 : vector<1x32x8xbf16> to vector<32x8xbf16>
    %51 = arith.truncf %29 : vector<16x32xf32> to vector<16x32xbf16>
    %cst_32 = arith.constant dense<0.000000e+00> : vector<16x8xf32>
    %52 = tpu.matmul %51, %50, %cst_32 {dimension_numbers = #tpu.dot_dimension_numbers<[1], [0], [0], [1], [0, 0, 1, 1], [], []>} : vector<16x32xbf16>, vector<32x8xbf16>, vector<16x8xf32> -> vector<16x8xf32>
    %c0_33 = arith.constant 0 : index
    %c0_34 = arith.constant 0 : index
    %c0_35 = arith.constant 0 : index
    %53 = vector.load %arg10[%c0_33, %c0_34, %c0_35] : memref<4x1x8xf32, #tpu.memory_space<vmem>>, vector<1x1x8xf32>
    %54 = vector.shape_cast %53 : vector<1x1x8xf32> to vector<1x8xf32>
    %55 = vector.broadcast %54 : vector<1x8xf32> to vector<16x8xf32>
    %56 = arith.addf %52, %55 : vector<16x8xf32>
    %57 = vector.shape_cast %56 : vector<16x8xf32> to vector<2x8x8xf32>
    %58 = arith.truncf %39 : vector<2x8x8xf32> to vector<2x8x8xbf16>
    %59 = arith.truncf %48 : vector<2x8x8xf32> to vector<2x8x8xbf16>
    "tpu.trace_start"() <{level = 10 : i32, message = "bqd,bkd->bqk"}> : () -> ()
    %cst_36 = arith.constant dense<0.000000e+00> : vector<2x8x8xf32>
    %60 = tpu.matmul %58, %59, %cst_36 {dimension_numbers = #tpu.dot_dimension_numbers<[2], [2], [1], [1], [0, 0, 0, 1, 1, 1], [0], [0]>} : vector<2x8x8xbf16>, vector<2x8x8xbf16>, vector<2x8x8xf32> -> vector<2x8x8xf32>
    "tpu.trace_stop"() : () -> ()
    %cst_37 = arith.constant 0.353553385 : f32
    %61 = vector.broadcast %cst_37 : f32 to vector<2x8x8xf32>
    %62 = arith.mulf %60, %61 : vector<2x8x8xf32>
    %63 = vector.broadcast %5 : vector<2x1x8xf32> to vector<2x8x8xf32>
    %64 = arith.addf %62, %63 : vector<2x8x8xf32>
    %cst_38 = arith.constant dense<0xFF800000> : vector<2x8xf32>
    %65 = vector.multi_reduction <maximumf>, %64, %cst_38 [2] : vector<2x8x8xf32> to vector<2x8xf32>
    %66 = vector.shape_cast %65 : vector<2x8xf32> to vector<2x8x1xf32>
    %67 = vector.broadcast %66 : vector<2x8x1xf32> to vector<2x8x8xf32>
    %68 = arith.subf %64, %67 : vector<2x8x8xf32>
    %69 = math.exp %68 : vector<2x8x8xf32>
    %cst_39 = arith.constant dense<0.000000e+00> : vector<2x8xf32>
    %70 = vector.multi_reduction <add>, %69, %cst_39 [2] : vector<2x8x8xf32> to vector<2x8xf32>
    %71 = vector.shape_cast %70 : vector<2x8xf32> to vector<2x8x1xf32>
    %72 = tpu.reciprocal %71 {approx = true} : vector<2x8x1xf32> -> vector<2x8x1xf32>
    %73 = vector.broadcast %72 : vector<2x8x1xf32> to vector<2x8x8xf32>
    %74 = arith.mulf %69, %73 : vector<2x8x8xf32>
    %75 = arith.truncf %74 : vector<2x8x8xf32> to vector<2x8x8xbf16>
    %76 = arith.truncf %57 : vector<2x8x8xf32> to vector<2x8x8xbf16>
    "tpu.trace_start"() <{level = 10 : i32, message = "bqk,bkd->bqd"}> : () -> ()
    %cst_40 = arith.constant dense<0.000000e+00> : vector<2x8x8xf32>
    %77 = tpu.matmul %75, %76, %cst_40 {dimension_numbers = #tpu.dot_dimension_numbers<[2], [1], [1], [2], [0, 0, 0, 1, 1, 2], [0], [0]>} : vector<2x8x8xbf16>, vector<2x8x8xbf16>, vector<2x8x8xf32> -> vector<2x8x8xf32>
    "tpu.trace_stop"() : () -> ()
    %78 = vector.shape_cast %77 : vector<2x8x8xf32> to vector<16x8xf32>
    %c0_41 = arith.constant 0 : index
    %c0_42 = arith.constant 0 : index
    %c0_43 = arith.constant 0 : index
    %79 = vector.load %arg11[%c0_41, %c0_42, %c0_43] : memref<4x8x32xbf16, #tpu.memory_space<vmem>>, vector<1x8x32xbf16>
    %80 = vector.shape_cast %79 : vector<1x8x32xbf16> to vector<8x32xbf16>
    %81 = arith.truncf %78 : vector<16x8xf32> to vector<16x8xbf16>
    %cst_44 = arith.constant dense<0.000000e+00> : vector<16x32xf32>
    %82 = tpu.matmul %81, %80, %cst_44 {dimension_numbers = #tpu.dot_dimension_numbers<[1], [0], [0], [1], [0, 0, 1, 1], [], []>} : vector<16x8xbf16>, vector<8x32xbf16>, vector<16x32xf32> -> vector<16x32xf32>
    %83 = arith.addf %30, %82 : vector<16x32xf32>
    %c1 = arith.constant 1 : index
    %c0_45 = arith.constant 0 : index
    %c0_46 = arith.constant 0 : index
    %84 = vector.load %arg5[%c1, %c0_45, %c0_46] : memref<4x32x8xbf16, #tpu.memory_space<vmem>>, vector<1x32x8xbf16>
    %85 = vector.shape_cast %84 : vector<1x32x8xbf16> to vector<32x8xbf16>
    %86 = arith.truncf %29 : vector<16x32xf32> to vector<16x32xbf16>
    %cst_47 = arith.constant dense<0.000000e+00> : vector<16x8xf32>
    %87 = tpu.matmul %86, %85, %cst_47 {dimension_numbers = #tpu.dot_dimension_numbers<[1], [0], [0], [1], [0, 0, 1, 1], [], []>} : vector<16x32xbf16>, vector<32x8xbf16>, vector<16x8xf32> -> vector<16x8xf32>
    %c1_48 = arith.constant 1 : index
    %c0_49 = arith.constant 0 : index
    %c0_50 = arith.constant 0 : index
    %88 = vector.load %arg6[%c1_48, %c0_49, %c0_50] : memref<4x1x8xf32, #tpu.memory_space<vmem>>, vector<1x1x8xf32>
    %89 = vector.shape_cast %88 : vector<1x1x8xf32> to vector<1x8xf32>
    %90 = vector.broadcast %89 : vector<1x8xf32> to vector<16x8xf32>
    %91 = arith.addf %87, %90 : vector<16x8xf32>
    %92 = vector.shape_cast %91 : vector<16x8xf32> to vector<2x8x8xf32>
    %c1_51 = arith.constant 1 : index
    %c0_52 = arith.constant 0 : index
    %c0_53 = arith.constant 0 : index
    %93 = vector.load %arg7[%c1_51, %c0_52, %c0_53] : memref<4x32x8xbf16, #tpu.memory_space<vmem>>, vector<1x32x8xbf16>
    %94 = vector.shape_cast %93 : vector<1x32x8xbf16> to vector<32x8xbf16>
    %95 = arith.truncf %29 : vector<16x32xf32> to vector<16x32xbf16>
    %cst_54 = arith.constant dense<0.000000e+00> : vector<16x8xf32>
    %96 = tpu.matmul %95, %94, %cst_54 {dimension_numbers = #tpu.dot_dimension_numbers<[1], [0], [0], [1], [0, 0, 1, 1], [], []>} : vector<16x32xbf16>, vector<32x8xbf16>, vector<16x8xf32> -> vector<16x8xf32>
    %c1_55 = arith.constant 1 : index
    %c0_56 = arith.constant 0 : index
    %c0_57 = arith.constant 0 : index
    %97 = vector.load %arg8[%c1_55, %c0_56, %c0_57] : memref<4x1x8xf32, #tpu.memory_space<vmem>>, vector<1x1x8xf32>
    %98 = vector.shape_cast %97 : vector<1x1x8xf32> to vector<1x8xf32>
    %99 = vector.broadcast %98 : vector<1x8xf32> to vector<16x8xf32>
    %100 = arith.addf %96, %99 : vector<16x8xf32>
    %101 = vector.shape_cast %100 : vector<16x8xf32> to vector<2x8x8xf32>
    %c1_58 = arith.constant 1 : index
    %c0_59 = arith.constant 0 : index
    %c0_60 = arith.constant 0 : index
    %102 = vector.load %arg9[%c1_58, %c0_59, %c0_60] : memref<4x32x8xbf16, #tpu.memory_space<vmem>>, vector<1x32x8xbf16>
    %103 = vector.shape_cast %102 : vector<1x32x8xbf16> to vector<32x8xbf16>
    %104 = arith.truncf %29 : vector<16x32xf32> to vector<16x32xbf16>
    %cst_61 = arith.constant dense<0.000000e+00> : vector<16x8xf32>
    %105 = tpu.matmul %104, %103, %cst_61 {dimension_numbers = #tpu.dot_dimension_numbers<[1], [0], [0], [1], [0, 0, 1, 1], [], []>} : vector<16x32xbf16>, vector<32x8xbf16>, vector<16x8xf32> -> vector<16x8xf32>
    %c1_62 = arith.constant 1 : index
    %c0_63 = arith.constant 0 : index
    %c0_64 = arith.constant 0 : index
    %106 = vector.load %arg10[%c1_62, %c0_63, %c0_64] : memref<4x1x8xf32, #tpu.memory_space<vmem>>, vector<1x1x8xf32>
    %107 = vector.shape_cast %106 : vector<1x1x8xf32> to vector<1x8xf32>
    %108 = vector.broadcast %107 : vector<1x8xf32> to vector<16x8xf32>
    %109 = arith.addf %105, %108 : vector<16x8xf32>
    %110 = vector.shape_cast %109 : vector<16x8xf32> to vector<2x8x8xf32>
    %111 = arith.truncf %92 : vector<2x8x8xf32> to vector<2x8x8xbf16>
    %112 = arith.truncf %101 : vector<2x8x8xf32> to vector<2x8x8xbf16>
    "tpu.trace_start"() <{level = 10 : i32, message = "bqd,bkd->bqk"}> : () -> ()
    %cst_65 = arith.constant dense<0.000000e+00> : vector<2x8x8xf32>
    %113 = tpu.matmul %111, %112, %cst_65 {dimension_numbers = #tpu.dot_dimension_numbers<[2], [2], [1], [1], [0, 0, 0, 1, 1, 1], [0], [0]>} : vector<2x8x8xbf16>, vector<2x8x8xbf16>, vector<2x8x8xf32> -> vector<2x8x8xf32>
    "tpu.trace_stop"() : () -> ()
    %cst_66 = arith.constant 0.353553385 : f32
    %114 = vector.broadcast %cst_66 : f32 to vector<2x8x8xf32>
    %115 = arith.mulf %113, %114 : vector<2x8x8xf32>
    %116 = vector.broadcast %5 : vector<2x1x8xf32> to vector<2x8x8xf32>
    %117 = arith.addf %115, %116 : vector<2x8x8xf32>
    %cst_67 = arith.constant dense<0xFF800000> : vector<2x8xf32>
    %118 = vector.multi_reduction <maximumf>, %117, %cst_67 [2] : vector<2x8x8xf32> to vector<2x8xf32>
    %119 = vector.shape_cast %118 : vector<2x8xf32> to vector<2x8x1xf32>
    %120 = vector.broadcast %119 : vector<2x8x1xf32> to vector<2x8x8xf32>
    %121 = arith.subf %117, %120 : vector<2x8x8xf32>
    %122 = math.exp %121 : vector<2x8x8xf32>
    %cst_68 = arith.constant dense<0.000000e+00> : vector<2x8xf32>
    %123 = vector.multi_reduction <add>, %122, %cst_68 [2] : vector<2x8x8xf32> to vector<2x8xf32>
    %124 = vector.shape_cast %123 : vector<2x8xf32> to vector<2x8x1xf32>
    %125 = tpu.reciprocal %124 {approx = true} : vector<2x8x1xf32> -> vector<2x8x1xf32>
    %126 = vector.broadcast %125 : vector<2x8x1xf32> to vector<2x8x8xf32>
    %127 = arith.mulf %122, %126 : vector<2x8x8xf32>
    %128 = arith.truncf %127 : vector<2x8x8xf32> to vector<2x8x8xbf16>
    %129 = arith.truncf %110 : vector<2x8x8xf32> to vector<2x8x8xbf16>
    "tpu.trace_start"() <{level = 10 : i32, message = "bqk,bkd->bqd"}> : () -> ()
    %cst_69 = arith.constant dense<0.000000e+00> : vector<2x8x8xf32>
    %130 = tpu.matmul %128, %129, %cst_69 {dimension_numbers = #tpu.dot_dimension_numbers<[2], [1], [1], [2], [0, 0, 0, 1, 1, 2], [0], [0]>} : vector<2x8x8xbf16>, vector<2x8x8xbf16>, vector<2x8x8xf32> -> vector<2x8x8xf32>
    "tpu.trace_stop"() : () -> ()
    %131 = vector.shape_cast %130 : vector<2x8x8xf32> to vector<16x8xf32>
    %c1_70 = arith.constant 1 : index
    %c0_71 = arith.constant 0 : index
    %c0_72 = arith.constant 0 : index
    %132 = vector.load %arg11[%c1_70, %c0_71, %c0_72] : memref<4x8x32xbf16, #tpu.memory_space<vmem>>, vector<1x8x32xbf16>
    %133 = vector.shape_cast %132 : vector<1x8x32xbf16> to vector<8x32xbf16>
    %134 = arith.truncf %131 : vector<16x8xf32> to vector<16x8xbf16>
    %cst_73 = arith.constant dense<0.000000e+00> : vector<16x32xf32>
    %135 = tpu.matmul %134, %133, %cst_73 {dimension_numbers = #tpu.dot_dimension_numbers<[1], [0], [0], [1], [0, 0, 1, 1], [], []>} : vector<16x8xbf16>, vector<8x32xbf16>, vector<16x32xf32> -> vector<16x32xf32>
    %136 = arith.addf %83, %135 : vector<16x32xf32>
    %c2 = arith.constant 2 : index
    %c0_74 = arith.constant 0 : index
    %c0_75 = arith.constant 0 : index
    %137 = vector.load %arg5[%c2, %c0_74, %c0_75] : memref<4x32x8xbf16, #tpu.memory_space<vmem>>, vector<1x32x8xbf16>
    %138 = vector.shape_cast %137 : vector<1x32x8xbf16> to vector<32x8xbf16>
    %139 = arith.truncf %29 : vector<16x32xf32> to vector<16x32xbf16>
    %cst_76 = arith.constant dense<0.000000e+00> : vector<16x8xf32>
    %140 = tpu.matmul %139, %138, %cst_76 {dimension_numbers = #tpu.dot_dimension_numbers<[1], [0], [0], [1], [0, 0, 1, 1], [], []>} : vector<16x32xbf16>, vector<32x8xbf16>, vector<16x8xf32> -> vector<16x8xf32>
    %c2_77 = arith.constant 2 : index
    %c0_78 = arith.constant 0 : index
    %c0_79 = arith.constant 0 : index
    %141 = vector.load %arg6[%c2_77, %c0_78, %c0_79] : memref<4x1x8xf32, #tpu.memory_space<vmem>>, vector<1x1x8xf32>
    %142 = vector.shape_cast %141 : vector<1x1x8xf32> to vector<1x8xf32>
    %143 = vector.broadcast %142 : vector<1x8xf32> to vector<16x8xf32>
    %144 = arith.addf %140, %143 : vector<16x8xf32>
    %145 = vector.shape_cast %144 : vector<16x8xf32> to vector<2x8x8xf32>
    %c2_80 = arith.constant 2 : index
    %c0_81 = arith.constant 0 : index
    %c0_82 = arith.constant 0 : index
    %146 = vector.load %arg7[%c2_80, %c0_81, %c0_82] : memref<4x32x8xbf16, #tpu.memory_space<vmem>>, vector<1x32x8xbf16>
    %147 = vector.shape_cast %146 : vector<1x32x8xbf16> to vector<32x8xbf16>
    %148 = arith.truncf %29 : vector<16x32xf32> to vector<16x32xbf16>
    %cst_83 = arith.constant dense<0.000000e+00> : vector<16x8xf32>
    %149 = tpu.matmul %148, %147, %cst_83 {dimension_numbers = #tpu.dot_dimension_numbers<[1], [0], [0], [1], [0, 0, 1, 1], [], []>} : vector<16x32xbf16>, vector<32x8xbf16>, vector<16x8xf32> -> vector<16x8xf32>
    %c2_84 = arith.constant 2 : index
    %c0_85 = arith.constant 0 : index
    %c0_86 = arith.constant 0 : index
    %150 = vector.load %arg8[%c2_84, %c0_85, %c0_86] : memref<4x1x8xf32, #tpu.memory_space<vmem>>, vector<1x1x8xf32>
    %151 = vector.shape_cast %150 : vector<1x1x8xf32> to vector<1x8xf32>
    %152 = vector.broadcast %151 : vector<1x8xf32> to vector<16x8xf32>
    %153 = arith.addf %149, %152 : vector<16x8xf32>
    %154 = vector.shape_cast %153 : vector<16x8xf32> to vector<2x8x8xf32>
    %c2_87 = arith.constant 2 : index
    %c0_88 = arith.constant 0 : index
    %c0_89 = arith.constant 0 : index
    %155 = vector.load %arg9[%c2_87, %c0_88, %c0_89] : memref<4x32x8xbf16, #tpu.memory_space<vmem>>, vector<1x32x8xbf16>
    %156 = vector.shape_cast %155 : vector<1x32x8xbf16> to vector<32x8xbf16>
    %157 = arith.truncf %29 : vector<16x32xf32> to vector<16x32xbf16>
    %cst_90 = arith.constant dense<0.000000e+00> : vector<16x8xf32>
    %158 = tpu.matmul %157, %156, %cst_90 {dimension_numbers = #tpu.dot_dimension_numbers<[1], [0], [0], [1], [0, 0, 1, 1], [], []>} : vector<16x32xbf16>, vector<32x8xbf16>, vector<16x8xf32> -> vector<16x8xf32>
    %c2_91 = arith.constant 2 : index
    %c0_92 = arith.constant 0 : index
    %c0_93 = arith.constant 0 : index
    %159 = vector.load %arg10[%c2_91, %c0_92, %c0_93] : memref<4x1x8xf32, #tpu.memory_space<vmem>>, vector<1x1x8xf32>
    %160 = vector.shape_cast %159 : vector<1x1x8xf32> to vector<1x8xf32>
    %161 = vector.broadcast %160 : vector<1x8xf32> to vector<16x8xf32>
    %162 = arith.addf %158, %161 : vector<16x8xf32>
    %163 = vector.shape_cast %162 : vector<16x8xf32> to vector<2x8x8xf32>
    %164 = arith.truncf %145 : vector<2x8x8xf32> to vector<2x8x8xbf16>
    %165 = arith.truncf %154 : vector<2x8x8xf32> to vector<2x8x8xbf16>
    "tpu.trace_start"() <{level = 10 : i32, message = "bqd,bkd->bqk"}> : () -> ()
    %cst_94 = arith.constant dense<0.000000e+00> : vector<2x8x8xf32>
    %166 = tpu.matmul %164, %165, %cst_94 {dimension_numbers = #tpu.dot_dimension_numbers<[2], [2], [1], [1], [0, 0, 0, 1, 1, 1], [0], [0]>} : vector<2x8x8xbf16>, vector<2x8x8xbf16>, vector<2x8x8xf32> -> vector<2x8x8xf32>
    "tpu.trace_stop"() : () -> ()
    %cst_95 = arith.constant 0.353553385 : f32
    %167 = vector.broadcast %cst_95 : f32 to vector<2x8x8xf32>
    %168 = arith.mulf %166, %167 : vector<2x8x8xf32>
    %169 = vector.broadcast %5 : vector<2x1x8xf32> to vector<2x8x8xf32>
    %170 = arith.addf %168, %169 : vector<2x8x8xf32>
    %cst_96 = arith.constant dense<0xFF800000> : vector<2x8xf32>
    %171 = vector.multi_reduction <maximumf>, %170, %cst_96 [2] : vector<2x8x8xf32> to vector<2x8xf32>
    %172 = vector.shape_cast %171 : vector<2x8xf32> to vector<2x8x1xf32>
    %173 = vector.broadcast %172 : vector<2x8x1xf32> to vector<2x8x8xf32>
    %174 = arith.subf %170, %173 : vector<2x8x8xf32>
    %175 = math.exp %174 : vector<2x8x8xf32>
    %cst_97 = arith.constant dense<0.000000e+00> : vector<2x8xf32>
    %176 = vector.multi_reduction <add>, %175, %cst_97 [2] : vector<2x8x8xf32> to vector<2x8xf32>
    %177 = vector.shape_cast %176 : vector<2x8xf32> to vector<2x8x1xf32>
    %178 = tpu.reciprocal %177 {approx = true} : vector<2x8x1xf32> -> vector<2x8x1xf32>
    %179 = vector.broadcast %178 : vector<2x8x1xf32> to vector<2x8x8xf32>
    %180 = arith.mulf %175, %179 : vector<2x8x8xf32>
    %181 = arith.truncf %180 : vector<2x8x8xf32> to vector<2x8x8xbf16>
    %182 = arith.truncf %163 : vector<2x8x8xf32> to vector<2x8x8xbf16>
    "tpu.trace_start"() <{level = 10 : i32, message = "bqk,bkd->bqd"}> : () -> ()
    %cst_98 = arith.constant dense<0.000000e+00> : vector<2x8x8xf32>
    %183 = tpu.matmul %181, %182, %cst_98 {dimension_numbers = #tpu.dot_dimension_numbers<[2], [1], [1], [2], [0, 0, 0, 1, 1, 2], [0], [0]>} : vector<2x8x8xbf16>, vector<2x8x8xbf16>, vector<2x8x8xf32> -> vector<2x8x8xf32>
    "tpu.trace_stop"() : () -> ()
    %184 = vector.shape_cast %183 : vector<2x8x8xf32> to vector<16x8xf32>
    %c2_99 = arith.constant 2 : index
    %c0_100 = arith.constant 0 : index
    %c0_101 = arith.constant 0 : index
    %185 = vector.load %arg11[%c2_99, %c0_100, %c0_101] : memref<4x8x32xbf16, #tpu.memory_space<vmem>>, vector<1x8x32xbf16>
    %186 = vector.shape_cast %185 : vector<1x8x32xbf16> to vector<8x32xbf16>
    %187 = arith.truncf %184 : vector<16x8xf32> to vector<16x8xbf16>
    %cst_102 = arith.constant dense<0.000000e+00> : vector<16x32xf32>
    %188 = tpu.matmul %187, %186, %cst_102 {dimension_numbers = #tpu.dot_dimension_numbers<[1], [0], [0], [1], [0, 0, 1, 1], [], []>} : vector<16x8xbf16>, vector<8x32xbf16>, vector<16x32xf32> -> vector<16x32xf32>
    %189 = arith.addf %136, %188 : vector<16x32xf32>
    %c3 = arith.constant 3 : index
    %c0_103 = arith.constant 0 : index
    %c0_104 = arith.constant 0 : index
    %190 = vector.load %arg5[%c3, %c0_103, %c0_104] : memref<4x32x8xbf16, #tpu.memory_space<vmem>>, vector<1x32x8xbf16>
    %191 = vector.shape_cast %190 : vector<1x32x8xbf16> to vector<32x8xbf16>
    %192 = arith.truncf %29 : vector<16x32xf32> to vector<16x32xbf16>
    %cst_105 = arith.constant dense<0.000000e+00> : vector<16x8xf32>
    %193 = tpu.matmul %192, %191, %cst_105 {dimension_numbers = #tpu.dot_dimension_numbers<[1], [0], [0], [1], [0, 0, 1, 1], [], []>} : vector<16x32xbf16>, vector<32x8xbf16>, vector<16x8xf32> -> vector<16x8xf32>
    %c3_106 = arith.constant 3 : index
    %c0_107 = arith.constant 0 : index
    %c0_108 = arith.constant 0 : index
    %194 = vector.load %arg6[%c3_106, %c0_107, %c0_108] : memref<4x1x8xf32, #tpu.memory_space<vmem>>, vector<1x1x8xf32>
    %195 = vector.shape_cast %194 : vector<1x1x8xf32> to vector<1x8xf32>
    %196 = vector.broadcast %195 : vector<1x8xf32> to vector<16x8xf32>
    %197 = arith.addf %193, %196 : vector<16x8xf32>
    %198 = vector.shape_cast %197 : vector<16x8xf32> to vector<2x8x8xf32>
    %c3_109 = arith.constant 3 : index
    %c0_110 = arith.constant 0 : index
    %c0_111 = arith.constant 0 : index
    %199 = vector.load %arg7[%c3_109, %c0_110, %c0_111] : memref<4x32x8xbf16, #tpu.memory_space<vmem>>, vector<1x32x8xbf16>
    %200 = vector.shape_cast %199 : vector<1x32x8xbf16> to vector<32x8xbf16>
    %201 = arith.truncf %29 : vector<16x32xf32> to vector<16x32xbf16>
    %cst_112 = arith.constant dense<0.000000e+00> : vector<16x8xf32>
    %202 = tpu.matmul %201, %200, %cst_112 {dimension_numbers = #tpu.dot_dimension_numbers<[1], [0], [0], [1], [0, 0, 1, 1], [], []>} : vector<16x32xbf16>, vector<32x8xbf16>, vector<16x8xf32> -> vector<16x8xf32>
    %c3_113 = arith.constant 3 : index
    %c0_114 = arith.constant 0 : index
    %c0_115 = arith.constant 0 : index
    %203 = vector.load %arg8[%c3_113, %c0_114, %c0_115] : memref<4x1x8xf32, #tpu.memory_space<vmem>>, vector<1x1x8xf32>
    %204 = vector.shape_cast %203 : vector<1x1x8xf32> to vector<1x8xf32>
    %205 = vector.broadcast %204 : vector<1x8xf32> to vector<16x8xf32>
    %206 = arith.addf %202, %205 : vector<16x8xf32>
    %207 = vector.shape_cast %206 : vector<16x8xf32> to vector<2x8x8xf32>
    %c3_116 = arith.constant 3 : index
    %c0_117 = arith.constant 0 : index
    %c0_118 = arith.constant 0 : index
    %208 = vector.load %arg9[%c3_116, %c0_117, %c0_118] : memref<4x32x8xbf16, #tpu.memory_space<vmem>>, vector<1x32x8xbf16>
    %209 = vector.shape_cast %208 : vector<1x32x8xbf16> to vector<32x8xbf16>
    %210 = arith.truncf %29 : vector<16x32xf32> to vector<16x32xbf16>
    %cst_119 = arith.constant dense<0.000000e+00> : vector<16x8xf32>
    %211 = tpu.matmul %210, %209, %cst_119 {dimension_numbers = #tpu.dot_dimension_numbers<[1], [0], [0], [1], [0, 0, 1, 1], [], []>} : vector<16x32xbf16>, vector<32x8xbf16>, vector<16x8xf32> -> vector<16x8xf32>
    %c3_120 = arith.constant 3 : index
    %c0_121 = arith.constant 0 : index
    %c0_122 = arith.constant 0 : index
    %212 = vector.load %arg10[%c3_120, %c0_121, %c0_122] : memref<4x1x8xf32, #tpu.memory_space<vmem>>, vector<1x1x8xf32>
    %213 = vector.shape_cast %212 : vector<1x1x8xf32> to vector<1x8xf32>
    %214 = vector.broadcast %213 : vector<1x8xf32> to vector<16x8xf32>
    %215 = arith.addf %211, %214 : vector<16x8xf32>
    %216 = vector.shape_cast %215 : vector<16x8xf32> to vector<2x8x8xf32>
    %217 = arith.truncf %198 : vector<2x8x8xf32> to vector<2x8x8xbf16>
    %218 = arith.truncf %207 : vector<2x8x8xf32> to vector<2x8x8xbf16>
    "tpu.trace_start"() <{level = 10 : i32, message = "bqd,bkd->bqk"}> : () -> ()
    %cst_123 = arith.constant dense<0.000000e+00> : vector<2x8x8xf32>
    %219 = tpu.matmul %217, %218, %cst_123 {dimension_numbers = #tpu.dot_dimension_numbers<[2], [2], [1], [1], [0, 0, 0, 1, 1, 1], [0], [0]>} : vector<2x8x8xbf16>, vector<2x8x8xbf16>, vector<2x8x8xf32> -> vector<2x8x8xf32>
    "tpu.trace_stop"() : () -> ()
    %cst_124 = arith.constant 0.353553385 : f32
    %220 = vector.broadcast %cst_124 : f32 to vector<2x8x8xf32>
    %221 = arith.mulf %219, %220 : vector<2x8x8xf32>
    %222 = vector.broadcast %5 : vector<2x1x8xf32> to vector<2x8x8xf32>
    %223 = arith.addf %221, %222 : vector<2x8x8xf32>
    %cst_125 = arith.constant dense<0xFF800000> : vector<2x8xf32>
    %224 = vector.multi_reduction <maximumf>, %223, %cst_125 [2] : vector<2x8x8xf32> to vector<2x8xf32>
    %225 = vector.shape_cast %224 : vector<2x8xf32> to vector<2x8x1xf32>
    %226 = vector.broadcast %225 : vector<2x8x1xf32> to vector<2x8x8xf32>
    %227 = arith.subf %223, %226 : vector<2x8x8xf32>
    %228 = math.exp %227 : vector<2x8x8xf32>
    %cst_126 = arith.constant dense<0.000000e+00> : vector<2x8xf32>
    %229 = vector.multi_reduction <add>, %228, %cst_126 [2] : vector<2x8x8xf32> to vector<2x8xf32>
    %230 = vector.shape_cast %229 : vector<2x8xf32> to vector<2x8x1xf32>
    %231 = tpu.reciprocal %230 {approx = true} : vector<2x8x1xf32> -> vector<2x8x1xf32>
    %232 = vector.broadcast %231 : vector<2x8x1xf32> to vector<2x8x8xf32>
    %233 = arith.mulf %228, %232 : vector<2x8x8xf32>
    %234 = arith.truncf %233 : vector<2x8x8xf32> to vector<2x8x8xbf16>
    %235 = arith.truncf %216 : vector<2x8x8xf32> to vector<2x8x8xbf16>
    "tpu.trace_start"() <{level = 10 : i32, message = "bqk,bkd->bqd"}> : () -> ()
    %cst_127 = arith.constant dense<0.000000e+00> : vector<2x8x8xf32>
    %236 = tpu.matmul %234, %235, %cst_127 {dimension_numbers = #tpu.dot_dimension_numbers<[2], [1], [1], [2], [0, 0, 0, 1, 1, 2], [0], [0]>} : vector<2x8x8xbf16>, vector<2x8x8xbf16>, vector<2x8x8xf32> -> vector<2x8x8xf32>
    "tpu.trace_stop"() : () -> ()
    %237 = vector.shape_cast %236 : vector<2x8x8xf32> to vector<16x8xf32>
    %c3_128 = arith.constant 3 : index
    %c0_129 = arith.constant 0 : index
    %c0_130 = arith.constant 0 : index
    %238 = vector.load %arg11[%c3_128, %c0_129, %c0_130] : memref<4x8x32xbf16, #tpu.memory_space<vmem>>, vector<1x8x32xbf16>
    %239 = vector.shape_cast %238 : vector<1x8x32xbf16> to vector<8x32xbf16>
    %240 = arith.truncf %237 : vector<16x8xf32> to vector<16x8xbf16>
    %cst_131 = arith.constant dense<0.000000e+00> : vector<16x32xf32>
    %241 = tpu.matmul %240, %239, %cst_131 {dimension_numbers = #tpu.dot_dimension_numbers<[1], [0], [0], [1], [0, 0, 1, 1], [], []>} : vector<16x8xbf16>, vector<8x32xbf16>, vector<16x32xf32> -> vector<16x32xf32>
    %242 = arith.addf %189, %241 : vector<16x32xf32>
    %243 = arith.addf %0, %242 : vector<16x32xf32>
    %c0_132 = arith.constant 0 : index
    %c0_133 = arith.constant 0 : index
    %244 = vector.load %arg12[%c0_132, %c0_133] : memref<1x32xf32, #tpu.memory_space<vmem>>, vector<1x32xf32>
    %245 = vector.broadcast %244 : vector<1x32xf32> to vector<16x32xf32>
    %246 = arith.addf %243, %245 : vector<16x32xf32>
    %c0_134 = arith.constant 0 : index
    %c0_135 = arith.constant 0 : index
    %247 = vector.load %arg13[%c0_134, %c0_135] : memref<1x32xf32, #tpu.memory_space<vmem>>, vector<1x32xf32>
    %c0_136 = arith.constant 0 : index
    %c0_137 = arith.constant 0 : index
    %248 = vector.load %arg14[%c0_136, %c0_137] : memref<1x32xf32, #tpu.memory_space<vmem>>, vector<1x32xf32>
    %cst_138 = arith.constant dense<0.000000e+00> : vector<16xf32>
    %249 = vector.multi_reduction <add>, %246, %cst_138 [1] : vector<16x32xf32> to vector<16xf32>
    %250 = vector.shape_cast %249 : vector<16xf32> to vector<16x1xf32>
    %cst_139 = arith.constant 3.200000e+01 : f32
    %251 = vector.broadcast %cst_139 : f32 to vector<16x1xf32>
    %252 = arith.divf %250, %251 : vector<16x1xf32>
    %253 = vector.broadcast %252 : vector<16x1xf32> to vector<16x32xf32>
    %254 = arith.subf %246, %253 : vector<16x32xf32>
    %255 = arith.mulf %254, %254 : vector<16x32xf32>
    %cst_140 = arith.constant dense<0.000000e+00> : vector<16xf32>
    %256 = vector.multi_reduction <add>, %255, %cst_140 [1] : vector<16x32xf32> to vector<16xf32>
    %257 = vector.shape_cast %256 : vector<16xf32> to vector<16x1xf32>
    %cst_141 = arith.constant 3.200000e+01 : f32
    %258 = vector.broadcast %cst_141 : f32 to vector<16x1xf32>
    %259 = arith.divf %257, %258 : vector<16x1xf32>
    %260 = vector.broadcast %252 : vector<16x1xf32> to vector<16x32xf32>
    %261 = arith.subf %246, %260 : vector<16x32xf32>
    %262 = vector.broadcast %247 : vector<1x32xf32> to vector<16x32xf32>
    %263 = arith.mulf %262, %261 : vector<16x32xf32>
    %cst_142 = arith.constant 9.99999997E-7 : f32
    %264 = vector.broadcast %cst_142 : f32 to vector<16x1xf32>
    %265 = arith.addf %259, %264 : vector<16x1xf32>
    %266 = math.rsqrt %265 : vector<16x1xf32>
    %267 = vector.broadcast %266 : vector<16x1xf32> to vector<16x32xf32>
    %268 = arith.mulf %263, %267 : vector<16x32xf32>
    %269 = vector.broadcast %248 : vector<1x32xf32> to vector<16x32xf32>
    %270 = arith.addf %268, %269 : vector<16x32xf32>
    %c0_143 = arith.constant 0 : index
    %c0_144 = arith.constant 0 : index
    %271 = vector.load %arg15[%c0_143, %c0_144] : memref<32x64xbf16, #tpu.memory_space<vmem>>, vector<32x64xbf16>
    %272 = arith.truncf %270 : vector<16x32xf32> to vector<16x32xbf16>
    %cst_145 = arith.constant dense<0.000000e+00> : vector<16x64xf32>
    %273 = tpu.matmul %272, %271, %cst_145 {dimension_numbers = #tpu.dot_dimension_numbers<[1], [0], [0], [1], [0, 0, 1, 1], [], []>} : vector<16x32xbf16>, vector<32x64xbf16>, vector<16x64xf32> -> vector<16x64xf32>
    %c0_146 = arith.constant 0 : index
    %c0_147 = arith.constant 0 : index
    %274 = vector.load %arg16[%c0_146, %c0_147] : memref<1x64xf32, #tpu.memory_space<vmem>>, vector<1x64xf32>
    %275 = vector.broadcast %274 : vector<1x64xf32> to vector<16x64xf32>
    %276 = arith.addf %273, %275 : vector<16x64xf32>
    %cst_148 = arith.constant 0.000000e+00 : f32
    %277 = vector.broadcast %cst_148 : f32 to vector<16x64xf32>
    %278 = arith.maximumf %276, %277 : vector<16x64xf32>
    %c0_149 = arith.constant 0 : index
    %c0_150 = arith.constant 0 : index
    %279 = vector.load %arg17[%c0_149, %c0_150] : memref<64x32xbf16, #tpu.memory_space<vmem>>, vector<64x32xbf16>
    %280 = arith.truncf %278 : vector<16x64xf32> to vector<16x64xbf16>
    %cst_151 = arith.constant dense<0.000000e+00> : vector<16x32xf32>
    %281 = tpu.matmul %280, %279, %cst_151 {dimension_numbers = #tpu.dot_dimension_numbers<[1], [0], [0], [1], [0, 0, 1, 1], [], []>} : vector<16x64xbf16>, vector<64x32xbf16>, vector<16x32xf32> -> vector<16x32xf32>
    %282 = arith.addf %246, %281 : vector<16x32xf32>
    %c0_152 = arith.constant 0 : index
    %c0_153 = arith.constant 0 : index
    %283 = vector.load %arg18[%c0_152, %c0_153] : memref<1x32xf32, #tpu.memory_space<vmem>>, vector<1x32xf32>
    %284 = vector.broadcast %283 : vector<1x32xf32> to vector<16x32xf32>
    %285 = arith.addf %282, %284 : vector<16x32xf32>
    %c0_154 = arith.constant 0 : index
    %c0_155 = arith.constant 0 : index
    %286 = vector.load %arg19[%c0_154, %c0_155] : memref<1x32xf32, #tpu.memory_space<vmem>>, vector<1x32xf32>
    %c0_156 = arith.constant 0 : index
    %c0_157 = arith.constant 0 : index
    %287 = vector.load %arg20[%c0_156, %c0_157] : memref<1x32xf32, #tpu.memory_space<vmem>>, vector<1x32xf32>
    %cst_158 = arith.constant dense<0.000000e+00> : vector<16xf32>
    %288 = vector.multi_reduction <add>, %285, %cst_158 [1] : vector<16x32xf32> to vector<16xf32>
    %289 = vector.shape_cast %288 : vector<16xf32> to vector<16x1xf32>
    %cst_159 = arith.constant 3.200000e+01 : f32
    %290 = vector.broadcast %cst_159 : f32 to vector<16x1xf32>
    %291 = arith.divf %289, %290 : vector<16x1xf32>
    %292 = vector.broadcast %291 : vector<16x1xf32> to vector<16x32xf32>
    %293 = arith.subf %285, %292 : vector<16x32xf32>
    %294 = arith.mulf %293, %293 : vector<16x32xf32>
    %cst_160 = arith.constant dense<0.000000e+00> : vector<16xf32>
    %295 = vector.multi_reduction <add>, %294, %cst_160 [1] : vector<16x32xf32> to vector<16xf32>
    %296 = vector.shape_cast %295 : vector<16xf32> to vector<16x1xf32>
    %cst_161 = arith.constant 3.200000e+01 : f32
    %297 = vector.broadcast %cst_161 : f32 to vector<16x1xf32>
    %298 = arith.divf %296, %297 : vector<16x1xf32>
    %299 = vector.broadcast %291 : vector<16x1xf32> to vector<16x32xf32>
    %300 = arith.subf %285, %299 : vector<16x32xf32>
    %301 = vector.broadcast %286 : vector<1x32xf32> to vector<16x32xf32>
    %302 = arith.mulf %301, %300 : vector<16x32xf32>
    %cst_162 = arith.constant 9.99999997E-7 : f32
    %303 = vector.broadcast %cst_162 : f32 to vector<16x1xf32>
    %304 = arith.addf %298, %303 : vector<16x1xf32>
    %305 = math.rsqrt %304 : vector<16x1xf32>
    %306 = vector.broadcast %305 : vector<16x1xf32> to vector<16x32xf32>
    %307 = arith.mulf %302, %306 : vector<16x32xf32>
    %308 = vector.broadcast %287 : vector<1x32xf32> to vector<16x32xf32>
    %309 = arith.addf %307, %308 : vector<16x32xf32>
    %c0_163 = arith.constant 0 : index
    %c0_164 = arith.constant 0 : index
    %310 = vector.load %arg21[%c0_163, %c0_164] : memref<32x16xbf16, #tpu.memory_space<vmem>>, vector<32x16xbf16>
    %311 = arith.truncf %309 : vector<16x32xf32> to vector<16x32xbf16>
    %cst_165 = arith.constant dense<0.000000e+00> : vector<16x16xf32>
    %312 = tpu.matmul %311, %310, %cst_165 {dimension_numbers = #tpu.dot_dimension_numbers<[1], [0], [0], [1], [0, 0, 1, 1], [], []>} : vector<16x32xbf16>, vector<32x16xbf16>, vector<16x16xf32> -> vector<16x16xf32>
    %c0_166 = arith.constant 0 : index
    %c0_167 = arith.constant 0 : index
    %313 = vector.load %arg22[%c0_166, %c0_167] : memref<1x16xf32, #tpu.memory_space<vmem>>, vector<1x16xf32>
    %314 = vector.broadcast %313 : vector<1x16xf32> to vector<16x16xf32>
    %315 = arith.addf %312, %314 : vector<16x16xf32>
    %cst_168 = arith.constant 0.000000e+00 : f32
    %316 = vector.broadcast %cst_168 : f32 to vector<16x16xf32>
    %317 = arith.maximumf %315, %316 : vector<16x16xf32>
    %c0_169 = arith.constant 0 : index
    %c0_170 = arith.constant 0 : index
    %318 = vector.load %arg23[%c0_169, %c0_170] : memref<16x32xbf16, #tpu.memory_space<vmem>>, vector<16x32xbf16>
    %319 = arith.truncf %317 : vector<16x16xf32> to vector<16x16xbf16>
    %cst_171 = arith.constant dense<0.000000e+00> : vector<16x32xf32>
    %320 = tpu.matmul %319, %318, %cst_171 {dimension_numbers = #tpu.dot_dimension_numbers<[1], [0], [0], [1], [0, 0, 1, 1], [], []>} : vector<16x16xbf16>, vector<16x32xbf16>, vector<16x32xf32> -> vector<16x32xf32>
    %321 = arith.addf %285, %320 : vector<16x32xf32>
    %c0_172 = arith.constant 0 : index
    %c0_173 = arith.constant 0 : index
    %322 = vector.load %arg24[%c0_172, %c0_173] : memref<1x32xf32, #tpu.memory_space<vmem>>, vector<1x32xf32>
    %323 = vector.broadcast %322 : vector<1x32xf32> to vector<16x32xf32>
    %324 = arith.addf %321, %323 : vector<16x32xf32>
    %c0_174 = arith.constant 0 : index
    %c0_175 = arith.constant 0 : index
    %325 = vector.load %arg25[%c0_174, %c0_175] : memref<16x32xf32, #tpu.memory_space<vmem>>, vector<16x32xf32>
    tpu.vector_store %arg25[%c0_174, %c0_175], %324 {strides = array<i32>} : memref<16x32xf32, #tpu.memory_space<vmem>>, vector<16x32xf32>,
    return
  }
  func.func @transform_0(%arg0: i32) -> (i32, i32) {
    %c0_i32 = arith.constant 0 : i32
    %c0_i32_0 = arith.constant 0 : i32
    return %arg0, %c0_i32 : i32, i32
  }
  func.func @transform_1(%arg0: i32) -> (i32, i32, i32) {
    %c0_i32 = arith.constant 0 : i32
    %c0_i32_0 = arith.constant 0 : i32
    %c0_i32_1 = arith.constant 0 : i32
    return %arg0, %c0_i32, %c0_i32_0 : i32, i32, i32
  }
  func.func @transform_2(%arg0: i32) -> (i32, i32) {
    %c0_i32 = arith.constant 0 : i32
    %c0_i32_0 = arith.constant 0 : i32
    %c0_i32_1 = arith.constant 0 : i32
    return %c0_i32, %c0_i32_0 : i32, i32
  }
  func.func @transform_3(%arg0: i32) -> (i32, i32) {
    %c0_i32 = arith.constant 0 : i32
    %c0_i32_0 = arith.constant 0 : i32
    %c0_i32_1 = arith.constant 0 : i32
    return %c0_i32, %c0_i32_0 : i32, i32
  }
  func.func @transform_4(%arg0: i32) -> (i32, i32, i32) {
    %c0_i32 = arith.constant 0 : i32
    %c0_i32_0 = arith.constant 0 : i32
    %c0_i32_1 = arith.constant 0 : i32
    %c0_i32_2 = arith.constant 0 : i32
    return %c0_i32, %c0_i32_0, %c0_i32_1 : i32, i32, i32
  }
  func.func @transform_5(%arg0: i32) -> (i32, i32, i32) {
    %c0_i32 = arith.constant 0 : i32
    %c0_i32_0 = arith.constant 0 : i32
    %c0_i32_1 = arith.constant 0 : i32
    %c0_i32_2 = arith.constant 0 : i32
    return %c0_i32, %c0_i32_0, %c0_i32_1 : i32, i32, i32
  }
  func.func @transform_6(%arg0: i32) -> (i32, i32, i32) {
    %c0_i32 = arith.constant 0 : i32
    %c0_i32_0 = arith.constant 0 : i32
    %c0_i32_1 = arith.constant 0 : i32
    %c0_i32_2 = arith.constant 0 : i32
    return %c0_i32, %c0_i32_0, %c0_i32_1 : i32, i32, i32
  }
  func.func @transform_7(%arg0: i32) -> (i32, i32, i32) {
    %c0_i32 = arith.constant 0 : i32
    %c0_i32_0 = arith.constant 0 : i32
    %c0_i32_1 = arith.constant 0 : i32
    %c0_i32_2 = arith.constant 0 : i32
    return %c0_i32, %c0_i32_0, %c0_i32_1 : i32, i32, i32
  }
  func.func @transform_8(%arg0: i32) -> (i32, i32, i32) {
    %c0_i32 = arith.constant 0 : i32
    %c0_i32_0 = arith.constant 0 : i32
    %c0_i32_1 = arith.constant 0 : i32
    %c0_i32_2 = arith.constant 0 : i32
    return %c0_i32, %c0_i32_0, %c0_i32_1 : i32, i32, i32
  }
  func.func @transform_9(%arg0: i32) -> (i32, i32, i32) {
    %c0_i32 = arith.constant 0 : i32
    %c0_i32_0 = arith.constant 0 : i32
    %c0_i32_1 = arith.constant 0 : i32
    %c0_i32_2 = arith.constant 0 : i32
    return %c0_i32, %c0_i32_0, %c0_i32_1 : i32, i32, i32
  }
  func.func @transform_10(%arg0: i32) -> (i32, i32, i32) {
    %c0_i32 = arith.constant 0 : i32
    %c0_i32_0 = arith.constant 0 : i32
    %c0_i32_1 = arith.constant 0 : i32
    %c0_i32_2 = arith.constant 0 : i32
    return %c0_i32, %c0_i32_0, %c0_i32_1 : i32, i32, i32
  }
  func.func @transform_11(%arg0: i32) -> (i32, i32) {
    %c0_i32 = arith.constant 0 : i32
    %c0_i32_0 = arith.constant 0 : i32
    %c0_i32_1 = arith.constant 0 : i32
    return %c0_i32, %c0_i32_0 : i32, i32
  }
  func.func @transform_12(%arg0: i32) -> (i32, i32) {
    %c0_i32 = arith.constant 0 : i32
    %c0_i32_0 = arith.constant 0 : i32
    %c0_i32_1 = arith.constant 0 : i32
    return %c0_i32, %c0_i32_0 : i32, i32
  }
  func.func @transform_13(%arg0: i32) -> (i32, i32) {
    %c0_i32 = arith.constant 0 : i32
    %c0_i32_0 = arith.constant 0 : i32
    %c0_i32_1 = arith.constant 0 : i32
    return %c0_i32, %c0_i32_0 : i32, i32
  }
  func.func @transform_14(%arg0: i32) -> (i32, i32) {
    %c0_i32 = arith.constant 0 : i32
    %c0_i32_0 = arith.constant 0 : i32
    %c0_i32_1 = arith.constant 0 : i32
    return %c0_i32, %c0_i32_0 : i32, i32
  }
  func.func @transform_15(%arg0: i32) -> (i32, i32) {
    %c0_i32 = arith.constant 0 : i32
    %c0_i32_0 = arith.constant 0 : i32
    %c0_i32_1 = arith.constant 0 : i32
    return %c0_i32, %c0_i32_0 : i32, i32
  }
  func.func @transform_16(%arg0: i32) -> (i32, i32) {
    %c0_i32 = arith.constant 0 : i32
    %c0_i32_0 = arith.constant 0 : i32
    %c0_i32_1 = arith.constant 0 : i32
    return %c0_i32, %c0_i32_0 : i32, i32
  }
  func.func @transform_17(%arg0: i32) -> (i32, i32) {
    %c0_i32 = arith.constant 0 : i32
    %c0_i32_0 = arith.constant 0 : i32
    %c0_i32_1 = arith.constant 0 : i32
    return %c0_i32, %c0_i32_0 : i32, i32
  }
  func.func @transform_18(%arg0: i32) -> (i32, i32) {
    %c0_i32 = arith.constant 0 : i32
    %c0_i32_0 = arith.constant 0 : i32
    %c0_i32_1 = arith.constant 0 : i32
    return %c0_i32, %c0_i32_0 : i32, i32
  }
  func.func @transform_19(%arg0: i32) -> (i32, i32) {
    %c0_i32 = arith.constant 0 : i32
    %c0_i32_0 = arith.constant 0 : i32
    %c0_i32_1 = arith.constant 0 : i32
    return %c0_i32, %c0_i32_0 : i32, i32
  }
  func.func @transform_20(%arg0: i32) -> (i32, i32) {
    %c0_i32 = arith.constant 0 : i32
    %c0_i32_0 = arith.constant 0 : i32
    %c0_i32_1 = arith.constant 0 : i32
    return %c0_i32, %c0_i32_0 : i32, i32
  }
  func.func @transform_21(%arg0: i32) -> (i32, i32) {
    %c0_i32 = arith.constant 0 : i32
    %c0_i32_0 = arith.constant 0 : i32
    %c0_i32_1 = arith.constant 0 : i32
    return %c0_i32, %c0_i32_0 : i32, i32
  }
  func.func @transform_22(%arg0: i32) -> (i32, i32) {
    %c0_i32 = arith.constant 0 : i32
    %c0_i32_0 = arith.constant 0 : i32
    %c0_i32_1 = arith.constant 0 : i32
    return %c0_i32, %c0_i32_0 : i32, i32
  }
  func.func @transform_23(%arg0: i32) -> (i32, i32) {
    %c0_i32 = arith.constant 0 : i32
    %c0_i32_0 = arith.constant 0 : i32
    %c0_i32_1 = arith.constant 0 : i32
    return %c0_i32, %c0_i32_0 : i32, i32
  }
  func.func @transform_24(%arg0: i32) -> (i32, i32) {
    %c0_i32 = arith.constant 0 : i32
    %c0_i32_0 = arith.constant 0 : i32
    return %arg0, %c0_i32 : i32, i32
  }
}

</mosaic_0001>

<llo_original>
// kernel: tpu_custom_call.1
$region0: #{tpu_custom_call.1}
  #allocation0 [shape = 'u32[]', space=smem, size = 0x4, offset = 0x4, fixed_abs, tag = 'smem constant byte address 0x4 - core index']
  #allocation1 [shape = 'u32[144,128]{1,0:T(1,128)}', space=vmem, size = 0x12000, scoped, tag = 'internal scratch']
  %s0 = inlined_call_operand.vmem [shape: f32[16,32], index: 0, kind: input, shape index: {}]
  %s1 = inlined_call_operand.vmem [shape: f32[2,1,8], index: 1, kind: input, shape index: {}]
  %s2 = inlined_call_operand.vmem [shape: f32[1,32], index: 2, kind: input, shape index: {}]
  %s3 = inlined_call_operand.vmem [shape: f32[1,32], index: 3, kind: input, shape index: {}]
  %s4 = inlined_call_operand.vmem [shape: bf16[4,32,8], index: 4, kind: input, shape index: {}]
  %s5 = inlined_call_operand.vmem [shape: f32[4,1,8], index: 5, kind: input, shape index: {}]
  %s6 = inlined_call_operand.vmem [shape: bf16[4,32,8], index: 6, kind: input, shape index: {}]
  %s7 = inlined_call_operand.vmem [shape: f32[4,1,8], index: 7, kind: input, shape index: {}]
  %s8 = inlined_call_operand.vmem [shape: bf16[4,32,8], index: 8, kind: input, shape index: {}]
  %s9 = inlined_call_operand.vmem [shape: f32[4,1,8], index: 9, kind: input, shape index: {}]
  %s10 = inlined_call_operand.vmem [shape: bf16[4,8,32], index: 10, kind: input, shape index: {}]
  %s11 = inlined_call_operand.vmem [shape: f32[1,32], index: 11, kind: input, shape index: {}]
  %s12 = inlined_call_operand.vmem [shape: f32[1,32], index: 12, kind: input, shape index: {}]
  %s13 = inlined_call_operand.vmem [shape: f32[1,32], index: 13, kind: input, shape index: {}]
  %s14 = inlined_call_operand.vmem [shape: bf16[32,64], index: 14, kind: input, shape index: {}]
  %s15 = inlined_call_operand.vmem [shape: f32[1,64], index: 15, kind: input, shape index: {}]
  %s16 = inlined_call_operand.vmem [shape: bf16[64,32], index: 16, kind: input, shape index: {}]
  %s17 = inlined_call_operand.vmem [shape: f32[1,32], index: 17, kind: input, shape index: {}]
  %s18 = inlined_call_operand.vmem [shape: f32[1,32], index: 18, kind: input, shape index: {}]
  %s19 = inlined_call_operand.vmem [shape: f32[1,32], index: 19, kind: input, shape index: {}]
  %s20 = inlined_call_operand.vmem [shape: bf16[32,16], index: 20, kind: input, shape index: {}]
  %s21 = inlined_call_operand.vmem [shape: f32[1,16], index: 21, kind: input, shape index: {}]
  %s22 = inlined_call_operand.vmem [shape: bf16[16,32], index: 22, kind: input, shape index: {}]
  %s23 = inlined_call_operand.vmem [shape: f32[1,32], index: 23, kind: input, shape index: {}]
  %s24 = inlined_call_operand.hbm [shape: f32[16,32], index: 24, kind: output, shape index: {}]
  %s25 = sld [smem:[#allocation0]]
  $region106: #{tpu_custom_call.1} parent=0
    _
  %s27 = ssub.s32 1, %s25
  %s28 = scalar_select 0, %s27, %s25
  $region1: #{tpu_custom_call.1} parent=0
    #allocation2 [shape = 'u8[8192]{0}', space=vmem, size = 0x2000, scoped, tag = 'output window, operand 0, single buffered']
    #allocation3 [shape = 's32[1]{0}', space=sflag, size = 0x4, scoped, tag = 'scoped memory for tpu_custom_call.1']
    %29 = vsyncpa [#allocation3], 0
    // Predicated region
    $region2: #{tpu_custom_call.1} parent=1 // pred_check
      _
    $region3: #{tpu_custom_call.1} parent=1 // pred_check_branch
      %31 = sbr.rel (0) target = $region5
    $region4: #{tpu_custom_call.1} parent=1 // pred_region
      _
    $region5: #{tpu_custom_call.1} parent=1 // pred_fallthru
      _
    // Predicated region
    $region6: #{tpu_custom_call.1} parent=1 // pred_check
      _
    $region7: #{tpu_custom_call.1} parent=1 // pred_check_branch
      %33 = sbr.rel (0) target = $region9
    $region8: #{tpu_custom_call.1} parent=1 // pred_region
      _
    $region9: #{tpu_custom_call.1} parent=1 // pred_fallthru
      _
    // Predicated region
    $region10: #{tpu_custom_call.1} parent=1 // pred_check
      _
    $region11: #{tpu_custom_call.1} parent=1 // pred_check_branch
      %35 = sbr.rel (0) target = $region13
    $region12: #{tpu_custom_call.1} parent=1 // pred_region
      _
    $region13: #{tpu_custom_call.1} parent=1 // pred_fallthru
      _
    // Predicated region
    $region14: #{tpu_custom_call.1} parent=1 // pred_check
      _
    $region15: #{tpu_custom_call.1} parent=1 // pred_check_branch
      %37 = sbr.rel (0) target = $region17
    $region16: #{tpu_custom_call.1} parent=1 // pred_region
      _
    $region17: #{tpu_custom_call.1} parent=1 // pred_fallthru
      _
    // Predicated region
    $region18: #{tpu_custom_call.1} parent=1 // pred_check
      _
    $region19: #{tpu_custom_call.1} parent=1 // pred_check_branch
      %39 = sbr.rel (0) target = $region21
    $region20: #{tpu_custom_call.1} parent=1 // pred_region
      _
    $region21: #{tpu_custom_call.1} parent=1 // pred_fallthru
      _
    // Predicated region
    $region22: #{tpu_custom_call.1} parent=1 // pred_check
      _
    $region23: #{tpu_custom_call.1} parent=1 // pred_check_branch
      %41 = sbr.rel (0) target = $region25
    $region24: #{tpu_custom_call.1} parent=1 // pred_region
      _
    $region25: #{tpu_custom_call.1} parent=1 // pred_fallthru
      _
    // Predicated region
    $region26: #{tpu_custom_call.1} parent=1 // pred_check
      _
    $region27: #{tpu_custom_call.1} parent=1 // pred_check_branch
      %43 = sbr.rel (0) target = $region29
    $region28: #{tpu_custom_call.1} parent=1 // pred_region
      _
    $region29: #{tpu_custom_call.1} parent=1 // pred_fallthru
      _
    // Predicated region
    $region30: #{tpu_custom_call.1} parent=1 // pred_check
      _
    $region31: #{tpu_custom_call.1} parent=1 // pred_check_branch
      %45 = sbr.rel (0) target = $region33
    $region32: #{tpu_custom_call.1} parent=1 // pred_region
      _
    $region33: #{tpu_custom_call.1} parent=1 // pred_fallthru
      _
    // Predicated region
    $region34: #{tpu_custom_call.1} parent=1 // pred_check
      _
    $region35: #{tpu_custom_call.1} parent=1 // pred_check_branch
      %47 = sbr.rel (0) target = $region37
    $region36: #{tpu_custom_call.1} parent=1 // pred_region
      _
    $region37: #{tpu_custom_call.1} parent=1 // pred_fallthru
      _
    // Predicated region
    $region38: #{tpu_custom_call.1} parent=1 // pred_check
      _
    $region39: #{tpu_custom_call.1} parent=1 // pred_check_branch
      %49 = sbr.rel (0) target = $region41
    $region40: #{tpu_custom_call.1} parent=1 // pred_region
      _
    $region41: #{tpu_custom_call.1} parent=1 // pred_fallthru
      _
    // Predicated region
    $region42: #{tpu_custom_call.1} parent=1 // pred_check
      _
    $region43: #{tpu_custom_call.1} parent=1 // pred_check_branch
      %51 = sbr.rel (0) target = $region45
    $region44: #{tpu_custom_call.1} parent=1 // pred_region
      _
    $region45: #{tpu_custom_call.1} parent=1 // pred_fallthru
      _
    // Predicated region
    $region46: #{tpu_custom_call.1} parent=1 // pred_check
      _
    $region47: #{tpu_custom_call.1} parent=1 // pred_check_branch
      %53 = sbr.rel (0) target = $region49
    $region48: #{tpu_custom_call.1} parent=1 // pred_region
      _
    $region49: #{tpu_custom_call.1} parent=1 // pred_fallthru
      _
    // Predicated region
    $region50: #{tpu_custom_call.1} parent=1 // pred_check
      _
    $region51: #{tpu_custom_call.1} parent=1 // pred_check_branch
      %55 = sbr.rel (0) target = $region53
    $region52: #{tpu_custom_call.1} parent=1 // pred_region
      _
    $region53: #{tpu_custom_call.1} parent=1 // pred_fallthru
      _
    // Predicated region
    $region54: #{tpu_custom_call.1} parent=1 // pred_check
      _
    $region55: #{tpu_custom_call.1} parent=1 // pred_check_branch
      %57 = sbr.rel (0) target = $region57
    $region56: #{tpu_custom_call.1} parent=1 // pred_region
      _
    $region57: #{tpu_custom_call.1} parent=1 // pred_fallthru
      _
    // Predicated region
    $region58: #{tpu_custom_call.1} parent=1 // pred_check
      _
    $region59: #{tpu_custom_call.1} parent=1 // pred_check_branch
      %59 = sbr.rel (0) target = $region61
    $region60: #{tpu_custom_call.1} parent=1 // pred_region
      _
    $region61: #{tpu_custom_call.1} parent=1 // pred_fallthru
      _
    // Predicated region
    $region62: #{tpu_custom_call.1} parent=1 // pred_check
      _
    $region63: #{tpu_custom_call.1} parent=1 // pred_check_branch
      %61 = sbr.rel (0) target = $region65
    $region64: #{tpu_custom_call.1} parent=1 // pred_region
      _
    $region65: #{tpu_custom_call.1} parent=1 // pred_fallthru
      _
    // Predicated region
    $region66: #{tpu_custom_call.1} parent=1 // pred_check
      _
    $region67: #{tpu_custom_call.1} parent=1 // pred_check_branch
      %63 = sbr.rel (0) target = $region69
    $region68: #{tpu_custom_call.1} parent=1 // pred_region
      _
    $region69: #{tpu_custom_call.1} parent=1 // pred_fallthru
      _
    // Predicated region
    $region70: #{tpu_custom_call.1} parent=1 // pred_check
      _
    $region71: #{tpu_custom_call.1} parent=1 // pred_check_branch
      %65 = sbr.rel (0) target = $region73
    $region72: #{tpu_custom_call.1} parent=1 // pred_region
      _
    $region73: #{tpu_custom_call.1} parent=1 // pred_fallthru
      _
    // Predicated region
    $region74: #{tpu_custom_call.1} parent=1 // pred_check
      _
    $region75: #{tpu_custom_call.1} parent=1 // pred_check_branch
      %67 = sbr.rel (0) target = $region77
    $region76: #{tpu_custom_call.1} parent=1 // pred_region
      _
    $region77: #{tpu_custom_call.1} parent=1 // pred_fallthru
      _
    // Predicated region
    $region78: #{tpu_custom_call.1} parent=1 // pred_check
      _
    $region79: #{tpu_custom_call.1} parent=1 // pred_check_branch
      %69 = sbr.rel (0) target = $region81
    $region80: #{tpu_custom_call.1} parent=1 // pred_region
      _
    $region81: #{tpu_custom_call.1} parent=1 // pred_fallthru
      _
    // Predicated region
    $region82: #{tpu_custom_call.1} parent=1 // pred_check
      _
    $region83: #{tpu_custom_call.1} parent=1 // pred_check_branch
      %71 = sbr.rel (0) target = $region85
    $region84: #{tpu_custom_call.1} parent=1 // pred_region
      _
    $region85: #{tpu_custom_call.1} parent=1 // pred_fallthru
      _
    // Predicated region
    $region86: #{tpu_custom_call.1} parent=1 // pred_check
      _
    $region87: #{tpu_custom_call.1} parent=1 // pred_check_branch
      %73 = sbr.rel (0) target = $region89
    $region88: #{tpu_custom_call.1} parent=1 // pred_region
      _
    $region89: #{tpu_custom_call.1} parent=1 // pred_fallthru
      _
    // Predicated region
    $region90: #{tpu_custom_call.1} parent=1 // pred_check
      _
    $region91: #{tpu_custom_call.1} parent=1 // pred_check_branch
      %75 = sbr.rel (0) target = $region93
    $region92: #{tpu_custom_call.1} parent=1 // pred_region
      _
    $region93: #{tpu_custom_call.1} parent=1 // pred_fallthru
      _
    // Predicated region
    $region94: #{tpu_custom_call.1} parent=1 // pred_check
      _
    $region95: #{tpu_custom_call.1} parent=1 // pred_check_branch
      %77 = sbr.rel (0) target = $region97
    $region96: #{tpu_custom_call.1} parent=1 // pred_region
      _
    $region97: #{tpu_custom_call.1} parent=1 // pred_fallthru
      _
    %v79 = vld [vmem:[%s0] sm:$0xff]
    %v80 = vld [vmem:[%s0 + $0x8] sm:$0xff]
    %v81 = vld [vmem:[%s1] sm:$0x1]
    %v82 = vld [vmem:[%s1 + $0x1] sm:$0x1]
    %v83 = vsub.f32 %v81, 1.0
    %v84 = vsub.f32 %v82, 1.0
    %v85 = vmul.f32 %v83, 1e+09
    %v86 = vmul.f32 %v84, 1e+09
    %v87 = vld [vmem:[%s2] sm:$0x1]
    %v88 = vld [vmem:[%s3] sm:$0x1]
    %vm89 = vcmask 261120
    %v90 = vsel %vm89, %v79, 0.0
    %91 = vadd.xlane.f32.xlu0 %v90
    %v92 = vpop.xlane.xlu0 %91
    %v93 = vsel %vm89, %v80, 0.0
    %94 = vadd.xlane.f32.xlu0 %v93
    %v95 = vpop.xlane.xlu0 %94
    %v96 = vrcp.pop 32.0
    %v97 = vmul.f32 %v92, %v96
    %v98 = vmul.f32 %v95, %v96
    %v99 = vsub.f32 %v79, %v97
    %v100 = vsub.f32 %v80, %v98
    %v101 = vmul.f32 %v99, %v99
    %v102 = vmul.f32 %v100, %v100
    %v103 = vsel %vm89, %v101, 0.0
    %104 = vadd.xlane.f32.xlu0 %v103
    %v105 = vpop.xlane.xlu0 %104
    %v106 = vsel %vm89, %v102, 0.0
    %107 = vadd.xlane.f32.xlu0 %v106
    %v108 = vpop.xlane.xlu0 %107
    %v109 = vmul.f32 %v105, %v96
    %v110 = vmul.f32 %v108, %v96
    %v112 = vlaneseq
    %v113 = vshrl.u32 %v112, 7
    %v114 = vsub.s32 0, %v113
    %v115 = vrot.slane %v87, %v114
    %v117 = vmul.f32 %v115, %v99
    %v118 = vmul.f32 %v115, %v100
    %v119 = vadd.f32 %v109, 1e-06
    %v120 = vadd.f32 %v110, 1e-06
    %v121 = vrsqrt.pop %v119
    %v122 = vrsqrt.pop %v120
    %v123 = vmul.f32 %v117, %v121
    %v124 = vmul.f32 %v118, %v122
    %v126 = vlaneseq
    %v127 = vshrl.u32 %v126, 7
    %v128 = vsub.s32 0, %v127
    %v129 = vrot.slane %v88, %v128
    %v131 = vadd.f32 %v123, %v129
    %v132 = vadd.f32 %v124, %v129
    %v133 = vld [vmem:[%s4] sm:$0xf]
    %v134 = vld [vmem:[%s4 + $0x4] sm:$0xf]
    %v135 = vld [vmem:[%s4 + $0x8] sm:$0xf]
    %v136 = vld [vmem:[%s4 + $0xc] sm:$0xf]
    %v137 = vpack.c.bf16 %v132, %v131
    %v138 = vld [vmem:[%s5] sm:$0x1]
    %v140 = vlaneseq
    %v141 = vshrl.u32 %v140, 7
    %v142 = vsub.s32 0, %v141
    %v143 = vrot.slane %v138, %v142
    %v149 = vunpack.c.l.b16 %v133
    %v150 = vunpack.c.l.b16 %v134
    %v151 = vunpack.c.l.b16 %v135
    %v152 = vunpack.c.l.b16 %v136
    %v153 = vpack.c.b16 %v150, %v149
    %v154 = vpack.c.b16 %v152, %v151
    %v158 = vsel %vm89, %v137, 0
    %160 = vmatprep.subr.bf16.mxu0 0
    %161 = vmatpush1.bf16.msra.mxu0 %v153
    %162 = vmatprep.subr.bf16.mxu0 0
    %163 = vmatpush1.bf16.msra.mxu0 %v154
    %164 = vmatprep.subr.bf16.mxu0 0
    %165 = vmatpush1.bf16.msra.mxu0 0
    %166 = vmatprep.subr.bf16.mxu0 0
    %167 = vmatpush1.bf16.msra.mxu0 0
    %168 = vmatprep.subr.bf16.mxu0 0
    %169 = vmatpush1.bf16.msra.mxu0 0
    %170 = vmatprep.subr.bf16.mxu0 0
    %171 = vmatpush1.bf16.msra.mxu0 0
    %172 = vmatprep.subr.bf16.mxu0 0
    %173 = vmatpush1.bf16.msra.mxu0 0
    %174 = vmatprep.subr.bf16.mxu0 0
    %175 = vmatpush1.bf16.msra.mxu0 0
    %176 = vmatprep.subr.bf16.mxu0 0
    %177 = vmatpush1.bf16.msra.mxu0 0
    %178 = vmatprep.subr.bf16.mxu0 0
    %179 = vmatpush1.bf16.msra.mxu0 0
    %180 = vmatprep.subr.bf16.mxu0 0
    %181 = vmatpush1.bf16.msra.mxu0 0
    %182 = vmatprep.subr.bf16.mxu0 0
    %183 = vmatpush1.bf16.msra.mxu0 0
    %184 = vmatprep.subr.bf16.mxu0 0
    %185 = vmatpush1.bf16.msra.mxu0 0
    %186 = vmatprep.subr.bf16.mxu0 0
    %187 = vmatpush1.bf16.msra.mxu0 0
    %188 = vmatprep.subr.bf16.mxu0 0
    %189 = vmatpush1.bf16.msra.mxu0 0
    %190 = vmatprep.subr.bf16.mxu0 0
    %191 = vmatpush1.bf16.msra.mxu0 0
    %192 = vmatprep.mubr.bf16.mxu0 0
    %193 = vmatmul.mubr.bf16.gmra.mrb[0].mxu0 %v158
    %v194 = vpop.f32.mrb[0].mxu0
    %v195 = vadd.f32 %v143, %v194
    %v196 = vpop.f32.mrb[0].mxu0
    %v197 = vpop.f32.mrb[0].mxu0
    %v198 = vadd.f32 %v143, %v197
    %v199 = vpop.f32.mrb[0].mxu0
    %200 = vdwg.mxu0
    %v201 = vld [vmem:[%s6] sm:$0xf]
    %v202 = vld [vmem:[%s6 + $0x4] sm:$0xf]
    %v203 = vld [vmem:[%s6 + $0x8] sm:$0xf]
    %v204 = vld [vmem:[%s6 + $0xc] sm:$0xf]
    %v205 = vld [vmem:[%s7] sm:$0x1]
    %v207 = vlaneseq
    %v208 = vshrl.u32 %v207, 7
    %v209 = vsub.s32 0, %v208
    %v210 = vrot.slane %v205, %v209
    %v216 = vunpack.c.l.b16 %v201
    %v217 = vunpack.c.l.b16 %v202
    %v218 = vunpack.c.l.b16 %v203
    %v219 = vunpack.c.l.b16 %v204
    %v220 = vpack.c.b16 %v217, %v216
    %v221 = vpack.c.b16 %v219, %v218
    %224 = vmatprep.subr.bf16.mxu0 0
    %225 = vmatpush1.bf16.msra.mxu0 %v220
    %226 = vmatprep.subr.bf16.mxu0 0
    %227 = vmatpush1.bf16.msra.mxu0 %v221
    %228 = vmatprep.subr.bf16.mxu0 0
    %229 = vmatpush1.bf16.msra.mxu0 0
    %230 = vmatprep.subr.bf16.mxu0 0
    %231 = vmatpush1.bf16.msra.mxu0 0
    %232 = vmatprep.subr.bf16.mxu0 0
    %233 = vmatpush1.bf16.msra.mxu0 0
    %234 = vmatprep.subr.bf16.mxu0 0
    %235 = vmatpush1.bf16.msra.mxu0 0
    %236 = vmatprep.subr.bf16.mxu0 0
    %237 = vmatpush1.bf16.msra.mxu0 0
    %238 = vmatprep.subr.bf16.mxu0 0
    %239 = vmatpush1.bf16.msra.mxu0 0
    %240 = vmatprep.subr.bf16.mxu0 0
    %241 = vmatpush1.bf16.msra.mxu0 0
    %242 = vmatprep.subr.bf16.mxu0 0
    %243 = vmatpush1.bf16.msra.mxu0 0
    %244 = vmatprep.subr.bf16.mxu0 0
    %245 = vmatpush1.bf16.msra.mxu0 0
    %246 = vmatprep.subr.bf16.mxu0 0
    %247 = vmatpush1.bf16.msra.mxu0 0
    %248 = vmatprep.subr.bf16.mxu0 0
    %249 = vmatpush1.bf16.msra.mxu0 0
    %250 = vmatprep.subr.bf16.mxu0 0
    %251 = vmatpush1.bf16.msra.mxu0 0
    %252 = vmatprep.subr.bf16.mxu0 0
    %253 = vmatpush1.bf16.msra.mxu0 0
    %254 = vmatprep.subr.bf16.mxu0 0
    %255 = vmatpush1.bf16.msra.mxu0 0
    %256 = vmatprep.mubr.bf16.mxu0 0
    %257 = vmatmul.mubr.bf16.gmra.mrb[0].mxu0 %v158
    %v258 = vpop.f32.mrb[0].mxu0
    %v259 = vadd.f32 %v210, %v258
    %v260 = vpop.f32.mrb[0].mxu0
    %v261 = vpop.f32.mrb[0].mxu0
    %v262 = vadd.f32 %v210, %v261
    %v263 = vpop.f32.mrb[0].mxu0
    %264 = vdwg.mxu0
    %v265 = vld [vmem:[%s8] sm:$0xf]
    %v266 = vld [vmem:[%s8 + $0x4] sm:$0xf]
    %v267 = vld [vmem:[%s8 + $0x8] sm:$0xf]
    %v268 = vld [vmem:[%s8 + $0xc] sm:$0xf]
    %v269 = vld [vmem:[%s9] sm:$0x1]
    %v271 = vlaneseq
    %v272 = vshrl.u32 %v271, 7
    %v273 = vsub.s32 0, %v272
    %v274 = vrot.slane %v269, %v273
    %v280 = vunpack.c.l.b16 %v265
    %v281 = vunpack.c.l.b16 %v266
    %v282 = vunpack.c.l.b16 %v267
    %v283 = vunpack.c.l.b16 %v268
    %v284 = vpack.c.b16 %v281, %v280
    %v285 = vpack.c.b16 %v283, %v282
    %288 = vmatprep.subr.bf16.mxu0 0
    %289 = vmatpush1.bf16.msra.mxu0 %v284
    %290 = vmatprep.subr.bf16.mxu0 0
    %291 = vmatpush1.bf16.msra.mxu0 %v285
    %292 = vmatprep.subr.bf16.mxu0 0
    %293 = vmatpush1.bf16.msra.mxu0 0
    %294 = vmatprep.subr.bf16.mxu0 0
    %295 = vmatpush1.bf16.msra.mxu0 0
    %296 = vmatprep.subr.bf16.mxu0 0
    %297 = vmatpush1.bf16.msra.mxu0 0
    %298 = vmatprep.subr.bf16.mxu0 0
    %299 = vmatpush1.bf16.msra.mxu0 0
    %300 = vmatprep.subr.bf16.mxu0 0
    %301 = vmatpush1.bf16.msra.mxu0 0
    %302 = vmatprep.subr.bf16.mxu0 0
    %303 = vmatpush1.bf16.msra.mxu0 0
    %304 = vmatprep.subr.bf16.mxu0 0
    %305 = vmatpush1.bf16.msra.mxu0 0
    %306 = vmatprep.subr.bf16.mxu0 0
    %307 = vmatpush1.bf16.msra.mxu0 0
    %308 = vmatprep.subr.bf16.mxu0 0
    %309 = vmatpush1.bf16.msra.mxu0 0
    %310 = vmatprep.subr.bf16.mxu0 0
    %311 = vmatpush1.bf16.msra.mxu0 0
    %312 = vmatprep.subr.bf16.mxu0 0
    %313 = vmatpush1.bf16.msra.mxu0 0
    %314 = vmatprep.subr.bf16.mxu0 0
    %315 = vmatpush1.bf16.msra.mxu0 0
    %316 = vmatprep.subr.bf16.mxu0 0
    %317 = vmatpush1.bf16.msra.mxu0 0
    %318 = vmatprep.subr.bf16.mxu0 0
    %319 = vmatpush1.bf16.msra.mxu0 0
    %320 = vmatprep.mubr.bf16.mxu0 0
    %321 = vmatmul.mubr.bf16.gmra.mrb[0].mxu0 %v158
    %v322 = vpop.f32.mrb[0].mxu0
    %v323 = vadd.f32 %v274, %v322
    %v324 = vpop.f32.mrb[0].mxu0
    %v325 = vpop.f32.mrb[0].mxu0
    %v326 = vadd.f32 %v274, %v325
    %v327 = vpop.f32.mrb[0].mxu0
    %328 = vdwg.mxu0
    %v329 = vpack.c.bf16 %v195, %v195
    %v330 = vpack.c.bf16 %v198, %v198
    %v331 = vpack.c.bf16 %v259, %v259
    %v332 = vpack.c.bf16 %v262, %v262
    %vm333 = vcmask 64512
    %v335 = vsel %vm333, %v329, 0
    %v338 = vsel %vm333, %v331, 0
    %340 = vmatprep.subr.bf16.mxu0 0
    %341 = vmatpush1.bf16.xpose.msra.mxu0 %v338
    %342 = vmatprep.subr.bf16.mxu0 0
    %343 = vmatpush1.bf16.xpose.msra.mxu0 0
    %344 = vmatprep.subr.bf16.mxu0 0
    %345 = vmatpush1.bf16.xpose.msra.mxu0 0
    %346 = vmatprep.subr.bf16.mxu0 0
    %347 = vmatpush1.bf16.xpose.msra.mxu0 0
    %348 = vmatprep.subr.bf16.mxu0 0
    %349 = vmatpush1.bf16.xpose.msra.mxu0 0
    %350 = vmatprep.subr.bf16.mxu0 0
    %351 = vmatpush1.bf16.xpose.msra.mxu0 0
    %352 = vmatprep.subr.bf16.mxu0 0
    %353 = vmatpush1.bf16.xpose.msra.mxu0 0
    %354 = vmatprep.subr.bf16.mxu0 0
    %355 = vmatpush1.bf16.xpose.msra.mxu0 0
    %356 = vmatprep.subr.bf16.mxu0 0
    %357 = vmatpush1.bf16.xpose.msra.mxu0 0
    %358 = vmatprep.subr.bf16.mxu0 0
    %359 = vmatpush1.bf16.xpose.msra.mxu0 0
    %360 = vmatprep.subr.bf16.mxu0 0
    %361 = vmatpush1.bf16.xpose.msra.mxu0 0
    %362 = vmatprep.subr.bf16.mxu0 0
    %363 = vmatpush1.bf16.xpose.msra.mxu0 0
    %364 = vmatprep.subr.bf16.mxu0 0
    %365 = vmatpush1.bf16.xpose.msra.mxu0 0
    %366 = vmatprep.subr.bf16.mxu0 0
    %367 = vmatpush1.bf16.xpose.msra.mxu0 0
    %368 = vmatprep.subr.bf16.mxu0 0
    %369 = vmatpush1.bf16.xpose.msra.mxu0 0
    %370 = vmatprep.subr.bf16.mxu0 0
    %371 = vmatpush1.bf16.xpose.msra.mxu0 0
    %372 = vmatprep.mubr.bf16.mxu0 0
    %373 = vmatmul.mubr.bf16.gmra.mrb[0].mxu0 %v335
    %v374 = vpop.f32.mrb[0].mxu0
    %v375 = vadd.f32 0.0, %v374
    %v376 = vpop.f32.mrb[0].mxu0
    %v377 = vpop.f32.mrb[0].mxu0
    %v378 = vpop.f32.mrb[0].mxu0
    %379 = vdwg.mxu0
    %v381 = vsel %vm333, %v330, 0
    %v384 = vsel %vm333, %v332, 0
    %386 = vmatprep.subr.bf16.mxu0 0
    %387 = vmatpush1.bf16.xpose.msra.mxu0 %v384
    %388 = vmatprep.subr.bf16.mxu0 0
    %389 = vmatpush1.bf16.xpose.msra.mxu0 0
    %390 = vmatprep.subr.bf16.mxu0 0
    %391 = vmatpush1.bf16.xpose.msra.mxu0 0
    %392 = vmatprep.subr.bf16.mxu0 0
    %393 = vmatpush1.bf16.xpose.msra.mxu0 0
    %394 = vmatprep.subr.bf16.mxu0 0
    %395 = vmatpush1.bf16.xpose.msra.mxu0 0
    %396 = vmatprep.subr.bf16.mxu0 0
    %397 = vmatpush1.bf16.xpose.msra.mxu0 0
    %398 = vmatprep.subr.bf16.mxu0 0
    %399 = vmatpush1.bf16.xpose.msra.mxu0 0
    %400 = vmatprep.subr.bf16.mxu0 0
    %401 = vmatpush1.bf16.xpose.msra.mxu0 0
    %402 = vmatprep.subr.bf16.mxu0 0
    %403 = vmatpush1.bf16.xpose.msra.mxu0 0
    %404 = vmatprep.subr.bf16.mxu0 0
    %405 = vmatpush1.bf16.xpose.msra.mxu0 0
    %406 = vmatprep.subr.bf16.mxu0 0
    %407 = vmatpush1.bf16.xpose.msra.mxu0 0
    %408 = vmatprep.subr.bf16.mxu0 0
    %409 = vmatpush1.bf16.xpose.msra.mxu0 0
    %410 = vmatprep.subr.bf16.mxu0 0
    %411 = vmatpush1.bf16.xpose.msra.mxu0 0
    %412 = vmatprep.subr.bf16.mxu0 0
    %413 = vmatpush1.bf16.xpose.msra.mxu0 0
    %414 = vmatprep.subr.bf16.mxu0 0
    %415 = vmatpush1.bf16.xpose.msra.mxu0 0
    %416 = vmatprep.subr.bf16.mxu0 0
    %417 = vmatpush1.bf16.xpose.msra.mxu0 0
    %418 = vmatprep.mubr.bf16.mxu0 0
    %419 = vmatmul.mubr.bf16.gmra.mrb[0].mxu0 %v381
    %v420 = vpop.f32.mrb[0].mxu0
    %v421 = vadd.f32 0.0, %v420
    %v422 = vpop.f32.mrb[0].mxu0
    %v423 = vpop.f32.mrb[0].mxu0
    %v424 = vpop.f32.mrb[0].mxu0
    %425 = vdwg.mxu0
    %v426 = vmul.f32 %v375, 0.35355338
    %v427 = vmul.f32 %v421, 0.35355338
    %v430 = vlaneseq
    %v431 = vshrl.u32 %v430, 7
    %v432 = vsub.s32 0, %v431
    %v433 = vrot.slane %v85, %v432
    %v434 = vlaneseq
    %v435 = vshrl.u32 %v434, 7
    %v436 = vsub.s32 0, %v435
    %v437 = vrot.slane %v86, %v436
    %v440 = vadd.f32 %v426, %v433
    %v441 = vadd.f32 %v427, %v437
    %v442 = vsel %vm333, %v440, -inf
    %443 = vmax.xlane.f32.xlu0 %v442
    %v444 = vpop.xlane.xlu0 %443
    %v445 = vsel %vm333, %v441, -inf
    %446 = vmax.xlane.f32.xlu0 %v445
    %v447 = vpop.xlane.xlu0 %446
    %v448 = vsub.f32 %v440, %v444
    %v449 = vsub.f32 %v441, %v447
    %v450 = vmul.f32 %v448, 1.442695
    %v451 = vpow.pop %v450
    %v452 = vmul.f32 %v449, 1.442695
    %v453 = vpow.pop %v452
    %v454 = vsel %vm333, %v451, 0.0
    %455 = vadd.xlane.f32.xlu0 %v454
    %v456 = vpop.xlane.xlu0 %455
    %v457 = vsel %vm333, %v453, 0.0
    %458 = vadd.xlane.f32.xlu0 %v457
    %v459 = vpop.xlane.xlu0 %458
    %v460 = vrcp.pop %v456
    %v461 = vrcp.pop %v459
    %v462 = vmul.f32 %v451, %v460
    %v463 = vmul.f32 %v453, %v461
    %v464 = vpack.c.bf16 %v462, %v462
    %v465 = vpack.c.bf16 %v463, %v463
    %v466 = vpack.c.bf16 %v323, %v323
    %v467 = vpack.c.bf16 %v326, %v326
    %v469 = vsel %vm333, %v464, 0
    %vm471 = vcmask 1043456
    %v473 = vsel %vm471, %v466, 0
    %475 = vmatprep.subr.bf16.mxu0 0
    %476 = vmatpush1.bf16.msra.mxu0 %v473
    %477 = vmatprep.subr.bf16.mxu0 0
    %478 = vmatpush1.bf16.msra.mxu0 0
    %479 = vmatprep.subr.bf16.mxu0 0
    %480 = vmatpush1.bf16.msra.mxu0 0
    %481 = vmatprep.subr.bf16.mxu0 0
    %482 = vmatpush1.bf16.msra.mxu0 0
    %483 = vmatprep.subr.bf16.mxu0 0
    %484 = vmatpush1.bf16.msra.mxu0 0
    %485 = vmatprep.subr.bf16.mxu0 0
    %486 = vmatpush1.bf16.msra.mxu0 0
    %487 = vmatprep.subr.bf16.mxu0 0
    %488 = vmatpush1.bf16.msra.mxu0 0
    %489 = vmatprep.subr.bf16.mxu0 0
    %490 = vmatpush1.bf16.msra.mxu0 0
    %491 = vmatprep.subr.bf16.mxu0 0
    %492 = vmatpush1.bf16.msra.mxu0 0
    %493 = vmatprep.subr.bf16.mxu0 0
    %494 = vmatpush1.bf16.msra.mxu0 0
    %495 = vmatprep.subr.bf16.mxu0 0
    %496 = vmatpush1.bf16.msra.mxu0 0
    %497 = vmatprep.subr.bf16.mxu0 0
    %498 = vmatpush1.bf16.msra.mxu0 0
    %499 = vmatprep.subr.bf16.mxu0 0
    %500 = vmatpush1.bf16.msra.mxu0 0
    %501 = vmatprep.subr.bf16.mxu0 0
    %502 = vmatpush1.bf16.msra.mxu0 0
    %503 = vmatprep.subr.bf16.mxu0 0
    %504 = vmatpush1.bf16.msra.mxu0 0
    %505 = vmatprep.subr.bf16.mxu0 0
    %506 = vmatpush1.bf16.msra.mxu0 0
    %507 = vmatprep.mubr.bf16.mxu0 0
    %508 = vmatmul.mubr.bf16.gmra.mrb[0].mxu0 %v469
    %v509 = vpop.f32.mrb[0].mxu0
    %v510 = vadd.f32 0.0, %v509
    %v511 = vpop.f32.mrb[0].mxu0
    %v512 = vpop.f32.mrb[0].mxu0
    %v513 = vpop.f32.mrb[0].mxu0
    %514 = vdwg.mxu0
    %v516 = vsel %vm333, %v465, 0
    %v519 = vsel %vm471, %v467, 0
    %521 = vmatprep.subr.bf16.mxu0 0
    %522 = vmatpush1.bf16.msra.mxu0 %v519
    %523 = vmatprep.subr.bf16.mxu0 0
    %524 = vmatpush1.bf16.msra.mxu0 0
    %525 = vmatprep.subr.bf16.mxu0 0
    %526 = vmatpush1.bf16.msra.mxu0 0
    %527 = vmatprep.subr.bf16.mxu0 0
    %528 = vmatpush1.bf16.msra.mxu0 0
    %529 = vmatprep.subr.bf16.mxu0 0
    %530 = vmatpush1.bf16.msra.mxu0 0
    %531 = vmatprep.subr.bf16.mxu0 0
    %532 = vmatpush1.bf16.msra.mxu0 0
    %533 = vmatprep.subr.bf16.mxu0 0
    %534 = vmatpush1.bf16.msra.mxu0 0
    %535 = vmatprep.subr.bf16.mxu0 0
    %536 = vmatpush1.bf16.msra.mxu0 0
    %537 = vmatprep.subr.bf16.mxu0 0
    %538 = vmatpush1.bf16.msra.mxu0 0
    %539 = vmatprep.subr.bf16.mxu0 0
    %540 = vmatpush1.bf16.msra.mxu0 0
    %541 = vmatprep.subr.bf16.mxu0 0
    %542 = vmatpush1.bf16.msra.mxu0 0
    %543 = vmatprep.subr.bf16.mxu0 0
    %544 = vmatpush1.bf16.msra.mxu0 0
    %545 = vmatprep.subr.bf16.mxu0 0
    %546 = vmatpush1.bf16.msra.mxu0 0
    %547 = vmatprep.subr.bf16.mxu0 0
    %548 = vmatpush1.bf16.msra.mxu0 0
    %549 = vmatprep.subr.bf16.mxu0 0
    %550 = vmatpush1.bf16.msra.mxu0 0
    %551 = vmatprep.subr.bf16.mxu0 0
    %552 = vmatpush1.bf16.msra.mxu0 0
    %553 = vmatprep.mubr.bf16.mxu0 0
    %554 = vmatmul.mubr.bf16.gmra.mrb[0].mxu0 %v516
    %v555 = vpop.f32.mrb[0].mxu0
    %v556 = vadd.f32 0.0, %v555
    %v557 = vpop.f32.mrb[0].mxu0
    %v558 = vpop.f32.mrb[0].mxu0
    %v559 = vpop.f32.mrb[0].mxu0
    %560 = vdwg.mxu0
    %v561 = vld [vmem:[%s10] sm:$0xf]
    %v562 = vpack.c.bf16 %v556, %v510
    %s563 = scalar_lea.vmem %s4, 16
    %v564 = vld [vmem:[%s563] sm:$0xf]
    %v565 = vld [vmem:[%s563 + $0x4] sm:$0xf]
    %v566 = vld [vmem:[%s563 + $0x8] sm:$0xf]
    %v567 = vld [vmem:[%s563 + $0xc] sm:$0xf]
    %s568 = scalar_lea.vmem %s5, 1
    %v569 = vld [vmem:[%s568] sm:$0x1]
    %v571 = vlaneseq
    %v572 = vshrl.u32 %v571, 7
    %v573 = vsub.s32 0, %v572
    %v574 = vrot.slane %v569, %v573
    %v580 = vunpack.c.l.b16 %v564
    %v581 = vunpack.c.l.b16 %v565
    %v582 = vunpack.c.l.b16 %v566
    %v583 = vunpack.c.l.b16 %v567
    %v584 = vpack.c.b16 %v581, %v580
    %v585 = vpack.c.b16 %v583, %v582
    %588 = vmatprep.subr.bf16.mxu0 0
    %589 = vmatpush1.bf16.msra.mxu0 %v584
    %590 = vmatprep.subr.bf16.mxu0 0
    %591 = vmatpush1.bf16.msra.mxu0 %v585
    %592 = vmatprep.subr.bf16.mxu0 0
    %593 = vmatpush1.bf16.msra.mxu0 0
    %594 = vmatprep.subr.bf16.mxu0 0
    %595 = vmatpush1.bf16.msra.mxu0 0
    %596 = vmatprep.subr.bf16.mxu0 0
    %597 = vmatpush1.bf16.msra.mxu0 0
    %598 = vmatprep.subr.bf16.mxu0 0
    %599 = vmatpush1.bf16.msra.mxu0 0
    %600 = vmatprep.subr.bf16.mxu0 0
    %601 = vmatpush1.bf16.msra.mxu0 0
    %602 = vmatprep.subr.bf16.mxu0 0
    %603 = vmatpush1.bf16.msra.mxu0 0
    %604 = vmatprep.subr.bf16.mxu0 0
    %605 = vmatpush1.bf16.msra.mxu0 0
    %606 = vmatprep.subr.bf16.mxu0 0
    %607 = vmatpush1.bf16.msra.mxu0 0
    %608 = vmatprep.subr.bf16.mxu0 0
    %609 = vmatpush1.bf16.msra.mxu0 0
    %610 = vmatprep.subr.bf16.mxu0 0
    %611 = vmatpush1.bf16.msra.mxu0 0
    %612 = vmatprep.subr.bf16.mxu0 0
    %613 = vmatpush1.bf16.msra.mxu0 0
    %614 = vmatprep.subr.bf16.mxu0 0
    %615 = vmatpush1.bf16.msra.mxu0 0
    %616 = vmatprep.subr.bf16.mxu0 0
    %617 = vmatpush1.bf16.msra.mxu0 0
    %618 = vmatprep.subr.bf16.mxu0 0
    %619 = vmatpush1.bf16.msra.mxu0 0
    %620 = vmatprep.mubr.bf16.mxu0 0
    %621 = vmatmul.mubr.bf16.gmra.mrb[0].mxu0 %v158
    %v622 = vpop.f32.mrb[0].mxu0
    %v623 = vadd.f32 %v574, %v622
    %v624 = vpop.f32.mrb[0].mxu0
    %v625 = vpop.f32.mrb[0].mxu0
    %v626 = vadd.f32 %v574, %v625
    %v627 = vpop.f32.mrb[0].mxu0
    %628 = vdwg.mxu0
    %s629 = scalar_lea.vmem %s6, 16
    %v630 = vld [vmem:[%s629] sm:$0xf]
    %v631 = vld [vmem:[%s629 + $0x4] sm:$0xf]
    %v632 = vld [vmem:[%s629 + $0x8] sm:$0xf]
    %v633 = vld [vmem:[%s629 + $0xc] sm:$0xf]
    %s634 = scalar_lea.vmem %s7, 1
    %v635 = vld [vmem:[%s634] sm:$0x1]
    %v637 = vlaneseq
    %v638 = vshrl.u32 %v637, 7
    %v639 = vsub.s32 0, %v638
    %v640 = vrot.slane %v635, %v639
    %v646 = vunpack.c.l.b16 %v630
    %v647 = vunpack.c.l.b16 %v631
    %v648 = vunpack.c.l.b16 %v632
    %v649 = vunpack.c.l.b16 %v633
    %v650 = vpack.c.b16 %v647, %v646
    %v651 = vpack.c.b16 %v649, %v648
    %654 = vmatprep.subr.bf16.mxu0 0
    %655 = vmatpush1.bf16.msra.mxu0 %v650
    %656 = vmatprep.subr.bf16.mxu0 0
    %657 = vmatpush1.bf16.msra.mxu0 %v651
    %658 = vmatprep.subr.bf16.mxu0 0
    %659 = vmatpush1.bf16.msra.mxu0 0
    %660 = vmatprep.subr.bf16.mxu0 0
    %661 = vmatpush1.bf16.msra.mxu0 0
    %662 = vmatprep.subr.bf16.mxu0 0
    %663 = vmatpush1.bf16.msra.mxu0 0
    %664 = vmatprep.subr.bf16.mxu0 0
    %665 = vmatpush1.bf16.msra.mxu0 0
    %666 = vmatprep.subr.bf16.mxu0 0
    %667 = vmatpush1.bf16.msra.mxu0 0
    %668 = vmatprep.subr.bf16.mxu0 0
    %669 = vmatpush1.bf16.msra.mxu0 0
    %670 = vmatprep.subr.bf16.mxu0 0
    %671 = vmatpush1.bf16.msra.mxu0 0
    %672 = vmatprep.subr.bf16.mxu0 0
    %673 = vmatpush1.bf16.msra.mxu0 0
    %674 = vmatprep.subr.bf16.mxu0 0
    %675 = vmatpush1.bf16.msra.mxu0 0
    %676 = vmatprep.subr.bf16.mxu0 0
    %677 = vmatpush1.bf16.msra.mxu0 0
    %678 = vmatprep.subr.bf16.mxu0 0
    %679 = vmatpush1.bf16.msra.mxu0 0
    %680 = vmatprep.subr.bf16.mxu0 0
    %681 = vmatpush1.bf16.msra.mxu0 0
    %682 = vmatprep.subr.bf16.mxu0 0
    %683 = vmatpush1.bf16.msra.mxu0 0
    %684 = vmatprep.subr.bf16.mxu0 0
    %685 = vmatpush1.bf16.msra.mxu0 0
    %686 = vmatprep.mubr.bf16.mxu0 0
    %687 = vmatmul.mubr.bf16.gmra.mrb[0].mxu0 %v158
    %v688 = vpop.f32.mrb[0].mxu0
    %v689 = vadd.f32 %v640, %v688
    %v690 = vpop.f32.mrb[0].mxu0
    %v691 = vpop.f32.mrb[0].mxu0
    %v692 = vadd.f32 %v640, %v691
    %v693 = vpop.f32.mrb[0].mxu0
    %694 = vdwg.mxu0
    %s695 = scalar_lea.vmem %s8, 16
    %v696 = vld [vmem:[%s695] sm:$0xf]
    %v697 = vld [vmem:[%s695 + $0x4] sm:$0xf]
    %v698 = vld [vmem:[%s695 + $0x8] sm:$0xf]
    %v699 = vld [vmem:[%s695 + $0xc] sm:$0xf]
    %s700 = scalar_lea.vmem %s9, 1
    %v701 = vld [vmem:[%s700] sm:$0x1]
    %v703 = vlaneseq
    %v704 = vshrl.u32 %v703, 7
    %v705 = vsub.s32 0, %v704
    %v706 = vrot.slane %v701, %v705
    %v712 = vunpack.c.l.b16 %v696
    %v713 = vunpack.c.l.b16 %v697
    %v714 = vunpack.c.l.b16 %v698
    %v715 = vunpack.c.l.b16 %v699
    %v716 = vpack.c.b16 %v713, %v712
    %v717 = vpack.c.b16 %v715, %v714
    %720 = vmatprep.subr.bf16.mxu0 0
    %721 = vmatpush1.bf16.msra.mxu0 %v716
    %722 = vmatprep.subr.bf16.mxu0 0
    %723 = vmatpush1.bf16.msra.mxu0 %v717
    %724 = vmatprep.subr.bf16.mxu0 0
    %725 = vmatpush1.bf16.msra.mxu0 0
    %726 = vmatprep.subr.bf16.mxu0 0
    %727 = vmatpush1.bf16.msra.mxu0 0
    %728 = vmatprep.subr.bf16.mxu0 0
    %729 = vmatpush1.bf16.msra.mxu0 0
    %730 = vmatprep.subr.bf16.mxu0 0
    %731 = vmatpush1.bf16.msra.mxu0 0
    %732 = vmatprep.subr.bf16.mxu0 0
    %733 = vmatpush1.bf16.msra.mxu0 0
    %734 = vmatprep.subr.bf16.mxu0 0
    %735 = vmatpush1.bf16.msra.mxu0 0
    %736 = vmatprep.subr.bf16.mxu0 0
    %737 = vmatpush1.bf16.msra.mxu0 0
    %738 = vmatprep.subr.bf16.mxu0 0
    %739 = vmatpush1.bf16.msra.mxu0 0
    %740 = vmatprep.subr.bf16.mxu0 0
    %741 = vmatpush1.bf16.msra.mxu0 0
    %742 = vmatprep.subr.bf16.mxu0 0
    %743 = vmatpush1.bf16.msra.mxu0 0
    %744 = vmatprep.subr.bf16.mxu0 0
    %745 = vmatpush1.bf16.msra.mxu0 0
    %746 = vmatprep.subr.bf16.mxu0 0
    %747 = vmatpush1.bf16.msra.mxu0 0
    %748 = vmatprep.subr.bf16.mxu0 0
    %749 = vmatpush1.bf16.msra.mxu0 0
    %750 = vmatprep.subr.bf16.mxu0 0
    %751 = vmatpush1.bf16.msra.mxu0 0
    %752 = vmatprep.mubr.bf16.mxu0 0
    %753 = vmatmul.mubr.bf16.gmra.mrb[0].mxu0 %v158
    %v754 = vpop.f32.mrb[0].mxu0
    %v755 = vadd.f32 %v706, %v754
    %v756 = vpop.f32.mrb[0].mxu0
    %v757 = vpop.f32.mrb[0].mxu0
    %v758 = vadd.f32 %v706, %v757
    %v759 = vpop.f32.mrb[0].mxu0
    %760 = vdwg.mxu0
    %v761 = vpack.c.bf16 %v623, %v623
    %v762 = vpack.c.bf16 %v626, %v626
    %v763 = vpack.c.bf16 %v689, %v689
    %v764 = vpack.c.bf16 %v692, %v692
    %v766 = vsel %vm333, %v761, 0
    %v769 = vsel %vm333, %v763, 0
    %771 = vmatprep.subr.bf16.mxu0 0
    %772 = vmatpush1.bf16.xpose.msra.mxu0 %v769
    %773 = vmatprep.subr.bf16.mxu0 0
    %774 = vmatpush1.bf16.xpose.msra.mxu0 0
    %775 = vmatprep.subr.bf16.mxu0 0
    %776 = vmatpush1.bf16.xpose.msra.mxu0 0
    %777 = vmatprep.subr.bf16.mxu0 0
    %778 = vmatpush1.bf16.xpose.msra.mxu0 0
    %779 = vmatprep.subr.bf16.mxu0 0
    %780 = vmatpush1.bf16.xpose.msra.mxu0 0
    %781 = vmatprep.subr.bf16.mxu0 0
    %782 = vmatpush1.bf16.xpose.msra.mxu0 0
    %783 = vmatprep.subr.bf16.mxu0 0
    %784 = vmatpush1.bf16.xpose.msra.mxu0 0
    %785 = vmatprep.subr.bf16.mxu0 0
    %786 = vmatpush1.bf16.xpose.msra.mxu0 0
    %787 = vmatprep.subr.bf16.mxu0 0
    %788 = vmatpush1.bf16.xpose.msra.mxu0 0
    %789 = vmatprep.subr.bf16.mxu0 0
    %790 = vmatpush1.bf16.xpose.msra.mxu0 0
    %791 = vmatprep.subr.bf16.mxu0 0
    %792 = vmatpush1.bf16.xpose.msra.mxu0 0
    %793 = vmatprep.subr.bf16.mxu0 0
    %794 = vmatpush1.bf16.xpose.msra.mxu0 0
    %795 = vmatprep.subr.bf16.mxu0 0
    %796 = vmatpush1.bf16.xpose.msra.mxu0 0
    %797 = vmatprep.subr.bf16.mxu0 0
    %798 = vmatpush1.bf16.xpose.msra.mxu0 0
    %799 = vmatprep.subr.bf16.mxu0 0
    %800 = vmatpush1.bf16.xpose.msra.mxu0 0
    %801 = vmatprep.subr.bf16.mxu0 0
    %802 = vmatpush1.bf16.xpose.msra.mxu0 0
    %803 = vmatprep.mubr.bf16.mxu0 0
    %804 = vmatmul.mubr.bf16.gmra.mrb[0].mxu0 %v766
    %v805 = vpop.f32.mrb[0].mxu0
    %v806 = vadd.f32 0.0, %v805
    %v807 = vpop.f32.mrb[0].mxu0
    %v808 = vpop.f32.mrb[0].mxu0
    %v809 = vpop.f32.mrb[0].mxu0
    %810 = vdwg.mxu0
    %v812 = vsel %vm333, %v762, 0
    %v815 = vsel %vm333, %v764, 0
    %817 = vmatprep.subr.bf16.mxu0 0
    %818 = vmatpush1.bf16.xpose.msra.mxu0 %v815
    %819 = vmatprep.subr.bf16.mxu0 0
    %820 = vmatpush1.bf16.xpose.msra.mxu0 0
    %821 = vmatprep.subr.bf16.mxu0 0
    %822 = vmatpush1.bf16.xpose.msra.mxu0 0
    %823 = vmatprep.subr.bf16.mxu0 0
    %824 = vmatpush1.bf16.xpose.msra.mxu0 0
    %825 = vmatprep.subr.bf16.mxu0 0
    %826 = vmatpush1.bf16.xpose.msra.mxu0 0
    %827 = vmatprep.subr.bf16.mxu0 0
    %828 = vmatpush1.bf16.xpose.msra.mxu0 0
    %829 = vmatprep.subr.bf16.mxu0 0
    %830 = vmatpush1.bf16.xpose.msra.mxu0 0
    %831 = vmatprep.subr.bf16.mxu0 0
    %832 = vmatpush1.bf16.xpose.msra.mxu0 0
    %833 = vmatprep.subr.bf16.mxu0 0
    %834 = vmatpush1.bf16.xpose.msra.mxu0 0
    %835 = vmatprep.subr.bf16.mxu0 0
    %836 = vmatpush1.bf16.xpose.msra.mxu0 0
    %837 = vmatprep.subr.bf16.mxu0 0
    %838 = vmatpush1.bf16.xpose.msra.mxu0 0
    %839 = vmatprep.subr.bf16.mxu0 0
    %840 = vmatpush1.bf16.xpose.msra.mxu0 0
    %841 = vmatprep.subr.bf16.mxu0 0
    %842 = vmatpush1.bf16.xpose.msra.mxu0 0
    %843 = vmatprep.subr.bf16.mxu0 0
    %844 = vmatpush1.bf16.xpose.msra.mxu0 0
    %845 = vmatprep.subr.bf16.mxu0 0
    %846 = vmatpush1.bf16.xpose.msra.mxu0 0
    %847 = vmatprep.subr.bf16.mxu0 0
    %848 = vmatpush1.bf16.xpose.msra.mxu0 0
    %849 = vmatprep.mubr.bf16.mxu0 0
    %850 = vmatmul.mubr.bf16.gmra.mrb[0].mxu0 %v812
    %v851 = vpop.f32.mrb[0].mxu0
    %v852 = vadd.f32 0.0, %v851
    %v853 = vpop.f32.mrb[0].mxu0
    %v854 = vpop.f32.mrb[0].mxu0
    %v855 = vpop.f32.mrb[0].mxu0
    %856 = vdwg.mxu0
    %v857 = vmul.f32 %v806, 0.35355338
    %v858 = vmul.f32 %v852, 0.35355338
    %v859 = vadd.f32 %v857, %v433
    %v860 = vadd.f32 %v858, %v437
    %v861 = vsel %vm333, %v859, -inf
    %862 = vmax.xlane.f32.xlu0 %v861
    %v863 = vpop.xlane.xlu0 %862
    %v864 = vsel %vm333, %v860, -inf
    %865 = vmax.xlane.f32.xlu0 %v864
    %v866 = vpop.xlane.xlu0 %865
    %v867 = vsub.f32 %v859, %v863
    %v868 = vsub.f32 %v860, %v866
    %v869 = vmul.f32 %v867, 1.442695
    %v870 = vpow.pop %v869
    %v871 = vmul.f32 %v868, 1.442695
    %v872 = vpow.pop %v871
    %v873 = vsel %vm333, %v870, 0.0
    %874 = vadd.xlane.f32.xlu0 %v873
    %v875 = vpop.xlane.xlu0 %874
    %v876 = vsel %vm333, %v872, 0.0
    %877 = vadd.xlane.f32.xlu0 %v876
    %v878 = vpop.xlane.xlu0 %877
    %v879 = vrcp.pop %v875
    %v880 = vrcp.pop %v878
    %v881 = vmul.f32 %v870, %v879
    %v882 = vmul.f32 %v872, %v880
    %v883 = vpack.c.bf16 %v881, %v881
    %v884 = vpack.c.bf16 %v882, %v882
    %v885 = vpack.c.bf16 %v755, %v755
    %v886 = vpack.c.bf16 %v758, %v758
    %v888 = vsel %vm333, %v883, 0
    %v891 = vsel %vm471, %v885, 0
    %893 = vmatprep.subr.bf16.mxu0 0
    %894 = vmatpush1.bf16.msra.mxu0 %v891
    %895 = vmatprep.subr.bf16.mxu0 0
    %896 = vmatpush1.bf16.msra.mxu0 0
    %897 = vmatprep.subr.bf16.mxu0 0
    %898 = vmatpush1.bf16.msra.mxu0 0
    %899 = vmatprep.subr.bf16.mxu0 0
    %900 = vmatpush1.bf16.msra.mxu0 0
    %901 = vmatprep.subr.bf16.mxu0 0
    %902 = vmatpush1.bf16.msra.mxu0 0
    %903 = vmatprep.subr.bf16.mxu0 0
    %904 = vmatpush1.bf16.msra.mxu0 0
    %905 = vmatprep.subr.bf16.mxu0 0
    %906 = vmatpush1.bf16.msra.mxu0 0
    %907 = vmatprep.subr.bf16.mxu0 0
    %908 = vmatpush1.bf16.msra.mxu0 0
    %909 = vmatprep.subr.bf16.mxu0 0
    %910 = vmatpush1.bf16.msra.mxu0 0
    %911 = vmatprep.subr.bf16.mxu0 0
    %912 = vmatpush1.bf16.msra.mxu0 0
    %913 = vmatprep.subr.bf16.mxu0 0
    %914 = vmatpush1.bf16.msra.mxu0 0
    %915 = vmatprep.subr.bf16.mxu0 0
    %916 = vmatpush1.bf16.msra.mxu0 0
    %917 = vmatprep.subr.bf16.mxu0 0
    %918 = vmatpush1.bf16.msra.mxu0 0
    %919 = vmatprep.subr.bf16.mxu0 0
    %920 = vmatpush1.bf16.msra.mxu0 0
    %921 = vmatprep.subr.bf16.mxu0 0
    %922 = vmatpush1.bf16.msra.mxu0 0
    %923 = vmatprep.subr.bf16.mxu0 0
    %924 = vmatpush1.bf16.msra.mxu0 0
    %925 = vmatprep.mubr.bf16.mxu0 0
    %926 = vmatmul.mubr.bf16.gmra.mrb[0].mxu0 %v888
    %v927 = vpop.f32.mrb[0].mxu0
    %v928 = vadd.f32 0.0, %v927
    %v929 = vpop.f32.mrb[0].mxu0
    %v930 = vpop.f32.mrb[0].mxu0
    %v931 = vpop.f32.mrb[0].mxu0
    %932 = vdwg.mxu0
    %v934 = vsel %vm333, %v884, 0
    %v937 = vsel %vm471, %v886, 0
    %939 = vmatprep.subr.bf16.mxu0 0
    %940 = vmatpush1.bf16.msra.mxu0 %v937
    %941 = vmatprep.subr.bf16.mxu0 0
    %942 = vmatpush1.bf16.msra.mxu0 0
    %943 = vmatprep.subr.bf16.mxu0 0
    %944 = vmatpush1.bf16.msra.mxu0 0
    %945 = vmatprep.subr.bf16.mxu0 0
    %946 = vmatpush1.bf16.msra.mxu0 0
    %947 = vmatprep.subr.bf16.mxu0 0
    %948 = vmatpush1.bf16.msra.mxu0 0
    %949 = vmatprep.subr.bf16.mxu0 0
    %950 = vmatpush1.bf16.msra.mxu0 0
    %951 = vmatprep.subr.bf16.mxu0 0
    %952 = vmatpush1.bf16.msra.mxu0 0
    %953 = vmatprep.subr.bf16.mxu0 0
    %954 = vmatpush1.bf16.msra.mxu0 0
    %955 = vmatprep.subr.bf16.mxu0 0
    %956 = vmatpush1.bf16.msra.mxu0 0
    %957 = vmatprep.subr.bf16.mxu0 0
    %958 = vmatpush1.bf16.msra.mxu0 0
    %959 = vmatprep.subr.bf16.mxu0 0
    %960 = vmatpush1.bf16.msra.mxu0 0
    %961 = vmatprep.subr.bf16.mxu0 0
    %962 = vmatpush1.bf16.msra.mxu0 0
    %963 = vmatprep.subr.bf16.mxu0 0
    %964 = vmatpush1.bf16.msra.mxu0 0
    %965 = vmatprep.subr.bf16.mxu0 0
    %966 = vmatpush1.bf16.msra.mxu0 0
    %967 = vmatprep.subr.bf16.mxu0 0
    %968 = vmatpush1.bf16.msra.mxu0 0
    %969 = vmatprep.subr.bf16.mxu0 0
    %970 = vmatpush1.bf16.msra.mxu0 0
    %971 = vmatprep.mubr.bf16.mxu0 0
    %972 = vmatmul.mubr.bf16.gmra.mrb[0].mxu0 %v934
    %v973 = vpop.f32.mrb[0].mxu0
    %v974 = vadd.f32 0.0, %v973
    %v975 = vpop.f32.mrb[0].mxu0
    %v976 = vpop.f32.mrb[0].mxu0
    %v977 = vpop.f32.mrb[0].mxu0
    %978 = vdwg.mxu0
    %s979 = scalar_lea.vmem %s10, 4
    %v980 = vld [vmem:[%s979] sm:$0xf]
    %v981 = vpack.c.bf16 %v974, %v928
    %v983 = vsel %vm333, %v981, 0
    %v986 = vsel %vm471, %v980, 0
    %988 = vmatprep.subr.bf16.mxu0 0
    %989 = vmatpush1.bf16.msra.mxu0 %v986
    %990 = vmatprep.subr.bf16.mxu0 0
    %991 = vmatpush1.bf16.msra.mxu0 0
    %992 = vmatprep.subr.bf16.mxu0 0
    %993 = vmatpush1.bf16.msra.mxu0 0
    %994 = vmatprep.subr.bf16.mxu0 0
    %995 = vmatpush1.bf16.msra.mxu0 0
    %996 = vmatprep.subr.bf16.mxu0 0
    %997 = vmatpush1.bf16.msra.mxu0 0
    %998 = vmatprep.subr.bf16.mxu0 0
    %999 = vmatpush1.bf16.msra.mxu0 0
    %1000 = vmatprep.subr.bf16.mxu0 0
    %1001 = vmatpush1.bf16.msra.mxu0 0
    %1002 = vmatprep.subr.bf16.mxu0 0
    %1003 = vmatpush1.bf16.msra.mxu0 0
    %1004 = vmatprep.subr.bf16.mxu0 0
    %1005 = vmatpush1.bf16.msra.mxu0 0
    %1006 = vmatprep.subr.bf16.mxu0 0
    %1007 = vmatpush1.bf16.msra.mxu0 0
    %1008 = vmatprep.subr.bf16.mxu0 0
    %1009 = vmatpush1.bf16.msra.mxu0 0
    %1010 = vmatprep.subr.bf16.mxu0 0
    %1011 = vmatpush1.bf16.msra.mxu0 0
    %1012 = vmatprep.subr.bf16.mxu0 0
    %1013 = vmatpush1.bf16.msra.mxu0 0
    %1014 = vmatprep.subr.bf16.mxu0 0
    %1015 = vmatpush1.bf16.msra.mxu0 0
    %1016 = vmatprep.subr.bf16.mxu0 0
    %1017 = vmatpush1.bf16.msra.mxu0 0
    %1018 = vmatprep.subr.bf16.mxu0 0
    %1019 = vmatpush1.bf16.msra.mxu0 0
    %1020 = vmatprep.mubr.bf16.mxu0 0
    %1021 = vmatmul.mubr.bf16.gmra.mrb[0].mxu0 %v983
    %v1022 = vpop.f32.mrb[0].mxu0
    %v1023 = vadd.f32 0.0, %v1022
    %v1024 = vpop.f32.mrb[0].mxu0
    %v1025 = vpop.f32.mrb[0].mxu0
    %v1026 = vadd.f32 0.0, %v1025
    %v1027 = vpop.f32.mrb[0].mxu0
    %1028 = vdwg.mxu0
    %v1030 = vsel %vm333, %v562, 0
    %v1033 = vsel %vm471, %v561, 0
    %1035 = vmatprep.subr.bf16.mxu0 0
    %1036 = vmatpush1.bf16.msra.mxu0 %v1033
    %1037 = vmatprep.subr.bf16.mxu0 0
    %1038 = vmatpush1.bf16.msra.mxu0 0
    %1039 = vmatprep.subr.bf16.mxu0 0
    %1040 = vmatpush1.bf16.msra.mxu0 0
    %1041 = vmatprep.subr.bf16.mxu0 0
    %1042 = vmatpush1.bf16.msra.mxu0 0
    %1043 = vmatprep.subr.bf16.mxu0 0
    %1044 = vmatpush1.bf16.msra.mxu0 0
    %1045 = vmatprep.subr.bf16.mxu0 0
    %1046 = vmatpush1.bf16.msra.mxu0 0
    %1047 = vmatprep.subr.bf16.mxu0 0
    %1048 = vmatpush1.bf16.msra.mxu0 0
    %1049 = vmatprep.subr.bf16.mxu0 0
    %1050 = vmatpush1.bf16.msra.mxu0 0
    %1051 = vmatprep.subr.bf16.mxu0 0
    %1052 = vmatpush1.bf16.msra.mxu0 0
    %1053 = vmatprep.subr.bf16.mxu0 0
    %1054 = vmatpush1.bf16.msra.mxu0 0
    %1055 = vmatprep.subr.bf16.mxu0 0
    %1056 = vmatpush1.bf16.msra.mxu0 0
    %1057 = vmatprep.subr.bf16.mxu0 0
    %1058 = vmatpush1.bf16.msra.mxu0 0
    %1059 = vmatprep.subr.bf16.mxu0 0
    %1060 = vmatpush1.bf16.msra.mxu0 0
    %1061 = vmatprep.subr.bf16.mxu0 0
    %1062 = vmatpush1.bf16.msra.mxu0 0
    %1063 = vmatprep.subr.bf16.mxu0 0
    %1064 = vmatpush1.bf16.msra.mxu0 0
    %1065 = vmatprep.subr.bf16.mxu0 0
    %1066 = vmatpush1.bf16.msra.mxu0 0
    %1067 = vmatprep.mubr.bf16.mxu0 0
    %1068 = vmatmul.mubr.bf16.gmra.mrb[0].mxu0 %v1030
    %v1069 = vpop.f32.mrb[0].mxu0
    %v1070 = vadd.f32 %v1023, %v1069
    %v1071 = vpop.f32.mrb[0].mxu0
    %v1072 = vpop.f32.mrb[0].mxu0
    %v1073 = vadd.f32 %v1026, %v1072
    %v1074 = vpop.f32.mrb[0].mxu0
    %1075 = vdwg.mxu0
    %s1076 = scalar_lea.vmem %s4, 32
    %v1077 = vld [vmem:[%s1076] sm:$0xf]
    %v1078 = vld [vmem:[%s1076 + $0x4] sm:$0xf]
    %v1079 = vld [vmem:[%s1076 + $0x8] sm:$0xf]
    %v1080 = vld [vmem:[%s1076 + $0xc] sm:$0xf]
    %s1081 = scalar_lea.vmem %s5, 2
    %v1082 = vld [vmem:[%s1081] sm:$0x1]
    %v1084 = vlaneseq
    %v1085 = vshrl.u32 %v1084, 7
    %v1086 = vsub.s32 0, %v1085
    %v1087 = vrot.slane %v1082, %v1086
    %v1093 = vunpack.c.l.b16 %v1077
    %v1094 = vunpack.c.l.b16 %v1078
    %v1095 = vunpack.c.l.b16 %v1079
    %v1096 = vunpack.c.l.b16 %v1080
    %v1097 = vpack.c.b16 %v1094, %v1093
    %v1098 = vpack.c.b16 %v1096, %v1095
    %1101 = vmatprep.subr.bf16.mxu0 0
    %1102 = vmatpush1.bf16.msra.mxu0 %v1097
    %1103 = vmatprep.subr.bf16.mxu0 0
    %1104 = vmatpush1.bf16.msra.mxu0 %v1098
    %1105 = vmatprep.subr.bf16.mxu0 0
    %1106 = vmatpush1.bf16.msra.mxu0 0
    %1107 = vmatprep.subr.bf16.mxu0 0
    %1108 = vmatpush1.bf16.msra.mxu0 0
    %1109 = vmatprep.subr.bf16.mxu0 0
    %1110 = vmatpush1.bf16.msra.mxu0 0
    %1111 = vmatprep.subr.bf16.mxu0 0
    %1112 = vmatpush1.bf16.msra.mxu0 0
    %1113 = vmatprep.subr.bf16.mxu0 0
    %1114 = vmatpush1.bf16.msra.mxu0 0
    %1115 = vmatprep.subr.bf16.mxu0 0
    %1116 = vmatpush1.bf16.msra.mxu0 0
    %1117 = vmatprep.subr.bf16.mxu0 0
    %1118 = vmatpush1.bf16.msra.mxu0 0
    %1119 = vmatprep.subr.bf16.mxu0 0
    %1120 = vmatpush1.bf16.msra.mxu0 0
    %1121 = vmatprep.subr.bf16.mxu0 0
    %1122 = vmatpush1.bf16.msra.mxu0 0
    %1123 = vmatprep.subr.bf16.mxu0 0
    %1124 = vmatpush1.bf16.msra.mxu0 0
    %1125 = vmatprep.subr.bf16.mxu0 0
    %1126 = vmatpush1.bf16.msra.mxu0 0
    %1127 = vmatprep.subr.bf16.mxu0 0
    %1128 = vmatpush1.bf16.msra.mxu0 0
    %1129 = vmatprep.subr.bf16.mxu0 0
    %1130 = vmatpush1.bf16.msra.mxu0 0
    %1131 = vmatprep.subr.bf16.mxu0 0
    %1132 = vmatpush1.bf16.msra.mxu0 0
    %1133 = vmatprep.mubr.bf16.mxu0 0
    %1134 = vmatmul.mubr.bf16.gmra.mrb[0].mxu0 %v158
    %v1135 = vpop.f32.mrb[0].mxu0
    %v1136 = vadd.f32 %v1087, %v1135
    %v1137 = vpop.f32.mrb[0].mxu0
    %v1138 = vpop.f32.mrb[0].mxu0
    %v1139 = vadd.f32 %v1087, %v1138
    %v1140 = vpop.f32.mrb[0].mxu0
    %1141 = vdwg.mxu0
    %s1142 = scalar_lea.vmem %s6, 32
    %v1143 = vld [vmem:[%s1142] sm:$0xf]
    %v1144 = vld [vmem:[%s1142 + $0x4] sm:$0xf]
    %v1145 = vld [vmem:[%s1142 + $0x8] sm:$0xf]
    %v1146 = vld [vmem:[%s1142 + $0xc] sm:$0xf]
    %s1147 = scalar_lea.vmem %s7, 2
    %v1148 = vld [vmem:[%s1147] sm:$0x1]
    %v1150 = vlaneseq
    %v1151 = vshrl.u32 %v1150, 7
    %v1152 = vsub.s32 0, %v1151
    %v1153 = vrot.slane %v1148, %v1152
    %v1159 = vunpack.c.l.b16 %v1143
    %v1160 = vunpack.c.l.b16 %v1144
    %v1161 = vunpack.c.l.b16 %v1145
    %v1162 = vunpack.c.l.b16 %v1146
    %v1163 = vpack.c.b16 %v1160, %v1159
    %v1164 = vpack.c.b16 %v1162, %v1161
    %1167 = vmatprep.subr.bf16.mxu0 0
    %1168 = vmatpush1.bf16.msra.mxu0 %v1163
    %1169 = vmatprep.subr.bf16.mxu0 0
    %1170 = vmatpush1.bf16.msra.mxu0 %v1164
    %1171 = vmatprep.subr.bf16.mxu0 0
    %1172 = vmatpush1.bf16.msra.mxu0 0
    %1173 = vmatprep.subr.bf16.mxu0 0
    %1174 = vmatpush1.bf16.msra.mxu0 0
    %1175 = vmatprep.subr.bf16.mxu0 0
    %1176 = vmatpush1.bf16.msra.mxu0 0
    %1177 = vmatprep.subr.bf16.mxu0 0
    %1178 = vmatpush1.bf16.msra.mxu0 0
    %1179 = vmatprep.subr.bf16.mxu0 0
    %1180 = vmatpush1.bf16.msra.mxu0 0
    %1181 = vmatprep.subr.bf16.mxu0 0
    %1182 = vmatpush1.bf16.msra.mxu0 0
    %1183 = vmatprep.subr.bf16.mxu0 0
    %1184 = vmatpush1.bf16.msra.mxu0 0
    %1185 = vmatprep.subr.bf16.mxu0 0
    %1186 = vmatpush1.bf16.msra.mxu0 0
    %1187 = vmatprep.subr.bf16.mxu0 0
    %1188 = vmatpush1.bf16.msra.mxu0 0
    %1189 = vmatprep.subr.bf16.mxu0 0
    %1190 = vmatpush1.bf16.msra.mxu0 0
    %1191 = vmatprep.subr.bf16.mxu0 0
    %1192 = vmatpush1.bf16.msra.mxu0 0
    %1193 = vmatprep.subr.bf16.mxu0 0
    %1194 = vmatpush1.bf16.msra.mxu0 0
    %1195 = vmatprep.subr.bf16.mxu0 0
    %1196 = vmatpush1.bf16.msra.mxu0 0
    %1197 = vmatprep.subr.bf16.mxu0 0
    %1198 = vmatpush1.bf16.msra.mxu0 0
    %1199 = vmatprep.mubr.bf16.mxu0 0
    %1200 = vmatmul.mubr.bf16.gmra.mrb[0].mxu0 %v158
    %v1201 = vpop.f32.mrb[0].mxu0
    %v1202 = vadd.f32 %v1153, %v1201
    %v1203 = vpop.f32.mrb[0].mxu0
    %v1204 = vpop.f32.mrb[0].mxu0
    %v1205 = vadd.f32 %v1153, %v1204
    %v1206 = vpop.f32.mrb[0].mxu0
    %1207 = vdwg.mxu0
    %s1208 = scalar_lea.vmem %s8, 32
    %v1209 = vld [vmem:[%s1208] sm:$0xf]
    %v1210 = vld [vmem:[%s1208 + $0x4] sm:$0xf]
    %v1211 = vld [vmem:[%s1208 + $0x8] sm:$0xf]
    %v1212 = vld [vmem:[%s1208 + $0xc] sm:$0xf]
    %s1213 = scalar_lea.vmem %s9, 2
    %v1214 = vld [vmem:[%s1213] sm:$0x1]
    %v1216 = vlaneseq
    %v1217 = vshrl.u32 %v1216, 7
    %v1218 = vsub.s32 0, %v1217
    %v1219 = vrot.slane %v1214, %v1218
    %v1225 = vunpack.c.l.b16 %v1209
    %v1226 = vunpack.c.l.b16 %v1210
    %v1227 = vunpack.c.l.b16 %v1211
    %v1228 = vunpack.c.l.b16 %v1212
    %v1229 = vpack.c.b16 %v1226, %v1225
    %v1230 = vpack.c.b16 %v1228, %v1227
    %1233 = vmatprep.subr.bf16.mxu0 0
    %1234 = vmatpush1.bf16.msra.mxu0 %v1229
    %1235 = vmatprep.subr.bf16.mxu0 0
    %1236 = vmatpush1.bf16.msra.mxu0 %v1230
    %1237 = vmatprep.subr.bf16.mxu0 0
    %1238 = vmatpush1.bf16.msra.mxu0 0
    %1239 = vmatprep.subr.bf16.mxu0 0
    %1240 = vmatpush1.bf16.msra.mxu0 0
    %1241 = vmatprep.subr.bf16.mxu0 0
    %1242 = vmatpush1.bf16.msra.mxu0 0
    %1243 = vmatprep.subr.bf16.mxu0 0
    %1244 = vmatpush1.bf16.msra.mxu0 0
    %1245 = vmatprep.subr.bf16.mxu0 0
    %1246 = vmatpush1.bf16.msra.mxu0 0
    %1247 = vmatprep.subr.bf16.mxu0 0
    %1248 = vmatpush1.bf16.msra.mxu0 0
    %1249 = vmatprep.subr.bf16.mxu0 0
    %1250 = vmatpush1.bf16.msra.mxu0 0
    %1251 = vmatprep.subr.bf16.mxu0 0
    %1252 = vmatpush1.bf16.msra.mxu0 0
    %1253 = vmatprep.subr.bf16.mxu0 0
    %1254 = vmatpush1.bf16.msra.mxu0 0
    %1255 = vmatprep.subr.bf16.mxu0 0
    %1256 = vmatpush1.bf16.msra.mxu0 0
    %1257 = vmatprep.subr.bf16.mxu0 0
    %1258 = vmatpush1.bf16.msra.mxu0 0
    %1259 = vmatprep.subr.bf16.mxu0 0
    %1260 = vmatpush1.bf16.msra.mxu0 0
    %1261 = vmatprep.subr.bf16.mxu0 0
    %1262 = vmatpush1.bf16.msra.mxu0 0
    %1263 = vmatprep.subr.bf16.mxu0 0
    %1264 = vmatpush1.bf16.msra.mxu0 0
    %1265 = vmatprep.mubr.bf16.mxu0 0
    %1266 = vmatmul.mubr.bf16.gmra.mrb[0].mxu0 %v158
    %v1267 = vpop.f32.mrb[0].mxu0
    %v1268 = vadd.f32 %v1219, %v1267
    %v1269 = vpop.f32.mrb[0].mxu0
    %v1270 = vpop.f32.mrb[0].mxu0
    %v1271 = vadd.f32 %v1219, %v1270
    %v1272 = vpop.f32.mrb[0].mxu0
    %1273 = vdwg.mxu0
    %v1274 = vpack.c.bf16 %v1136, %v1136
    %v1275 = vpack.c.bf16 %v1139, %v1139
    %v1276 = vpack.c.bf16 %v1202, %v1202
    %v1277 = vpack.c.bf16 %v1205, %v1205
    %v1279 = vsel %vm333, %v1274, 0
    %v1282 = vsel %vm333, %v1276, 0
    %1284 = vmatprep.subr.bf16.mxu0 0
    %1285 = vmatpush1.bf16.xpose.msra.mxu0 %v1282
    %1286 = vmatprep.subr.bf16.mxu0 0
    %1287 = vmatpush1.bf16.xpose.msra.mxu0 0
    %1288 = vmatprep.subr.bf16.mxu0 0
    %1289 = vmatpush1.bf16.xpose.msra.mxu0 0
    %1290 = vmatprep.subr.bf16.mxu0 0
    %1291 = vmatpush1.bf16.xpose.msra.mxu0 0
    %1292 = vmatprep.subr.bf16.mxu0 0
    %1293 = vmatpush1.bf16.xpose.msra.mxu0 0
    %1294 = vmatprep.subr.bf16.mxu0 0
    %1295 = vmatpush1.bf16.xpose.msra.mxu0 0
    %1296 = vmatprep.subr.bf16.mxu0 0
    %1297 = vmatpush1.bf16.xpose.msra.mxu0 0
    %1298 = vmatprep.subr.bf16.mxu0 0
    %1299 = vmatpush1.bf16.xpose.msra.mxu0 0
    %1300 = vmatprep.subr.bf16.mxu0 0
    %1301 = vmatpush1.bf16.xpose.msra.mxu0 0
    %1302 = vmatprep.subr.bf16.mxu0 0
    %1303 = vmatpush1.bf16.xpose.msra.mxu0 0
    %1304 = vmatprep.subr.bf16.mxu0 0
    %1305 = vmatpush1.bf16.xpose.msra.mxu0 0
    %1306 = vmatprep.subr.bf16.mxu0 0
    %1307 = vmatpush1.bf16.xpose.msra.mxu0 0
    %1308 = vmatprep.subr.bf16.mxu0 0
    %1309 = vmatpush1.bf16.xpose.msra.mxu0 0
    %1310 = vmatprep.subr.bf16.mxu0 0
    %1311 = vmatpush1.bf16.xpose.msra.mxu0 0
    %1312 = vmatprep.subr.bf16.mxu0 0
    %1313 = vmatpush1.bf16.xpose.msra.mxu0 0
    %1314 = vmatprep.subr.bf16.mxu0 0
    %1315 = vmatpush1.bf16.xpose.msra.mxu0 0
    %1316 = vmatprep.mubr.bf16.mxu0 0
    %1317 = vmatmul.mubr.bf16.gmra.mrb[0].mxu0 %v1279
    %v1318 = vpop.f32.mrb[0].mxu0
    %v1319 = vadd.f32 0.0, %v1318
    %v1320 = vpop.f32.mrb[0].mxu0
    %v1321 = vpop.f32.mrb[0].mxu0
    %v1322 = vpop.f32.mrb[0].mxu0
    %1323 = vdwg.mxu0
    %v1325 = vsel %vm333, %v1275, 0
    %v1328 = vsel %vm333, %v1277, 0
    %1330 = vmatprep.subr.bf16.mxu0 0
    %1331 = vmatpush1.bf16.xpose.msra.mxu0 %v1328
    %1332 = vmatprep.subr.bf16.mxu0 0
    %1333 = vmatpush1.bf16.xpose.msra.mxu0 0
    %1334 = vmatprep.subr.bf16.mxu0 0
    %1335 = vmatpush1.bf16.xpose.msra.mxu0 0
    %1336 = vmatprep.subr.bf16.mxu0 0
    %1337 = vmatpush1.bf16.xpose.msra.mxu0 0
    %1338 = vmatprep.subr.bf16.mxu0 0
    %1339 = vmatpush1.bf16.xpose.msra.mxu0 0
    %1340 = vmatprep.subr.bf16.mxu0 0
    %1341 = vmatpush1.bf16.xpose.msra.mxu0 0
    %1342 = vmatprep.subr.bf16.mxu0 0
    %1343 = vmatpush1.bf16.xpose.msra.mxu0 0
    %1344 = vmatprep.subr.bf16.mxu0 0
    %1345 = vmatpush1.bf16.xpose.msra.mxu0 0
    %1346 = vmatprep.subr.bf16.mxu0 0
    %1347 = vmatpush1.bf16.xpose.msra.mxu0 0
    %1348 = vmatprep.subr.bf16.mxu0 0
    %1349 = vmatpush1.bf16.xpose.msra.mxu0 0
    %1350 = vmatprep.subr.bf16.mxu0 0
    %1351 = vmatpush1.bf16.xpose.msra.mxu0 0
    %1352 = vmatprep.subr.bf16.mxu0 0
    %1353 = vmatpush1.bf16.xpose.msra.mxu0 0
    %1354 = vmatprep.subr.bf16.mxu0 0
    %1355 = vmatpush1.bf16.xpose.msra.mxu0 0
    %1356 = vmatprep.subr.bf16.mxu0 0
    %1357 = vmatpush1.bf16.xpose.msra.mxu0 0
    %1358 = vmatprep.subr.bf16.mxu0 0
    %1359 = vmatpush1.bf16.xpose.msra.mxu0 0
    %1360 = vmatprep.subr.bf16.mxu0 0
    %1361 = vmatpush1.bf16.xpose.msra.mxu0 0
    %1362 = vmatprep.mubr.bf16.mxu0 0
    %1363 = vmatmul.mubr.bf16.gmra.mrb[0].mxu0 %v1325
    %v1364 = vpop.f32.mrb[0].mxu0
    %v1365 = vadd.f32 0.0, %v1364
    %v1366 = vpop.f32.mrb[0].mxu0
    %v1367 = vpop.f32.mrb[0].mxu0
    %v1368 = vpop.f32.mrb[0].mxu0
    %1369 = vdwg.mxu0
    %v1370 = vmul.f32 %v1319, 0.35355338
    %v1371 = vmul.f32 %v1365, 0.35355338
    %v1372 = vadd.f32 %v1370, %v433
    %v1373 = vadd.f32 %v1371, %v437
    %v1374 = vsel %vm333, %v1372, -inf
    %1375 = vmax.xlane.f32.xlu0 %v1374
    %v1376 = vpop.xlane.xlu0 %1375
    %v1377 = vsel %vm333, %v1373, -inf
    %1378 = vmax.xlane.f32.xlu0 %v1377
    %v1379 = vpop.xlane.xlu0 %1378
    %v1380 = vsub.f32 %v1372, %v1376
    %v1381 = vsub.f32 %v1373, %v1379
    %v1382 = vmul.f32 %v1380, 1.442695
    %v1383 = vpow.pop %v1382
    %v1384 = vmul.f32 %v1381, 1.442695
    %v1385 = vpow.pop %v1384
    %v1386 = vsel %vm333, %v1383, 0.0
    %1387 = vadd.xlane.f32.xlu0 %v1386
    %v1388 = vpop.xlane.xlu0 %1387
    %v1389 = vsel %vm333, %v1385, 0.0
    %1390 = vadd.xlane.f32.xlu0 %v1389
    %v1391 = vpop.xlane.xlu0 %1390
    %v1392 = vrcp.pop %v1388
    %v1393 = vrcp.pop %v1391
    %v1394 = vmul.f32 %v1383, %v1392
    %v1395 = vmul.f32 %v1385, %v1393
    %v1396 = vpack.c.bf16 %v1394, %v1394
    %v1397 = vpack.c.bf16 %v1395, %v1395
    %v1398 = vpack.c.bf16 %v1268, %v1268
    %v1399 = vpack.c.bf16 %v1271, %v1271
    %v1401 = vsel %vm333, %v1396, 0
    %v1404 = vsel %vm471, %v1398, 0
    %1406 = vmatprep.subr.bf16.mxu0 0
    %1407 = vmatpush1.bf16.msra.mxu0 %v1404
    %1408 = vmatprep.subr.bf16.mxu0 0
    %1409 = vmatpush1.bf16.msra.mxu0 0
    %1410 = vmatprep.subr.bf16.mxu0 0
    %1411 = vmatpush1.bf16.msra.mxu0 0
    %1412 = vmatprep.subr.bf16.mxu0 0
    %1413 = vmatpush1.bf16.msra.mxu0 0
    %1414 = vmatprep.subr.bf16.mxu0 0
    %1415 = vmatpush1.bf16.msra.mxu0 0
    %1416 = vmatprep.subr.bf16.mxu0 0
    %1417 = vmatpush1.bf16.msra.mxu0 0
    %1418 = vmatprep.subr.bf16.mxu0 0
    %1419 = vmatpush1.bf16.msra.mxu0 0
    %1420 = vmatprep.subr.bf16.mxu0 0
    %1421 = vmatpush1.bf16.msra.mxu0 0
    %1422 = vmatprep.subr.bf16.mxu0 0
    %1423 = vmatpush1.bf16.msra.mxu0 0
    %1424 = vmatprep.subr.bf16.mxu0 0
    %1425 = vmatpush1.bf16.msra.mxu0 0
    %1426 = vmatprep.subr.bf16.mxu0 0
    %1427 = vmatpush1.bf16.msra.mxu0 0
    %1428 = vmatprep.subr.bf16.mxu0 0
    %1429 = vmatpush1.bf16.msra.mxu0 0
    %1430 = vmatprep.subr.bf16.mxu0 0
    %1431 = vmatpush1.bf16.msra.mxu0 0
    %1432 = vmatprep.subr.bf16.mxu0 0
    %1433 = vmatpush1.bf16.msra.mxu0 0
    %1434 = vmatprep.subr.bf16.mxu0 0
    %1435 = vmatpush1.bf16.msra.mxu0 0
    %1436 = vmatprep.subr.bf16.mxu0 0
    %1437 = vmatpush1.bf16.msra.mxu0 0
    %1438 = vmatprep.mubr.bf16.mxu0 0
    %1439 = vmatmul.mubr.bf16.gmra.mrb[0].mxu0 %v1401
    %v1440 = vpop.f32.mrb[0].mxu0
    %v1441 = vadd.f32 0.0, %v1440
    %v1442 = vpop.f32.mrb[0].mxu0
    %v1443 = vpop.f32.mrb[0].mxu0
    %v1444 = vpop.f32.mrb[0].mxu0
    %1445 = vdwg.mxu0
    %v1447 = vsel %vm333, %v1397, 0
    %v1450 = vsel %vm471, %v1399, 0
    %1452 = vmatprep.subr.bf16.mxu0 0
    %1453 = vmatpush1.bf16.msra.mxu0 %v1450
    %1454 = vmatprep.subr.bf16.mxu0 0
    %1455 = vmatpush1.bf16.msra.mxu0 0
    %1456 = vmatprep.subr.bf16.mxu0 0
    %1457 = vmatpush1.bf16.msra.mxu0 0
    %1458 = vmatprep.subr.bf16.mxu0 0
    %1459 = vmatpush1.bf16.msra.mxu0 0
    %1460 = vmatprep.subr.bf16.mxu0 0
    %1461 = vmatpush1.bf16.msra.mxu0 0
    %1462 = vmatprep.subr.bf16.mxu0 0
    %1463 = vmatpush1.bf16.msra.mxu0 0
    %1464 = vmatprep.subr.bf16.mxu0 0
    %1465 = vmatpush1.bf16.msra.mxu0 0
    %1466 = vmatprep.subr.bf16.mxu0 0
    %1467 = vmatpush1.bf16.msra.mxu0 0
    %1468 = vmatprep.subr.bf16.mxu0 0
    %1469 = vmatpush1.bf16.msra.mxu0 0
    %1470 = vmatprep.subr.bf16.mxu0 0
    %1471 = vmatpush1.bf16.msra.mxu0 0
    %1472 = vmatprep.subr.bf16.mxu0 0
    %1473 = vmatpush1.bf16.msra.mxu0 0
    %1474 = vmatprep.subr.bf16.mxu0 0
    %1475 = vmatpush1.bf16.msra.mxu0 0
    %1476 = vmatprep.subr.bf16.mxu0 0
    %1477 = vmatpush1.bf16.msra.mxu0 0
    %1478 = vmatprep.subr.bf16.mxu0 0
    %1479 = vmatpush1.bf16.msra.mxu0 0
    %1480 = vmatprep.subr.bf16.mxu0 0
    %1481 = vmatpush1.bf16.msra.mxu0 0
    %1482 = vmatprep.subr.bf16.mxu0 0
    %1483 = vmatpush1.bf16.msra.mxu0 0
    %1484 = vmatprep.mubr.bf16.mxu0 0
    %1485 = vmatmul.mubr.bf16.gmra.mrb[0].mxu0 %v1447
    %v1486 = vpop.f32.mrb[0].mxu0
    %v1487 = vadd.f32 0.0, %v1486
    %v1488 = vpop.f32.mrb[0].mxu0
    %v1489 = vpop.f32.mrb[0].mxu0
    %v1490 = vpop.f32.mrb[0].mxu0
    %1491 = vdwg.mxu0
    %s1492 = scalar_lea.vmem %s10, 8
    %v1493 = vld [vmem:[%s1492] sm:$0xf]
    %v1494 = vpack.c.bf16 %v1487, %v1441
    %v1496 = vsel %vm333, %v1494, 0
    %v1499 = vsel %vm471, %v1493, 0
    %1501 = vmatprep.subr.bf16.mxu0 0
    %1502 = vmatpush1.bf16.msra.mxu0 %v1499
    %1503 = vmatprep.subr.bf16.mxu0 0
    %1504 = vmatpush1.bf16.msra.mxu0 0
    %1505 = vmatprep.subr.bf16.mxu0 0
    %1506 = vmatpush1.bf16.msra.mxu0 0
    %1507 = vmatprep.subr.bf16.mxu0 0
    %1508 = vmatpush1.bf16.msra.mxu0 0
    %1509 = vmatprep.subr.bf16.mxu0 0
    %1510 = vmatpush1.bf16.msra.mxu0 0
    %1511 = vmatprep.subr.bf16.mxu0 0
    %1512 = vmatpush1.bf16.msra.mxu0 0
    %1513 = vmatprep.subr.bf16.mxu0 0
    %1514 = vmatpush1.bf16.msra.mxu0 0
    %1515 = vmatprep.subr.bf16.mxu0 0
    %1516 = vmatpush1.bf16.msra.mxu0 0
    %1517 = vmatprep.subr.bf16.mxu0 0
    %1518 = vmatpush1.bf16.msra.mxu0 0
    %1519 = vmatprep.subr.bf16.mxu0 0
    %1520 = vmatpush1.bf16.msra.mxu0 0
    %1521 = vmatprep.subr.bf16.mxu0 0
    %1522 = vmatpush1.bf16.msra.mxu0 0
    %1523 = vmatprep.subr.bf16.mxu0 0
    %1524 = vmatpush1.bf16.msra.mxu0 0
    %1525 = vmatprep.subr.bf16.mxu0 0
    %1526 = vmatpush1.bf16.msra.mxu0 0
    %1527 = vmatprep.subr.bf16.mxu0 0
    %1528 = vmatpush1.bf16.msra.mxu0 0
    %1529 = vmatprep.subr.bf16.mxu0 0
    %1530 = vmatpush1.bf16.msra.mxu0 0
    %1531 = vmatprep.subr.bf16.mxu0 0
    %1532 = vmatpush1.bf16.msra.mxu0 0
    %1533 = vmatprep.mubr.bf16.mxu0 0
    %1534 = vmatmul.mubr.bf16.gmra.mrb[0].mxu0 %v1496
    %v1535 = vpop.f32.mrb[0].mxu0
    %v1536 = vadd.f32 0.0, %v1535
    %v1537 = vpop.f32.mrb[0].mxu0
    %v1538 = vpop.f32.mrb[0].mxu0
    %v1539 = vadd.f32 0.0, %v1538
    %v1540 = vpop.f32.mrb[0].mxu0
    %1541 = vdwg.mxu0
    %v1542 = vadd.f32 %v1070, %v1536
    %v1543 = vadd.f32 %v1073, %v1539
    %s1544 = scalar_lea.vmem %s4, 48
    %v1545 = vld [vmem:[%s1544] sm:$0xf]
    %v1546 = vld [vmem:[%s1544 + $0x4] sm:$0xf]
    %v1547 = vld [vmem:[%s1544 + $0x8] sm:$0xf]
    %v1548 = vld [vmem:[%s1544 + $0xc] sm:$0xf]
    %s1549 = scalar_lea.vmem %s5, 3
    %v1550 = vld [vmem:[%s1549] sm:$0x1]
    %v1552 = vlaneseq
    %v1553 = vshrl.u32 %v1552, 7
    %v1554 = vsub.s32 0, %v1553
    %v1555 = vrot.slane %v1550, %v1554
    %v1561 = vunpack.c.l.b16 %v1545
    %v1562 = vunpack.c.l.b16 %v1546
    %v1563 = vunpack.c.l.b16 %v1547
    %v1564 = vunpack.c.l.b16 %v1548
    %v1565 = vpack.c.b16 %v1562, %v1561
    %v1566 = vpack.c.b16 %v1564, %v1563
    %1569 = vmatprep.subr.bf16.mxu0 0
    %1570 = vmatpush1.bf16.msra.mxu0 %v1565
    %1571 = vmatprep.subr.bf16.mxu0 0
    %1572 = vmatpush1.bf16.msra.mxu0 %v1566
    %1573 = vmatprep.subr.bf16.mxu0 0
    %1574 = vmatpush1.bf16.msra.mxu0 0
    %1575 = vmatprep.subr.bf16.mxu0 0
    %1576 = vmatpush1.bf16.msra.mxu0 0
    %1577 = vmatprep.subr.bf16.mxu0 0
    %1578 = vmatpush1.bf16.msra.mxu0 0
    %1579 = vmatprep.subr.bf16.mxu0 0
    %1580 = vmatpush1.bf16.msra.mxu0 0
    %1581 = vmatprep.subr.bf16.mxu0 0
    %1582 = vmatpush1.bf16.msra.mxu0 0
    %1583 = vmatprep.subr.bf16.mxu0 0
    %1584 = vmatpush1.bf16.msra.mxu0 0
    %1585 = vmatprep.subr.bf16.mxu0 0
    %1586 = vmatpush1.bf16.msra.mxu0 0
    %1587 = vmatprep.subr.bf16.mxu0 0
    %1588 = vmatpush1.bf16.msra.mxu0 0
    %1589 = vmatprep.subr.bf16.mxu0 0
    %1590 = vmatpush1.bf16.msra.mxu0 0
    %1591 = vmatprep.subr.bf16.mxu0 0
    %1592 = vmatpush1.bf16.msra.mxu0 0
    %1593 = vmatprep.subr.bf16.mxu0 0
    %1594 = vmatpush1.bf16.msra.mxu0 0
    %1595 = vmatprep.subr.bf16.mxu0 0
    %1596 = vmatpush1.bf16.msra.mxu0 0
    %1597 = vmatprep.subr.bf16.mxu0 0
    %1598 = vmatpush1.bf16.msra.mxu0 0
    %1599 = vmatprep.subr.bf16.mxu0 0
    %1600 = vmatpush1.bf16.msra.mxu0 0
    %1601 = vmatprep.mubr.bf16.mxu0 0
    %1602 = vmatmul.mubr.bf16.gmra.mrb[0].mxu0 %v158
    %v1603 = vpop.f32.mrb[0].mxu0
    %v1604 = vadd.f32 %v1555, %v1603
    %v1605 = vpop.f32.mrb[0].mxu0
    %v1606 = vpop.f32.mrb[0].mxu0
    %v1607 = vadd.f32 %v1555, %v1606
    %v1608 = vpop.f32.mrb[0].mxu0
    %1609 = vdwg.mxu0
    %s1610 = scalar_lea.vmem %s6, 48
    %v1611 = vld [vmem:[%s1610] sm:$0xf]
    %v1612 = vld [vmem:[%s1610 + $0x4] sm:$0xf]
    %v1613 = vld [vmem:[%s1610 + $0x8] sm:$0xf]
    %v1614 = vld [vmem:[%s1610 + $0xc] sm:$0xf]
    %s1615 = scalar_lea.vmem %s7, 3
    %v1616 = vld [vmem:[%s1615] sm:$0x1]
    %v1618 = vlaneseq
    %v1619 = vshrl.u32 %v1618, 7
    %v1620 = vsub.s32 0, %v1619
    %v1621 = vrot.slane %v1616, %v1620
    %v1627 = vunpack.c.l.b16 %v1611
    %v1628 = vunpack.c.l.b16 %v1612
    %v1629 = vunpack.c.l.b16 %v1613
    %v1630 = vunpack.c.l.b16 %v1614
    %v1631 = vpack.c.b16 %v1628, %v1627
    %v1632 = vpack.c.b16 %v1630, %v1629
    %1635 = vmatprep.subr.bf16.mxu0 0
    %1636 = vmatpush1.bf16.msra.mxu0 %v1631
    %1637 = vmatprep.subr.bf16.mxu0 0
    %1638 = vmatpush1.bf16.msra.mxu0 %v1632
    %1639 = vmatprep.subr.bf16.mxu0 0
    %1640 = vmatpush1.bf16.msra.mxu0 0
    %1641 = vmatprep.subr.bf16.mxu0 0
    %1642 = vmatpush1.bf16.msra.mxu0 0
    %1643 = vmatprep.subr.bf16.mxu0 0
    %1644 = vmatpush1.bf16.msra.mxu0 0
    %1645 = vmatprep.subr.bf16.mxu0 0
    %1646 = vmatpush1.bf16.msra.mxu0 0
    %1647 = vmatprep.subr.bf16.mxu0 0
    %1648 = vmatpush1.bf16.msra.mxu0 0
    %1649 = vmatprep.subr.bf16.mxu0 0
    %1650 = vmatpush1.bf16.msra.mxu0 0
    %1651 = vmatprep.subr.bf16.mxu0 0
    %1652 = vmatpush1.bf16.msra.mxu0 0
    %1653 = vmatprep.subr.bf16.mxu0 0
    %1654 = vmatpush1.bf16.msra.mxu0 0
    %1655 = vmatprep.subr.bf16.mxu0 0
    %1656 = vmatpush1.bf16.msra.mxu0 0
    %1657 = vmatprep.subr.bf16.mxu0 0
    %1658 = vmatpush1.bf16.msra.mxu0 0
    %1659 = vmatprep.subr.bf16.mxu0 0
    %1660 = vmatpush1.bf16.msra.mxu0 0
    %1661 = vmatprep.subr.bf16.mxu0 0
    %1662 = vmatpush1.bf16.msra.mxu0 0
    %1663 = vmatprep.subr.bf16.mxu0 0
    %1664 = vmatpush1.bf16.msra.mxu0 0
    %1665 = vmatprep.subr.bf16.mxu0 0
    %1666 = vmatpush1.bf16.msra.mxu0 0
    %1667 = vmatprep.mubr.bf16.mxu0 0
    %1668 = vmatmul.mubr.bf16.gmra.mrb[0].mxu0 %v158
    %v1669 = vpop.f32.mrb[0].mxu0
    %v1670 = vadd.f32 %v1621, %v1669
    %v1671 = vpop.f32.mrb[0].mxu0
    %v1672 = vpop.f32.mrb[0].mxu0
    %v1673 = vadd.f32 %v1621, %v1672
    %v1674 = vpop.f32.mrb[0].mxu0
    %1675 = vdwg.mxu0
    %s1676 = scalar_lea.vmem %s8, 48
    %v1677 = vld [vmem:[%s1676] sm:$0xf]
    %v1678 = vld [vmem:[%s1676 + $0x4] sm:$0xf]
    %v1679 = vld [vmem:[%s1676 + $0x8] sm:$0xf]
    %v1680 = vld [vmem:[%s1676 + $0xc] sm:$0xf]
    %s1681 = scalar_lea.vmem %s9, 3
    %v1682 = vld [vmem:[%s1681] sm:$0x1]
    %v1684 = vlaneseq
    %v1685 = vshrl.u32 %v1684, 7
    %v1686 = vsub.s32 0, %v1685
    %v1687 = vrot.slane %v1682, %v1686
    %v1693 = vunpack.c.l.b16 %v1677
    %v1694 = vunpack.c.l.b16 %v1678
    %v1695 = vunpack.c.l.b16 %v1679
    %v1696 = vunpack.c.l.b16 %v1680
    %v1697 = vpack.c.b16 %v1694, %v1693
    %v1698 = vpack.c.b16 %v1696, %v1695
    %1701 = vmatprep.subr.bf16.mxu0 0
    %1702 = vmatpush1.bf16.msra.mxu0 %v1697
    %1703 = vmatprep.subr.bf16.mxu0 0
    %1704 = vmatpush1.bf16.msra.mxu0 %v1698
    %1705 = vmatprep.subr.bf16.mxu0 0
    %1706 = vmatpush1.bf16.msra.mxu0 0
    %1707 = vmatprep.subr.bf16.mxu0 0
    %1708 = vmatpush1.bf16.msra.mxu0 0
    %1709 = vmatprep.subr.bf16.mxu0 0
    %1710 = vmatpush1.bf16.msra.mxu0 0
    %1711 = vmatprep.subr.bf16.mxu0 0
    %1712 = vmatpush1.bf16.msra.mxu0 0
    %1713 = vmatprep.subr.bf16.mxu0 0
    %1714 = vmatpush1.bf16.msra.mxu0 0
    %1715 = vmatprep.subr.bf16.mxu0 0
    %1716 = vmatpush1.bf16.msra.mxu0 0
    %1717 = vmatprep.subr.bf16.mxu0 0
    %1718 = vmatpush1.bf16.msra.mxu0 0
    %1719 = vmatprep.subr.bf16.mxu0 0
    %1720 = vmatpush1.bf16.msra.mxu0 0
    %1721 = vmatprep.subr.bf16.mxu0 0
    %1722 = vmatpush1.bf16.msra.mxu0 0
    %1723 = vmatprep.subr.bf16.mxu0 0
    %1724 = vmatpush1.bf16.msra.mxu0 0
    %1725 = vmatprep.subr.bf16.mxu0 0
    %1726 = vmatpush1.bf16.msra.mxu0 0
    %1727 = vmatprep.subr.bf16.mxu0 0
    %1728 = vmatpush1.bf16.msra.mxu0 0
    %1729 = vmatprep.subr.bf16.mxu0 0
    %1730 = vmatpush1.bf16.msra.mxu0 0
    %1731 = vmatprep.subr.bf16.mxu0 0
    %1732 = vmatpush1.bf16.msra.mxu0 0
    %1733 = vmatprep.mubr.bf16.mxu0 0
    %1734 = vmatmul.mubr.bf16.gmra.mrb[0].mxu0 %v158
    %v1735 = vpop.f32.mrb[0].mxu0
    %v1736 = vadd.f32 %v1687, %v1735
    %v1737 = vpop.f32.mrb[0].mxu0
    %v1738 = vpop.f32.mrb[0].mxu0
    %v1739 = vadd.f32 %v1687, %v1738
    %v1740 = vpop.f32.mrb[0].mxu0
    %1741 = vdwg.mxu0
    %v1742 = vpack.c.bf16 %v1604, %v1604
    %v1743 = vpack.c.bf16 %v1607, %v1607
    %v1744 = vpack.c.bf16 %v1670, %v1670
    %v1745 = vpack.c.bf16 %v1673, %v1673
    %v1747 = vsel %vm333, %v1742, 0
    %v1750 = vsel %vm333, %v1744, 0
    %1752 = vmatprep.subr.bf16.mxu0 0
    %1753 = vmatpush1.bf16.xpose.msra.mxu0 %v1750
    %1754 = vmatprep.subr.bf16.mxu0 0
    %1755 = vmatpush1.bf16.xpose.msra.mxu0 0
    %1756 = vmatprep.subr.bf16.mxu0 0
    %1757 = vmatpush1.bf16.xpose.msra.mxu0 0
    %1758 = vmatprep.subr.bf16.mxu0 0
    %1759 = vmatpush1.bf16.xpose.msra.mxu0 0
    %1760 = vmatprep.subr.bf16.mxu0 0
    %1761 = vmatpush1.bf16.xpose.msra.mxu0 0
    %1762 = vmatprep.subr.bf16.mxu0 0
    %1763 = vmatpush1.bf16.xpose.msra.mxu0 0
    %1764 = vmatprep.subr.bf16.mxu0 0
    %1765 = vmatpush1.bf16.xpose.msra.mxu0 0
    %1766 = vmatprep.subr.bf16.mxu0 0
    %1767 = vmatpush1.bf16.xpose.msra.mxu0 0
    %1768 = vmatprep.subr.bf16.mxu0 0
    %1769 = vmatpush1.bf16.xpose.msra.mxu0 0
    %1770 = vmatprep.subr.bf16.mxu0 0
    %1771 = vmatpush1.bf16.xpose.msra.mxu0 0
    %1772 = vmatprep.subr.bf16.mxu0 0
    %1773 = vmatpush1.bf16.xpose.msra.mxu0 0
    %1774 = vmatprep.subr.bf16.mxu0 0
    %1775 = vmatpush1.bf16.xpose.msra.mxu0 0
    %1776 = vmatprep.subr.bf16.mxu0 0
    %1777 = vmatpush1.bf16.xpose.msra.mxu0 0
    %1778 = vmatprep.subr.bf16.mxu0 0
    %1779 = vmatpush1.bf16.xpose.msra.mxu0 0
    %1780 = vmatprep.subr.bf16.mxu0 0
    %1781 = vmatpush1.bf16.xpose.msra.mxu0 0
    %1782 = vmatprep.subr.bf16.mxu0 0
    %1783 = vmatpush1.bf16.xpose.msra.mxu0 0
    %1784 = vmatprep.mubr.bf16.mxu0 0
    %1785 = vmatmul.mubr.bf16.gmra.mrb[0].mxu0 %v1747
    %v1786 = vpop.f32.mrb[0].mxu0
    %v1787 = vadd.f32 0.0, %v1786
    %v1788 = vpop.f32.mrb[0].mxu0
    %v1789 = vpop.f32.mrb[0].mxu0
    %v1790 = vpop.f32.mrb[0].mxu0
    %1791 = vdwg.mxu0
    %v1793 = vsel %vm333, %v1743, 0
    %v1796 = vsel %vm333, %v1745, 0
    %1798 = vmatprep.subr.bf16.mxu0 0
    %1799 = vmatpush1.bf16.xpose.msra.mxu0 %v1796
    %1800 = vmatprep.subr.bf16.mxu0 0
    %1801 = vmatpush1.bf16.xpose.msra.mxu0 0
    %1802 = vmatprep.subr.bf16.mxu0 0
    %1803 = vmatpush1.bf16.xpose.msra.mxu0 0
    %1804 = vmatprep.subr.bf16.mxu0 0
    %1805 = vmatpush1.bf16.xpose.msra.mxu0 0
    %1806 = vmatprep.subr.bf16.mxu0 0
    %1807 = vmatpush1.bf16.xpose.msra.mxu0 0
    %1808 = vmatprep.subr.bf16.mxu0 0
    %1809 = vmatpush1.bf16.xpose.msra.mxu0 0
    %1810 = vmatprep.subr.bf16.mxu0 0
    %1811 = vmatpush1.bf16.xpose.msra.mxu0 0
    %1812 = vmatprep.subr.bf16.mxu0 0
    %1813 = vmatpush1.bf16.xpose.msra.mxu0 0
    %1814 = vmatprep.subr.bf16.mxu0 0
    %1815 = vmatpush1.bf16.xpose.msra.mxu0 0
    %1816 = vmatprep.subr.bf16.mxu0 0
    %1817 = vmatpush1.bf16.xpose.msra.mxu0 0
    %1818 = vmatprep.subr.bf16.mxu0 0
    %1819 = vmatpush1.bf16.xpose.msra.mxu0 0
    %1820 = vmatprep.subr.bf16.mxu0 0
    %1821 = vmatpush1.bf16.xpose.msra.mxu0 0
    %1822 = vmatprep.subr.bf16.mxu0 0
    %1823 = vmatpush1.bf16.xpose.msra.mxu0 0
    %1824 = vmatprep.subr.bf16.mxu0 0
    %1825 = vmatpush1.bf16.xpose.msra.mxu0 0
    %1826 = vmatprep.subr.bf16.mxu0 0
    %1827 = vmatpush1.bf16.xpose.msra.mxu0 0
    %1828 = vmatprep.subr.bf16.mxu0 0
    %1829 = vmatpush1.bf16.xpose.msra.mxu0 0
    %1830 = vmatprep.mubr.bf16.mxu0 0
    %1831 = vmatmul.mubr.bf16.gmra.mrb[0].mxu0 %v1793
    %v1832 = vpop.f32.mrb[0].mxu0
    %v1833 = vadd.f32 0.0, %v1832
    %v1834 = vpop.f32.mrb[0].mxu0
    %v1835 = vpop.f32.mrb[0].mxu0
    %v1836 = vpop.f32.mrb[0].mxu0
    %1837 = vdwg.mxu0
    %v1838 = vmul.f32 %v1787, 0.35355338
    %v1839 = vmul.f32 %v1833, 0.35355338
    %v1840 = vadd.f32 %v1838, %v433
    %v1841 = vadd.f32 %v1839, %v437
    %v1842 = vsel %vm333, %v1840, -inf
    %1843 = vmax.xlane.f32.xlu0 %v1842
    %v1844 = vpop.xlane.xlu0 %1843
    %v1845 = vsel %vm333, %v1841, -inf
    %1846 = vmax.xlane.f32.xlu0 %v1845
    %v1847 = vpop.xlane.xlu0 %1846
    %v1848 = vsub.f32 %v1840, %v1844
    %v1849 = vsub.f32 %v1841, %v1847
    %v1850 = vmul.f32 %v1848, 1.442695
    %v1851 = vpow.pop %v1850
    %v1852 = vmul.f32 %v1849, 1.442695
    %v1853 = vpow.pop %v1852
    %v1854 = vsel %vm333, %v1851, 0.0
    %1855 = vadd.xlane.f32.xlu0 %v1854
    %v1856 = vpop.xlane.xlu0 %1855
    %v1857 = vsel %vm333, %v1853, 0.0
    %1858 = vadd.xlane.f32.xlu0 %v1857
    %v1859 = vpop.xlane.xlu0 %1858
    %v1860 = vrcp.pop %v1856
    %v1861 = vrcp.pop %v1859
    %v1862 = vmul.f32 %v1851, %v1860
    %v1863 = vmul.f32 %v1853, %v1861
    %v1864 = vpack.c.bf16 %v1862, %v1862
    %v1865 = vpack.c.bf16 %v1863, %v1863
    %v1866 = vpack.c.bf16 %v1736, %v1736
    %v1867 = vpack.c.bf16 %v1739, %v1739
    %v1869 = vsel %vm333, %v1864, 0
    %v1872 = vsel %vm471, %v1866, 0
    %1874 = vmatprep.subr.bf16.mxu0 0
    %1875 = vmatpush1.bf16.msra.mxu0 %v1872
    %1876 = vmatprep.subr.bf16.mxu0 0
    %1877 = vmatpush1.bf16.msra.mxu0 0
    %1878 = vmatprep.subr.bf16.mxu0 0
    %1879 = vmatpush1.bf16.msra.mxu0 0
    %1880 = vmatprep.subr.bf16.mxu0 0
    %1881 = vmatpush1.bf16.msra.mxu0 0
    %1882 = vmatprep.subr.bf16.mxu0 0
    %1883 = vmatpush1.bf16.msra.mxu0 0
    %1884 = vmatprep.subr.bf16.mxu0 0
    %1885 = vmatpush1.bf16.msra.mxu0 0
    %1886 = vmatprep.subr.bf16.mxu0 0
    %1887 = vmatpush1.bf16.msra.mxu0 0
    %1888 = vmatprep.subr.bf16.mxu0 0
    %1889 = vmatpush1.bf16.msra.mxu0 0
    %1890 = vmatprep.subr.bf16.mxu0 0
    %1891 = vmatpush1.bf16.msra.mxu0 0
    %1892 = vmatprep.subr.bf16.mxu0 0
    %1893 = vmatpush1.bf16.msra.mxu0 0
    %1894 = vmatprep.subr.bf16.mxu0 0
    %1895 = vmatpush1.bf16.msra.mxu0 0
    %1896 = vmatprep.subr.bf16.mxu0 0
    %1897 = vmatpush1.bf16.msra.mxu0 0
    %1898 = vmatprep.subr.bf16.mxu0 0
    %1899 = vmatpush1.bf16.msra.mxu0 0
    %1900 = vmatprep.subr.bf16.mxu0 0
    %1901 = vmatpush1.bf16.msra.mxu0 0
    %1902 = vmatprep.subr.bf16.mxu0 0
    %1903 = vmatpush1.bf16.msra.mxu0 0
    %1904 = vmatprep.subr.bf16.mxu0 0
    %1905 = vmatpush1.bf16.msra.mxu0 0
    %1906 = vmatprep.mubr.bf16.mxu0 0
    %1907 = vmatmul.mubr.bf16.gmra.mrb[0].mxu0 %v1869
    %v1908 = vpop.f32.mrb[0].mxu0
    %v1909 = vadd.f32 0.0, %v1908
    %v1910 = vpop.f32.mrb[0].mxu0
    %v1911 = vpop.f32.mrb[0].mxu0
    %v1912 = vpop.f32.mrb[0].mxu0
    %1913 = vdwg.mxu0
    %v1915 = vsel %vm333, %v1865, 0
    %v1918 = vsel %vm471, %v1867, 0
    %1920 = vmatprep.subr.bf16.mxu0 0
    %1921 = vmatpush1.bf16.msra.mxu0 %v1918
    %1922 = vmatprep.subr.bf16.mxu0 0
    %1923 = vmatpush1.bf16.msra.mxu0 0
    %1924 = vmatprep.subr.bf16.mxu0 0
    %1925 = vmatpush1.bf16.msra.mxu0 0
    %1926 = vmatprep.subr.bf16.mxu0 0
    %1927 = vmatpush1.bf16.msra.mxu0 0
    %1928 = vmatprep.subr.bf16.mxu0 0
    %1929 = vmatpush1.bf16.msra.mxu0 0
    %1930 = vmatprep.subr.bf16.mxu0 0
    %1931 = vmatpush1.bf16.msra.mxu0 0
    %1932 = vmatprep.subr.bf16.mxu0 0
    %1933 = vmatpush1.bf16.msra.mxu0 0
    %1934 = vmatprep.subr.bf16.mxu0 0
    %1935 = vmatpush1.bf16.msra.mxu0 0
    %1936 = vmatprep.subr.bf16.mxu0 0
    %1937 = vmatpush1.bf16.msra.mxu0 0
    %1938 = vmatprep.subr.bf16.mxu0 0
    %1939 = vmatpush1.bf16.msra.mxu0 0
    %1940 = vmatprep.subr.bf16.mxu0 0
    %1941 = vmatpush1.bf16.msra.mxu0 0
    %1942 = vmatprep.subr.bf16.mxu0 0
    %1943 = vmatpush1.bf16.msra.mxu0 0
    %1944 = vmatprep.subr.bf16.mxu0 0
    %1945 = vmatpush1.bf16.msra.mxu0 0
    %1946 = vmatprep.subr.bf16.mxu0 0
    %1947 = vmatpush1.bf16.msra.mxu0 0
    %1948 = vmatprep.subr.bf16.mxu0 0
    %1949 = vmatpush1.bf16.msra.mxu0 0
    %1950 = vmatprep.subr.bf16.mxu0 0
    %1951 = vmatpush1.bf16.msra.mxu0 0
    %1952 = vmatprep.mubr.bf16.mxu0 0
    %1953 = vmatmul.mubr.bf16.gmra.mrb[0].mxu0 %v1915
    %v1954 = vpop.f32.mrb[0].mxu0
    %v1955 = vadd.f32 0.0, %v1954
    %v1956 = vpop.f32.mrb[0].mxu0
    %v1957 = vpop.f32.mrb[0].mxu0
    %v1958 = vpop.f32.mrb[0].mxu0
    %1959 = vdwg.mxu0
    %s1960 = scalar_lea.vmem %s10, 12
    %v1961 = vld [vmem:[%s1960] sm:$0xf]
    %v1962 = vpack.c.bf16 %v1955, %v1909
    %v1964 = vsel %vm333, %v1962, 0
    %v1967 = vsel %vm471, %v1961, 0
    %1969 = vmatprep.subr.bf16.mxu0 0
    %1970 = vmatpush1.bf16.msra.mxu0 %v1967
    %1971 = vmatprep.subr.bf16.mxu0 0
    %1972 = vmatpush1.bf16.msra.mxu0 0
    %1973 = vmatprep.subr.bf16.mxu0 0
    %1974 = vmatpush1.bf16.msra.mxu0 0
    %1975 = vmatprep.subr.bf16.mxu0 0
    %1976 = vmatpush1.bf16.msra.mxu0 0
    %1977 = vmatprep.subr.bf16.mxu0 0
    %1978 = vmatpush1.bf16.msra.mxu0 0
    %1979 = vmatprep.subr.bf16.mxu0 0
    %1980 = vmatpush1.bf16.msra.mxu0 0
    %1981 = vmatprep.subr.bf16.mxu0 0
    %1982 = vmatpush1.bf16.msra.mxu0 0
    %1983 = vmatprep.subr.bf16.mxu0 0
    %1984 = vmatpush1.bf16.msra.mxu0 0
    %1985 = vmatprep.subr.bf16.mxu0 0
    %1986 = vmatpush1.bf16.msra.mxu0 0
    %1987 = vmatprep.subr.bf16.mxu0 0
    %1988 = vmatpush1.bf16.msra.mxu0 0
    %1989 = vmatprep.subr.bf16.mxu0 0
    %1990 = vmatpush1.bf16.msra.mxu0 0
    %1991 = vmatprep.subr.bf16.mxu0 0
    %1992 = vmatpush1.bf16.msra.mxu0 0
    %1993 = vmatprep.subr.bf16.mxu0 0
    %1994 = vmatpush1.bf16.msra.mxu0 0
    %1995 = vmatprep.subr.bf16.mxu0 0
    %1996 = vmatpush1.bf16.msra.mxu0 0
    %1997 = vmatprep.subr.bf16.mxu0 0
    %1998 = vmatpush1.bf16.msra.mxu0 0
    %1999 = vmatprep.subr.bf16.mxu0 0
    %2000 = vmatpush1.bf16.msra.mxu0 0
    %2001 = vmatprep.mubr.bf16.mxu0 0
    %2002 = vmatmul.mubr.bf16.gmra.mrb[0].mxu0 %v1964
    %v2003 = vpop.f32.mrb[0].mxu0
    %v2004 = vadd.f32 0.0, %v2003
    %v2005 = vpop.f32.mrb[0].mxu0
    %v2006 = vpop.f32.mrb[0].mxu0
    %v2007 = vadd.f32 0.0, %v2006
    %v2008 = vpop.f32.mrb[0].mxu0
    %2009 = vdwg.mxu0
    %v2010 = vadd.f32 %v1542, %v2004
    %v2011 = vadd.f32 %v1543, %v2007
    %v2012 = vadd.f32 %v79, %v2010
    %v2013 = vadd.f32 %v80, %v2011
    %v2014 = vld [vmem:[%s11] sm:$0x1]
    %v2016 = vlaneseq
    %v2017 = vshrl.u32 %v2016, 7
    %v2018 = vsub.s32 0, %v2017
    %v2019 = vrot.slane %v2014, %v2018
    %v2021 = vadd.f32 %v2012, %v2019
    %v2022 = vadd.f32 %v2013, %v2019
    %v2023 = vld [vmem:[%s12] sm:$0x1]
    %v2024 = vld [vmem:[%s13] sm:$0x1]
    %v2025 = vsel %vm89, %v2021, 0.0
    %2026 = vadd.xlane.f32.xlu0 %v2025
    %v2027 = vpop.xlane.xlu0 %2026
    %v2028 = vsel %vm89, %v2022, 0.0
    %2029 = vadd.xlane.f32.xlu0 %v2028
    %v2030 = vpop.xlane.xlu0 %2029
    %v2031 = vmul.f32 %v2027, %v96
    %v2032 = vmul.f32 %v2030, %v96
    %v2033 = vsub.f32 %v2021, %v2031
    %v2034 = vsub.f32 %v2022, %v2032
    %v2035 = vmul.f32 %v2033, %v2033
    %v2036 = vmul.f32 %v2034, %v2034
    %v2037 = vsel %vm89, %v2035, 0.0
    %2038 = vadd.xlane.f32.xlu0 %v2037
    %v2039 = vpop.xlane.xlu0 %2038
    %v2040 = vsel %vm89, %v2036, 0.0
    %2041 = vadd.xlane.f32.xlu0 %v2040
    %v2042 = vpop.xlane.xlu0 %2041
    %v2043 = vmul.f32 %v2039, %v96
    %v2044 = vmul.f32 %v2042, %v96
    %v2046 = vlaneseq
    %v2047 = vshrl.u32 %v2046, 7
    %v2048 = vsub.s32 0, %v2047
    %v2049 = vrot.slane %v2023, %v2048
    %v2051 = vmul.f32 %v2049, %v2033
    %v2052 = vmul.f32 %v2049, %v2034
    %v2053 = vadd.f32 %v2043, 1e-06
    %v2054 = vadd.f32 %v2044, 1e-06
    %v2055 = vrsqrt.pop %v2053
    %v2056 = vrsqrt.pop %v2054
    %v2057 = vmul.f32 %v2051, %v2055
    %v2058 = vmul.f32 %v2052, %v2056
    %v2060 = vlaneseq
    %v2061 = vshrl.u32 %v2060, 7
    %v2062 = vsub.s32 0, %v2061
    %v2063 = vrot.slane %v2024, %v2062
    %v2065 = vadd.f32 %v2057, %v2063
    %v2066 = vadd.f32 %v2058, %v2063
    %v2067 = vld [vmem:[%s14] sm:$0xf]
    %v2068 = vld [vmem:[%s14 + $0x4] sm:$0xf]
    %v2069 = vld [vmem:[%s14 + $0x8] sm:$0xf]
    %v2070 = vld [vmem:[%s14 + $0xc] sm:$0xf]
    %v2071 = vpack.c.bf16 %v2066, %v2065
    %v2072 = vld [vmem:[%s15] sm:$0x1]
    %v2074 = vlaneseq
    %v2075 = vshrl.u32 %v2074, 7
    %v2076 = vsub.s32 0, %v2075
    %v2077 = vrot.slane %v2072, %v2076
    %v2083 = vunpack.c.l.b16 %v2067
    %v2084 = vunpack.c.l.b16 %v2068
    %v2085 = vunpack.c.l.b16 %v2069
    %v2086 = vunpack.c.l.b16 %v2070
    %v2087 = vpack.c.b16 %v2084, %v2083
    %v2088 = vpack.c.b16 %v2086, %v2085
    %v2092 = vsel %vm89, %v2071, 0
    %2094 = vmatprep.subr.bf16.mxu0 0
    %2095 = vmatpush1.bf16.msra.mxu0 %v2087
    %2096 = vmatprep.subr.bf16.mxu0 0
    %2097 = vmatpush1.bf16.msra.mxu0 %v2088
    %2098 = vmatprep.subr.bf16.mxu0 0
    %2099 = vmatpush1.bf16.msra.mxu0 0
    %2100 = vmatprep.subr.bf16.mxu0 0
    %2101 = vmatpush1.bf16.msra.mxu0 0
    %2102 = vmatprep.subr.bf16.mxu0 0
    %2103 = vmatpush1.bf16.msra.mxu0 0
    %2104 = vmatprep.subr.bf16.mxu0 0
    %2105 = vmatpush1.bf16.msra.mxu0 0
    %2106 = vmatprep.subr.bf16.mxu0 0
    %2107 = vmatpush1.bf16.msra.mxu0 0
    %2108 = vmatprep.subr.bf16.mxu0 0
    %2109 = vmatpush1.bf16.msra.mxu0 0
    %2110 = vmatprep.subr.bf16.mxu0 0
    %2111 = vmatpush1.bf16.msra.mxu0 0
    %2112 = vmatprep.subr.bf16.mxu0 0
    %2113 = vmatpush1.bf16.msra.mxu0 0
    %2114 = vmatprep.subr.bf16.mxu0 0
    %2115 = vmatpush1.bf16.msra.mxu0 0
    %2116 = vmatprep.subr.bf16.mxu0 0
    %2117 = vmatpush1.bf16.msra.mxu0 0
    %2118 = vmatprep.subr.bf16.mxu0 0
    %2119 = vmatpush1.bf16.msra.mxu0 0
    %2120 = vmatprep.subr.bf16.mxu0 0
    %2121 = vmatpush1.bf16.msra.mxu0 0
    %2122 = vmatprep.subr.bf16.mxu0 0
    %2123 = vmatpush1.bf16.msra.mxu0 0
    %2124 = vmatprep.subr.bf16.mxu0 0
    %2125 = vmatpush1.bf16.msra.mxu0 0
    %2126 = vmatprep.mubr.bf16.mxu0 0
    %2127 = vmatmul.mubr.bf16.gmra.mrb[0].mxu0 %v2092
    %v2128 = vpop.f32.mrb[0].mxu0
    %v2129 = vadd.f32 %v2077, %v2128
    %v2130 = vpop.f32.mrb[0].mxu0
    %v2131 = vpop.f32.mrb[0].mxu0
    %v2132 = vadd.f32 %v2077, %v2131
    %v2133 = vpop.f32.mrb[0].mxu0
    %2134 = vdwg.mxu0
    %v2135 = vmax.f32 %v2129, 0.0
    %v2136 = vmax.f32 %v2132, 0.0
    %v2137 = vld [vmem:[%s16] sm:$0xf]
    %v2138 = vld [vmem:[%s16 + $0x4] sm:$0xf]
    %v2139 = vld [vmem:[%s16 + $0x8] sm:$0xf]
    %v2140 = vld [vmem:[%s16 + $0xc] sm:$0xf]
    %v2141 = vld [vmem:[%s16 + $0x10] sm:$0xf]
    %v2142 = vld [vmem:[%s16 + $0x14] sm:$0xf]
    %v2143 = vld [vmem:[%s16 + $0x18] sm:$0xf]
    %v2144 = vld [vmem:[%s16 + $0x1c] sm:$0xf]
    %v2145 = vpack.c.bf16 %v2136, %v2135
    %v2154 = vunpack.c.l.b16 %v2137
    %v2155 = vunpack.c.l.b16 %v2138
    %v2156 = vunpack.c.l.b16 %v2139
    %v2157 = vunpack.c.l.b16 %v2140
    %v2158 = vunpack.c.l.b16 %v2141
    %v2159 = vunpack.c.l.b16 %v2142
    %v2160 = vunpack.c.l.b16 %v2143
    %v2161 = vunpack.c.l.b16 %v2144
    %v2162 = vpack.c.b16 %v2155, %v2154
    %v2163 = vpack.c.b16 %v2157, %v2156
    %v2164 = vpack.c.b16 %v2159, %v2158
    %v2165 = vpack.c.b16 %v2161, %v2160
    %vm2170 = vcmask 523264
    %v2172 = vsel %vm2170, %v2145, 0
    %2174 = vmatprep.subr.bf16.mxu0 0
    %2175 = vmatpush1.bf16.msra.mxu0 %v2162
    %2176 = vmatprep.subr.bf16.mxu0 0
    %2177 = vmatpush1.bf16.msra.mxu0 %v2163
    %2178 = vmatprep.subr.bf16.mxu0 0
    %2179 = vmatpush1.bf16.msra.mxu0 %v2164
    %2180 = vmatprep.subr.bf16.mxu0 0
    %2181 = vmatpush1.bf16.msra.mxu0 %v2165
    %2182 = vmatprep.subr.bf16.mxu0 0
    %2183 = vmatpush1.bf16.msra.mxu0 0
    %2184 = vmatprep.subr.bf16.mxu0 0
    %2185 = vmatpush1.bf16.msra.mxu0 0
    %2186 = vmatprep.subr.bf16.mxu0 0
    %2187 = vmatpush1.bf16.msra.mxu0 0
    %2188 = vmatprep.subr.bf16.mxu0 0
    %2189 = vmatpush1.bf16.msra.mxu0 0
    %2190 = vmatprep.subr.bf16.mxu0 0
    %2191 = vmatpush1.bf16.msra.mxu0 0
    %2192 = vmatprep.subr.bf16.mxu0 0
    %2193 = vmatpush1.bf16.msra.mxu0 0
    %2194 = vmatprep.subr.bf16.mxu0 0
    %2195 = vmatpush1.bf16.msra.mxu0 0
    %2196 = vmatprep.subr.bf16.mxu0 0
    %2197 = vmatpush1.bf16.msra.mxu0 0
    %2198 = vmatprep.subr.bf16.mxu0 0
    %2199 = vmatpush1.bf16.msra.mxu0 0
    %2200 = vmatprep.subr.bf16.mxu0 0
    %2201 = vmatpush1.bf16.msra.mxu0 0
    %2202 = vmatprep.subr.bf16.mxu0 0
    %2203 = vmatpush1.bf16.msra.mxu0 0
    %2204 = vmatprep.subr.bf16.mxu0 0
    %2205 = vmatpush1.bf16.msra.mxu0 0
    %2206 = vmatprep.mubr.bf16.mxu0 0
    %2207 = vmatmul.mubr.bf16.gmra.mrb[0].mxu0 %v2172
    %v2208 = vpop.f32.mrb[0].mxu0
    %v2209 = vadd.f32 0.0, %v2208
    %v2210 = vpop.f32.mrb[0].mxu0
    %v2211 = vpop.f32.mrb[0].mxu0
    %v2212 = vadd.f32 0.0, %v2211
    %v2213 = vpop.f32.mrb[0].mxu0
    %2214 = vdwg.mxu0
    %v2215 = vadd.f32 %v2021, %v2209
    %v2216 = vadd.f32 %v2022, %v2212
    %v2217 = vld [vmem:[%s17] sm:$0x1]
    %v2219 = vlaneseq
    %v2220 = vshrl.u32 %v2219, 7
    %v2221 = vsub.s32 0, %v2220
    %v2222 = vrot.slane %v2217, %v2221
    %v2224 = vadd.f32 %v2215, %v2222
    %v2225 = vadd.f32 %v2216, %v2222
    %v2226 = vld [vmem:[%s18] sm:$0x1]
    %v2227 = vld [vmem:[%s19] sm:$0x1]
    %v2228 = vsel %vm89, %v2224, 0.0
    %2229 = vadd.xlane.f32.xlu0 %v2228
    %v2230 = vpop.xlane.xlu0 %2229
    %v2231 = vsel %vm89, %v2225, 0.0
    %2232 = vadd.xlane.f32.xlu0 %v2231
    %v2233 = vpop.xlane.xlu0 %2232
    %v2234 = vmul.f32 %v2230, %v96
    %v2235 = vmul.f32 %v2233, %v96
    %v2236 = vsub.f32 %v2224, %v2234
    %v2237 = vsub.f32 %v2225, %v2235
    %v2238 = vmul.f32 %v2236, %v2236
    %v2239 = vmul.f32 %v2237, %v2237
    %v2240 = vsel %vm89, %v2238, 0.0
    %2241 = vadd.xlane.f32.xlu0 %v2240
    %v2242 = vpop.xlane.xlu0 %2241
    %v2243 = vsel %vm89, %v2239, 0.0
    %2244 = vadd.xlane.f32.xlu0 %v2243
    %v2245 = vpop.xlane.xlu0 %2244
    %v2246 = vmul.f32 %v2242, %v96
    %v2247 = vmul.f32 %v2245, %v96
    %v2249 = vlaneseq
    %v2250 = vshrl.u32 %v2249, 7
    %v2251 = vsub.s32 0, %v2250
    %v2252 = vrot.slane %v2226, %v2251
    %v2254 = vmul.f32 %v2252, %v2236
    %v2255 = vmul.f32 %v2252, %v2237
    %v2256 = vadd.f32 %v2246, 1e-06
    %v2257 = vadd.f32 %v2247, 1e-06
    %v2258 = vrsqrt.pop %v2256
    %v2259 = vrsqrt.pop %v2257
    %v2260 = vmul.f32 %v2254, %v2258
    %v2261 = vmul.f32 %v2255, %v2259
    %v2263 = vlaneseq
    %v2264 = vshrl.u32 %v2263, 7
    %v2265 = vsub.s32 0, %v2264
    %v2266 = vrot.slane %v2227, %v2265
    %v2268 = vadd.f32 %v2260, %v2266
    %v2269 = vadd.f32 %v2261, %v2266
    %v2270 = vld [vmem:[%s20] sm:$0xf]
    %v2271 = vld [vmem:[%s20 + $0x4] sm:$0xf]
    %v2272 = vld [vmem:[%s20 + $0x8] sm:$0xf]
    %v2273 = vld [vmem:[%s20 + $0xc] sm:$0xf]
    %v2274 = vpack.c.bf16 %v2269, %v2268
    %v2275 = vld [vmem:[%s21] sm:$0x1]
    %v2277 = vlaneseq
    %v2278 = vshrl.u32 %v2277, 7
    %v2279 = vsub.s32 0, %v2278
    %v2280 = vrot.slane %v2275, %v2279
    %v2286 = vunpack.c.l.b16 %v2270
    %v2287 = vunpack.c.l.b16 %v2271
    %v2288 = vunpack.c.l.b16 %v2272
    %v2289 = vunpack.c.l.b16 %v2273
    %v2290 = vpack.c.b16 %v2287, %v2286
    %v2291 = vpack.c.b16 %v2289, %v2288
    %v2295 = vsel %vm89, %v2274, 0
    %2297 = vmatprep.subr.bf16.mxu0 0
    %2298 = vmatpush1.bf16.msra.mxu0 %v2290
    %2299 = vmatprep.subr.bf16.mxu0 0
    %2300 = vmatpush1.bf16.msra.mxu0 %v2291
    %2301 = vmatprep.subr.bf16.mxu0 0
    %2302 = vmatpush1.bf16.msra.mxu0 0
    %2303 = vmatprep.subr.bf16.mxu0 0
    %2304 = vmatpush1.bf16.msra.mxu0 0
    %2305 = vmatprep.subr.bf16.mxu0 0
    %2306 = vmatpush1.bf16.msra.mxu0 0
    %2307 = vmatprep.subr.bf16.mxu0 0
    %2308 = vmatpush1.bf16.msra.mxu0 0
    %2309 = vmatprep.subr.bf16.mxu0 0
    %2310 = vmatpush1.bf16.msra.mxu0 0
    %2311 = vmatprep.subr.bf16.mxu0 0
    %2312 = vmatpush1.bf16.msra.mxu0 0
    %2313 = vmatprep.subr.bf16.mxu0 0
    %2314 = vmatpush1.bf16.msra.mxu0 0
    %2315 = vmatprep.subr.bf16.mxu0 0
    %2316 = vmatpush1.bf16.msra.mxu0 0
    %2317 = vmatprep.subr.bf16.mxu0 0
    %2318 = vmatpush1.bf16.msra.mxu0 0
    %2319 = vmatprep.subr.bf16.mxu0 0
    %2320 = vmatpush1.bf16.msra.mxu0 0
    %2321 = vmatprep.subr.bf16.mxu0 0
    %2322 = vmatpush1.bf16.msra.mxu0 0
    %2323 = vmatprep.subr.bf16.mxu0 0
    %2324 = vmatpush1.bf16.msra.mxu0 0
    %2325 = vmatprep.subr.bf16.mxu0 0
    %2326 = vmatpush1.bf16.msra.mxu0 0
    %2327 = vmatprep.subr.bf16.mxu0 0
    %2328 = vmatpush1.bf16.msra.mxu0 0
    %2329 = vmatprep.mubr.bf16.mxu0 0
    %2330 = vmatmul.mubr.bf16.gmra.mrb[0].mxu0 %v2295
    %v2331 = vpop.f32.mrb[0].mxu0
    %v2332 = vadd.f32 %v2280, %v2331
    %v2333 = vpop.f32.mrb[0].mxu0
    %v2334 = vpop.f32.mrb[0].mxu0
    %v2335 = vadd.f32 %v2280, %v2334
    %v2336 = vpop.f32.mrb[0].mxu0
    %2337 = vdwg.mxu0
    %v2338 = vmax.f32 %v2332, 0.0
    %v2339 = vmax.f32 %v2335, 0.0
    %v2340 = vld [vmem:[%s22] sm:$0xf]
    %v2341 = vld [vmem:[%s22 + $0x4] sm:$0xf]
    %v2342 = vpack.c.bf16 %v2339, %v2338
    %v2345 = vunpack.c.l.b16 %v2340
    %v2346 = vunpack.c.l.b16 %v2341
    %v2347 = vpack.c.b16 %v2346, %v2345
    %vm2349 = vcmask 130048
    %v2351 = vsel %vm2349, %v2342, 0
    %2353 = vmatprep.subr.bf16.mxu0 0
    %2354 = vmatpush1.bf16.msra.mxu0 %v2347
    %2355 = vmatprep.subr.bf16.mxu0 0
    %2356 = vmatpush1.bf16.msra.mxu0 0
    %2357 = vmatprep.subr.bf16.mxu0 0
    %2358 = vmatpush1.bf16.msra.mxu0 0
    %2359 = vmatprep.subr.bf16.mxu0 0
    %2360 = vmatpush1.bf16.msra.mxu0 0
    %2361 = vmatprep.subr.bf16.mxu0 0
    %2362 = vmatpush1.bf16.msra.mxu0 0
    %2363 = vmatprep.subr.bf16.mxu0 0
    %2364 = vmatpush1.bf16.msra.mxu0 0
    %2365 = vmatprep.subr.bf16.mxu0 0
    %2366 = vmatpush1.bf16.msra.mxu0 0
    %2367 = vmatprep.subr.bf16.mxu0 0
    %2368 = vmatpush1.bf16.msra.mxu0 0
    %2369 = vmatprep.subr.bf16.mxu0 0
    %2370 = vmatpush1.bf16.msra.mxu0 0
    %2371 = vmatprep.subr.bf16.mxu0 0
    %2372 = vmatpush1.bf16.msra.mxu0 0
    %2373 = vmatprep.subr.bf16.mxu0 0
    %2374 = vmatpush1.bf16.msra.mxu0 0
    %2375 = vmatprep.subr.bf16.mxu0 0
    %2376 = vmatpush1.bf16.msra.mxu0 0
    %2377 = vmatprep.subr.bf16.mxu0 0
    %2378 = vmatpush1.bf16.msra.mxu0 0
    %2379 = vmatprep.subr.bf16.mxu0 0
    %2380 = vmatpush1.bf16.msra.mxu0 0
    %2381 = vmatprep.subr.bf16.mxu0 0
    %2382 = vmatpush1.bf16.msra.mxu0 0
    %2383 = vmatprep.subr.bf16.mxu0 0
    %2384 = vmatpush1.bf16.msra.mxu0 0
    %2385 = vmatprep.mubr.bf16.mxu0 0
    %2386 = vmatmul.mubr.bf16.gmra.mrb[0].mxu0 %v2351
    %v2387 = vpop.f32.mrb[0].mxu0
    %v2388 = vadd.f32 0.0, %v2387
    %v2389 = vpop.f32.mrb[0].mxu0
    %v2390 = vpop.f32.mrb[0].mxu0
    %v2391 = vadd.f32 0.0, %v2390
    %v2392 = vpop.f32.mrb[0].mxu0
    %2393 = vdwg.mxu0
    %v2394 = vadd.f32 %v2224, %v2388
    %v2395 = vadd.f32 %v2225, %v2391
    %v2396 = vld [vmem:[%s23] sm:$0x1]
    %v2398 = vlaneseq
    %v2399 = vshrl.u32 %v2398, 7
    %v2400 = vsub.s32 0, %v2399
    %v2401 = vrot.slane %v2396, %v2400
    %v2403 = vadd.f32 %v2394, %v2401
    %v2404 = vadd.f32 %v2395, %v2401
    %2405 = vst.msk [vmem:[#allocation2] sm:$0xff] %vm89, %v2403
    %2406 = vst.msk [vmem:[#allocation2 + $0x8] sm:$0xff] %vm89, %v2404
    // Predicated region
    $region98: #{tpu_custom_call.1} parent=1 // pred_check
      _
    $region99: #{tpu_custom_call.1} parent=1 // pred_check_branch
      %2408 = sbr.rel (0) target = $region101
    $region100: #{tpu_custom_call.1} parent=1 // pred_region
      %s2410 = ssub.s32 256, 256
      %2411 = vsyncadd [#allocation3], %s2410
      %s2412 = sshll.u32 [#allocation2], 4
      %s2413 = int_to_ptr.vmem [resolvable:$true] %s2412
      %2418 = dma.vmem_to_hbm [thread:$0]  %s2413, 256, %s24, [#allocation3], 128, 128, 8
    $region101: #{tpu_custom_call.1} parent=1 // pred_fallthru
      _
    // Predicated region
    $region102: #{tpu_custom_call.1} parent=1 // pred_check
      _
    $region103: #{tpu_custom_call.1} parent=1 // pred_check_branch
      %2420 = sbr.rel (0) target = $region105
    $region104: #{tpu_custom_call.1} parent=1 // pred_region
      %2421 = dma.done [#allocation3], 256
    $region105: #{tpu_custom_call.1} parent=1 // pred_fallthru
      _
    %2422 = vsyncpa [#allocation3], 1

</llo_original>
